<compile_context>
chip_gen: v7x
topology: tpu7x:2x2x1
jax: 0.10.0
libtpu: 0.0.40
codegen_flags: <defaults>
</compile_context>

<pallas_src>
import functools

import jax
import jax.numpy as jnp
from jax.experimental import pallas as pl
from jax.experimental.pallas import tpu as pltpu

IN_RAW, H1, H2_RAW, OUT_RAW = 28 * 28, 256, 64, 10  # logical dims of the PyTorch Net
H2_PAD = 128     # 64  -> 128 (lane width)
OUT_PAD = 128    # 10  -> 128 (lane-dense output stores; padding columns are zero)


def mlp_kernel(x_ref, w1_ref, b1_ref, w2_ref, b2_ref, w3_ref, b3_ref, o_ref):
    # x tile: (tb, 784) f32 -> cast to bf16 on the VPU (cheap); all matmuls accumulate in f32
    # on the MXU. Zero padding of w2/b2/w3/b3 keeps the math exact (padded lanes stay zero).
    x = x_ref[...].astype(jnp.bfloat16)
    h1 = jnp.dot(x, w1_ref[...], preferred_element_type=jnp.float32)
    h1 = jnp.maximum(h1 + b1_ref[...], 0.0).astype(jnp.bfloat16)
    h2 = jnp.dot(h1, w2_ref[...], preferred_element_type=jnp.float32)
    h2 = jnp.maximum(h2 + b2_ref[...], 0.0).astype(jnp.bfloat16)
    out = jnp.dot(h2, w3_ref[...], preferred_element_type=jnp.float32) + b3_ref[...]
    o_ref[...] = out.astype(o_ref.dtype)


def _pad2d(a, rows, cols, dtype):
    out = jnp.zeros((rows, cols), dtype)
    return out.at[: a.shape[0], : a.shape[1]].set(a.astype(dtype))


@functools.partial(jax.jit, static_argnames=("tb",))
def mlp_forward(x, w1, b1, w2, b2, w3, b3, *, tb=512):
    """x: (B, 784) f32. Weights stored [in, out], biases (1, out). Returns (B, 10) f32."""
    B = x.shape[0]
    # Don't tile wider than the (8-aligned) batch; keeps small batches from padding to 512.
    tb = max(8, min(tb, pl.cdiv(B, 8) * 8))
    bp = pl.cdiv(B, tb) * tb
    if bp != B:
        x = jnp.pad(x, ((0, bp - B), (0, 0)))  # row-pad only; x stays f32, no column pad

    # Tiny, one-time (jit-folded) weight prep. w1/b1 are used at their natural shapes.
    w1p = w1.astype(jnp.bfloat16)                         # (784, 256)
    b1p = b1.astype(jnp.float32)                          # (1, 256)
    w2p = _pad2d(w2, H1, H2_PAD, jnp.bfloat16)            # (256, 128)
    b2p = _pad2d(b2, 1, H2_PAD, jnp.float32)              # (1, 128)
    w3p = _pad2d(w3, H2_PAD, OUT_PAD, jnp.bfloat16)       # (128, 128)
    b3p = _pad2d(b3, 1, OUT_PAD, jnp.float32)             # (1, 128)

    const = lambda i: (0, 0)  # weights/biases: same block every step -> VMEM-resident

    cp_kwargs = dict(dimension_semantics=("parallel",))   # shard batch tiles across TCs
    if tb >= 2048:
        # v5e's default scoped-VMEM cap (16 MiB) binds first for very large tiles.
        cp_kwargs["vmem_limit_bytes"] = 64 * 1024 * 1024

    out_padded = pl.pallas_call(
        mlp_kernel,
        out_shape=jax.ShapeDtypeStruct((bp, OUT_PAD), jnp.float32),
        grid=(bp // tb,),
        in_specs=[
            pl.BlockSpec((tb, IN_RAW), lambda i: (i, 0)),  # x tile; 784 == full last dim (legal)
            pl.BlockSpec((IN_RAW, H1), const),
            pl.BlockSpec((1, H1), const),
            pl.BlockSpec((H1, H2_PAD), const),
            pl.BlockSpec((1, H2_PAD), const),
            pl.BlockSpec((H2_PAD, OUT_PAD), const),
            pl.BlockSpec((1, OUT_PAD), const),
        ],
        out_specs=pl.BlockSpec((tb, OUT_PAD), lambda i: (i, 0)),
        compiler_params=pltpu.CompilerParams(**cp_kwargs),
    )(x, w1p, b1p, w2p, b2p, w3p, b3p)

    return out_padded[:B, :OUT_RAW]


def init_linear_params(key, in_features, out_features):
    # PyTorch default init: U(-1/sqrt(in), 1/sqrt(in)); stored transposed as [in, out].
    kw, kb = jax.random.split(key)
    bound = 1.0 / jnp.sqrt(jnp.float32(in_features))
    w = jax.random.uniform(kw, (in_features, out_features), jnp.float32, -bound, bound)
    b = jax.random.uniform(kb, (1, out_features), jnp.float32, -bound, bound)
    return w, b


def reference_forward_bf16(x, w1, b1, w2, b2, w3, b3):
    # Precision-matched reference: bf16 matmul operands, f32 accumulation (same as the kernel).
    h1 = jnp.maximum(
        jnp.dot(x.astype(jnp.bfloat16), w1.astype(jnp.bfloat16),
                preferred_element_type=jnp.float32) + b1, 0.0)
    h2 = jnp.maximum(
        jnp.dot(h1.astype(jnp.bfloat16), w2.astype(jnp.bfloat16),
                preferred_element_type=jnp.float32) + b2, 0.0)
    return jnp.dot(h2.astype(jnp.bfloat16), w3.astype(jnp.bfloat16),
                   preferred_element_type=jnp.float32) + b3


def reference_forward_f32(x, w1, b1, w2, b2, w3, b3):
    h1 = jnp.maximum(x @ w1 + b1, 0.0)
    h2 = jnp.maximum(h1 @ w2 + b2, 0.0)
    return h2 @ w3 + b3


if __name__ == "__main__":
    key = jax.random.PRNGKey(0)
    k_x, k1, k2, k3 = jax.random.split(key, 4)

    B = 1024  # two 512-row batch tiles -> exercises the grid / software pipelining
    x = jax.random.normal(k_x, (B, IN_RAW), jnp.float32)

    w1, b1 = init_linear_params(k1, IN_RAW, H1)
    w2, b2 = init_linear_params(k2, H1, H2_RAW)
    w3, b3 = init_linear_params(k3, H2_RAW, OUT_RAW)

    out = jax.block_until_ready(mlp_forward(x, w1, b1, w2, b2, w3, b3))
    assert out.shape == (B, OUT_RAW)

    # Tight check against the precision-matched bf16 reference.
    ref_bf16 = reference_forward_bf16(x, w1, b1, w2, b2, w3, b3)
    assert jnp.allclose(out, ref_bf16, atol=2e-2, rtol=2e-2)

    # Loose sanity check against the full-f32 PyTorch-equivalent forward (no argmax equality:
    # near-ties between logits make that assertion flaky under bf16 quantization).
    ref_f32 = reference_forward_f32(x, w1, b1, w2, b2, w3, b3)
    assert float(jnp.max(jnp.abs(out - ref_f32))) < 1e-1

    print("KERNEL_OK")
</pallas_src>

<mosaic_0001>
module attributes {stable_mosaic.version = 11 : i64} {
  func.func @mlp_kernel(%arg0: i32, %arg1: memref<512x784xf32, #tpu.memory_space<vmem>>, %arg2: memref<784x256xbf16, #tpu.memory_space<vmem>>, %arg3: memref<1x256xf32, #tpu.memory_space<vmem>>, %arg4: memref<256x128xbf16, #tpu.memory_space<vmem>>, %arg5: memref<1x128xf32, #tpu.memory_space<vmem>>, %arg6: memref<128x128xbf16, #tpu.memory_space<vmem>>, %arg7: memref<1x128xf32, #tpu.memory_space<vmem>>, %arg8: memref<512x128xf32, #tpu.memory_space<vmem>>) attributes {dimension_semantics = [#tpu.dimension_semantics<parallel>], iteration_bounds = array<i64: 2>, scalar_prefetch = 0 : i64, scratch_operands = 0 : i64, tpu.core_type = #tpu.core_type<tc>, window_params = [{transform_indices = @transform_0, window_bounds = array<i64: 512, 784>}, {pipeline_mode = #tpu.pipeline_mode<synchronous>, transform_indices = @transform_1, window_bounds = array<i64: 784, 256>}, {pipeline_mode = #tpu.pipeline_mode<synchronous>, transform_indices = @transform_2, window_bounds = array<i64: 1, 256>}, {pipeline_mode = #tpu.pipeline_mode<synchronous>, transform_indices = @transform_3, window_bounds = array<i64: 256, 128>}, {pipeline_mode = #tpu.pipeline_mode<synchronous>, transform_indices = @transform_4, window_bounds = array<i64: 1, 128>}, {pipeline_mode = #tpu.pipeline_mode<synchronous>, transform_indices = @transform_5, window_bounds = array<i64: 128, 128>}, {pipeline_mode = #tpu.pipeline_mode<synchronous>, transform_indices = @transform_6, window_bounds = array<i64: 1, 128>}, {transform_indices = @transform_7, window_bounds = array<i64: 512, 128>}]} {
    %c0 = arith.constant 0 : index
    %c0_0 = arith.constant 0 : index
    %0 = vector.load %arg1[%c0, %c0_0] : memref<512x784xf32, #tpu.memory_space<vmem>>, vector<512x784xf32>
    %1 = arith.truncf %0 : vector<512x784xf32> to vector<512x784xbf16>
    %c0_1 = arith.constant 0 : index
    %c0_2 = arith.constant 0 : index
    %2 = vector.load %arg2[%c0_1, %c0_2] : memref<784x256xbf16, #tpu.memory_space<vmem>>, vector<784x256xbf16>
    %cst = arith.constant dense<0.000000e+00> : vector<512x256xf32>
    %3 = tpu.matmul %1, %2, %cst {dimension_numbers = #tpu.dot_dimension_numbers<[1], [0], [0], [1], [0, 0, 1, 1], [], []>} : vector<512x784xbf16>, vector<784x256xbf16>, vector<512x256xf32> -> vector<512x256xf32>
    %c0_3 = arith.constant 0 : index
    %c0_4 = arith.constant 0 : index
    %4 = vector.load %arg3[%c0_3, %c0_4] : memref<1x256xf32, #tpu.memory_space<vmem>>, vector<1x256xf32>
    %5 = vector.broadcast %4 : vector<1x256xf32> to vector<512x256xf32>
    %6 = arith.addf %3, %5 : vector<512x256xf32>
    %cst_5 = arith.constant 0.000000e+00 : f32
    %7 = vector.broadcast %cst_5 : f32 to vector<512x256xf32>
    %8 = arith.maximumf %6, %7 : vector<512x256xf32>
    %9 = arith.truncf %8 : vector<512x256xf32> to vector<512x256xbf16>
    %c0_6 = arith.constant 0 : index
    %c0_7 = arith.constant 0 : index
    %10 = vector.load %arg4[%c0_6, %c0_7] : memref<256x128xbf16, #tpu.memory_space<vmem>>, vector<256x128xbf16>
    %cst_8 = arith.constant dense<0.000000e+00> : vector<512x128xf32>
    %11 = tpu.matmul %9, %10, %cst_8 {dimension_numbers = #tpu.dot_dimension_numbers<[1], [0], [0], [1], [0, 0, 1, 1], [], []>} : vector<512x256xbf16>, vector<256x128xbf16>, vector<512x128xf32> -> vector<512x128xf32>
    %c0_9 = arith.constant 0 : index
    %c0_10 = arith.constant 0 : index
    %12 = vector.load %arg5[%c0_9, %c0_10] : memref<1x128xf32, #tpu.memory_space<vmem>>, vector<1x128xf32>
    %13 = vector.broadcast %12 : vector<1x128xf32> to vector<512x128xf32>
    %14 = arith.addf %11, %13 : vector<512x128xf32>
    %cst_11 = arith.constant 0.000000e+00 : f32
    %15 = vector.broadcast %cst_11 : f32 to vector<512x128xf32>
    %16 = arith.maximumf %14, %15 : vector<512x128xf32>
    %17 = arith.truncf %16 : vector<512x128xf32> to vector<512x128xbf16>
    %c0_12 = arith.constant 0 : index
    %c0_13 = arith.constant 0 : index
    %18 = vector.load %arg6[%c0_12, %c0_13] : memref<128x128xbf16, #tpu.memory_space<vmem>>, vector<128x128xbf16>
    %cst_14 = arith.constant dense<0.000000e+00> : vector<512x128xf32>
    %19 = tpu.matmul %17, %18, %cst_14 {dimension_numbers = #tpu.dot_dimension_numbers<[1], [0], [0], [1], [0, 0, 1, 1], [], []>} : vector<512x128xbf16>, vector<128x128xbf16>, vector<512x128xf32> -> vector<512x128xf32>
    %c0_15 = arith.constant 0 : index
    %c0_16 = arith.constant 0 : index
    %20 = vector.load %arg7[%c0_15, %c0_16] : memref<1x128xf32, #tpu.memory_space<vmem>>, vector<1x128xf32>
    %21 = vector.broadcast %20 : vector<1x128xf32> to vector<512x128xf32>
    %22 = arith.addf %19, %21 : vector<512x128xf32>
    %c0_17 = arith.constant 0 : index
    %c0_18 = arith.constant 0 : index
    %23 = vector.load %arg8[%c0_17, %c0_18] : memref<512x128xf32, #tpu.memory_space<vmem>>, vector<512x128xf32>
    tpu.vector_store %arg8[%c0_17, %c0_18], %22 {strides = array<i32>} : memref<512x128xf32, #tpu.memory_space<vmem>>, vector<512x128xf32>,
    return
  }
  func.func @transform_0(%arg0: i32) -> (i32, i32) {
    %c0_i32 = arith.constant 0 : i32
    %c0_i32_0 = arith.constant 0 : i32
    return %arg0, %c0_i32 : i32, i32
  }
  func.func @transform_1(%arg0: i32) -> (i32, i32) {
    %c0_i32 = arith.constant 0 : i32
    %c0_i32_0 = arith.constant 0 : i32
    %c0_i32_1 = arith.constant 0 : i32
    return %c0_i32, %c0_i32_0 : i32, i32
  }
  func.func @transform_2(%arg0: i32) -> (i32, i32) {
    %c0_i32 = arith.constant 0 : i32
    %c0_i32_0 = arith.constant 0 : i32
    %c0_i32_1 = arith.constant 0 : i32
    return %c0_i32, %c0_i32_0 : i32, i32
  }
  func.func @transform_3(%arg0: i32) -> (i32, i32) {
    %c0_i32 = arith.constant 0 : i32
    %c0_i32_0 = arith.constant 0 : i32
    %c0_i32_1 = arith.constant 0 : i32
    return %c0_i32, %c0_i32_0 : i32, i32
  }
  func.func @transform_4(%arg0: i32) -> (i32, i32) {
    %c0_i32 = arith.constant 0 : i32
    %c0_i32_0 = arith.constant 0 : i32
    %c0_i32_1 = arith.constant 0 : i32
    return %c0_i32, %c0_i32_0 : i32, i32
  }
  func.func @transform_5(%arg0: i32) -> (i32, i32) {
    %c0_i32 = arith.constant 0 : i32
    %c0_i32_0 = arith.constant 0 : i32
    %c0_i32_1 = arith.constant 0 : i32
    return %c0_i32, %c0_i32_0 : i32, i32
  }
  func.func @transform_6(%arg0: i32) -> (i32, i32) {
    %c0_i32 = arith.constant 0 : i32
    %c0_i32_0 = arith.constant 0 : i32
    %c0_i32_1 = arith.constant 0 : i32
    return %c0_i32, %c0_i32_0 : i32, i32
  }
  func.func @transform_7(%arg0: i32) -> (i32, i32) {
    %c0_i32 = arith.constant 0 : i32
    %c0_i32_0 = arith.constant 0 : i32
    return %arg0, %c0_i32 : i32, i32
  }
}

</mosaic_0001>

<llo_original>
// kernel: mlp_forward.1
$region0: #{mlp_forward.1}
  #allocation0 [shape = 'u32[]', space=smem, size = 0x4, offset = 0x4, fixed_abs, tag = 'smem constant byte address 0x4 - core index']
  #allocation1 [shape = 'u32[144,128]{1,0:T(1,128)}', space=vmem, size = 0x12000, scoped, tag = 'internal scratch']
  %s0 = inlined_call_operand.vmem [shape: f32[1024,784], index: 0, kind: input, shape index: {}]
  %s1 = inlined_call_operand.vmem [shape: bf16[784,256], index: 1, kind: input, shape index: {}]
  %s2 = inlined_call_operand.vmem [shape: f32[1,256], index: 2, kind: input, shape index: {}]
  %s3 = inlined_call_operand.vmem [shape: bf16[256,128], index: 3, kind: input, shape index: {}]
  %s4 = inlined_call_operand.vmem [shape: f32[1,128], index: 4, kind: input, shape index: {}]
  %s5 = inlined_call_operand.vmem [shape: bf16[128,128], index: 5, kind: input, shape index: {}]
  %s6 = inlined_call_operand.vmem [shape: f32[1,128], index: 6, kind: input, shape index: {}]
  %s7 = inlined_call_operand.vmem [shape: f32[1024,128], index: 7, kind: output, shape index: {}]
  %s8 = sld [smem:[#allocation0]]
  $region61: #{mlp_forward.1} parent=0
    _
  %s10 = ssub.s32 1, %s8
  %s11 = scalar_select 0, %s10, %s8
  loop: start=0, step=1, limit=4
  $region2: #{mlp_forward.1} parent=0 // loop_pre_header
    _
  $region3: #{mlp_forward.1} parent=0 // loop_header
    %s13 = sphi 0, %s17
    %p14 = scmp.ge.s32.totalorder %s13, 4
    %s23 = sphi 0, %s25
    %s26 = sphi 0, %s23
    %s27 = sphi 0, %s26
    %s43 = sphi 0, %s27
    %s47 = sphi 0, %s47
    %s49 = sphi 0, %s47
    %s50 = sphi 0, %s49
    %s64 = sphi 0, %s50
    %s68 = sphi 0, %s68
    %s70 = sphi 0, %s68
    %s71 = sphi 0, %s70
    %s85 = sphi 0, %s71
    %s89 = sphi 0, %s89
    %s91 = sphi 0, %s89
    %s92 = sphi 0, %s91
    %s106 = sphi 0, %s92
    %s110 = sphi 0, %s110
    %s112 = sphi 0, %s110
    %s113 = sphi 0, %s112
    %s127 = sphi 0, %s113
    %s131 = sphi 0, %s131
    %s133 = sphi 0, %s131
    %s134 = sphi 0, %s133
    %s148 = sphi 0, %s134
    %s152 = sphi 0, %s152
    %s154 = sphi 0, %s152
    %s155 = sphi 0, %s154
    %s169 = sphi 0, %s155
    %s175 = sphi 0, %s177
    %s178 = sphi 0, %s175
    %s179 = sphi 0, %s178
    %s195 = sphi 0, %s179
  $region4: #{mlp_forward.1} parent=0 // loop_header_branch
    %16 = sbr.rel (%p14) target = $region8
  $region5: #{mlp_forward.1} parent=0 // loop_body
    %s18 = ssub.s32 %s13, 1
    %s19 = ssub.s32 %s13, 2
    %s20 = sadd.s32 %s13, 1
    %s21 = ssub.s32 %s13, %s20
    %p22 = scmp.eq.s32.totalorder %s21, 0
    %s24 = sadd.s32 %s23, 1
    %s25 = scalar_select %p22, %s23, %s24
    %p28 = pneg %p22
    %p29 = scmp.eq.s32.totalorder %s13, 1
    %p30 = por %p28, %p29
    %p31 = scmp.ne.s32.totalorder %s23, %s26
    %p32 = scmp.eq.s32.totalorder %s13, 0
    %p33 = por %p31, %p32
    %p34 = scmp.ne.s32.totalorder %s23, %s26
    %p35 = scmp.eq.s32.totalorder %s18, 1
    %p36 = por %p34, %p35
    %p37 = scmp.ne.s32.totalorder %s26, %s27
    %p38 = scmp.eq.s32.totalorder %s18, 0
    %p39 = por %p37, %p38
    %p40 = scmp.ne.s32.totalorder %s26, %s27
    %p41 = scmp.eq.s32.totalorder %s19, 1
    %p42 = por %p40, %p41
    %p44 = scmp.ne.s32.totalorder %s27, %s43
    %p45 = scmp.eq.s32.totalorder %s19, 0
    %p46 = por %p44, %p45
    %s48 = sadd.s32 %s47, 1
    %p51 = scmp.eq.s32.totalorder %s13, 1
    %p52 = scmp.ne.s32.totalorder %s47, %s49
    %p53 = scmp.eq.s32.totalorder %s13, 0
    %p54 = por %p52, %p53
    %p55 = scmp.ne.s32.totalorder %s47, %s49
    %p56 = scmp.eq.s32.totalorder %s18, 1
    %p57 = por %p55, %p56
    %p58 = scmp.ne.s32.totalorder %s49, %s50
    %p59 = scmp.eq.s32.totalorder %s18, 0
    %p60 = por %p58, %p59
    %p61 = scmp.ne.s32.totalorder %s49, %s50
    %p62 = scmp.eq.s32.totalorder %s19, 1
    %p63 = por %p61, %p62
    %p65 = scmp.ne.s32.totalorder %s50, %s64
    %p66 = scmp.eq.s32.totalorder %s19, 0
    %p67 = por %p65, %p66
    %s69 = sadd.s32 %s68, 1
    %p72 = scmp.eq.s32.totalorder %s13, 1
    %p73 = scmp.ne.s32.totalorder %s68, %s70
    %p74 = scmp.eq.s32.totalorder %s13, 0
    %p75 = por %p73, %p74
    %p76 = scmp.ne.s32.totalorder %s68, %s70
    %p77 = scmp.eq.s32.totalorder %s18, 1
    %p78 = por %p76, %p77
    %p79 = scmp.ne.s32.totalorder %s70, %s71
    %p80 = scmp.eq.s32.totalorder %s18, 0
    %p81 = por %p79, %p80
    %p82 = scmp.ne.s32.totalorder %s70, %s71
    %p83 = scmp.eq.s32.totalorder %s19, 1
    %p84 = por %p82, %p83
    %p86 = scmp.ne.s32.totalorder %s71, %s85
    %p87 = scmp.eq.s32.totalorder %s19, 0
    %p88 = por %p86, %p87
    %s90 = sadd.s32 %s89, 1
    %p93 = scmp.eq.s32.totalorder %s13, 1
    %p94 = scmp.ne.s32.totalorder %s89, %s91
    %p95 = scmp.eq.s32.totalorder %s13, 0
    %p96 = por %p94, %p95
    %p97 = scmp.ne.s32.totalorder %s89, %s91
    %p98 = scmp.eq.s32.totalorder %s18, 1
    %p99 = por %p97, %p98
    %p100 = scmp.ne.s32.totalorder %s91, %s92
    %p101 = scmp.eq.s32.totalorder %s18, 0
    %p102 = por %p100, %p101
    %p103 = scmp.ne.s32.totalorder %s91, %s92
    %p104 = scmp.eq.s32.totalorder %s19, 1
    %p105 = por %p103, %p104
    %p107 = scmp.ne.s32.totalorder %s92, %s106
    %p108 = scmp.eq.s32.totalorder %s19, 0
    %p109 = por %p107, %p108
    %s111 = sadd.s32 %s110, 1
    %p114 = scmp.eq.s32.totalorder %s13, 1
    %p115 = scmp.ne.s32.totalorder %s110, %s112
    %p116 = scmp.eq.s32.totalorder %s13, 0
    %p117 = por %p115, %p116
    %p118 = scmp.ne.s32.totalorder %s110, %s112
    %p119 = scmp.eq.s32.totalorder %s18, 1
    %p120 = por %p118, %p119
    %p121 = scmp.ne.s32.totalorder %s112, %s113
    %p122 = scmp.eq.s32.totalorder %s18, 0
    %p123 = por %p121, %p122
    %p124 = scmp.ne.s32.totalorder %s112, %s113
    %p125 = scmp.eq.s32.totalorder %s19, 1
    %p126 = por %p124, %p125
    %p128 = scmp.ne.s32.totalorder %s113, %s127
    %p129 = scmp.eq.s32.totalorder %s19, 0
    %p130 = por %p128, %p129
    %s132 = sadd.s32 %s131, 1
    %p135 = scmp.eq.s32.totalorder %s13, 1
    %p136 = scmp.ne.s32.totalorder %s131, %s133
    %p137 = scmp.eq.s32.totalorder %s13, 0
    %p138 = por %p136, %p137
    %p139 = scmp.ne.s32.totalorder %s131, %s133
    %p140 = scmp.eq.s32.totalorder %s18, 1
    %p141 = por %p139, %p140
    %p142 = scmp.ne.s32.totalorder %s133, %s134
    %p143 = scmp.eq.s32.totalorder %s18, 0
    %p144 = por %p142, %p143
    %p145 = scmp.ne.s32.totalorder %s133, %s134
    %p146 = scmp.eq.s32.totalorder %s19, 1
    %p147 = por %p145, %p146
    %p149 = scmp.ne.s32.totalorder %s134, %s148
    %p150 = scmp.eq.s32.totalorder %s19, 0
    %p151 = por %p149, %p150
    %s153 = sadd.s32 %s152, 1
    %p156 = scmp.eq.s32.totalorder %s13, 1
    %p157 = scmp.ne.s32.totalorder %s152, %s154
    %p158 = scmp.eq.s32.totalorder %s13, 0
    %p159 = por %p157, %p158
    %p160 = scmp.ne.s32.totalorder %s152, %s154
    %p161 = scmp.eq.s32.totalorder %s18, 1
    %p162 = por %p160, %p161
    %p163 = scmp.ne.s32.totalorder %s154, %s155
    %p164 = scmp.eq.s32.totalorder %s18, 0
    %p165 = por %p163, %p164
    %p166 = scmp.ne.s32.totalorder %s154, %s155
    %p167 = scmp.eq.s32.totalorder %s19, 1
    %p168 = por %p166, %p167
    %p170 = scmp.ne.s32.totalorder %s155, %s169
    %p171 = scmp.eq.s32.totalorder %s19, 0
    %p172 = por %p170, %p171
    %s173 = ssub.s32 %s13, %s20
    %p174 = scmp.eq.s32.totalorder %s173, 0
    %s176 = sadd.s32 %s175, 1
    %s177 = scalar_select %p174, %s175, %s176
    %p180 = pneg %p174
    %p181 = scmp.eq.s32.totalorder %s13, 1
    %p182 = por %p180, %p181
    %p183 = scmp.ne.s32.totalorder %s175, %s178
    %p184 = scmp.eq.s32.totalorder %s13, 0
    %p185 = por %p183, %p184
    %p186 = scmp.ne.s32.totalorder %s175, %s178
    %p187 = scmp.eq.s32.totalorder %s18, 1
    %p188 = por %p186, %p187
    %p189 = scmp.ne.s32.totalorder %s178, %s179
    %p190 = scmp.eq.s32.totalorder %s18, 0
    %p191 = por %p189, %p190
    %p192 = scmp.ne.s32.totalorder %s178, %s179
    %p193 = scmp.eq.s32.totalorder %s19, 1
    %p194 = por %p192, %p193
    %p196 = scmp.ne.s32.totalorder %s179, %s195
    %p197 = scmp.eq.s32.totalorder %s19, 0
    %p198 = por %p196, %p197
    %p199 = scmp.le.s32.totalorder 1, %s13
    %p200 = scmp.lt.s32.totalorder %s13, 3
    %p201 = pnand %p199, %p200
    %p202 = pneg %p201
    // Predicated region
    $region9: #{mlp_forward.1} parent=5 // pred_check
      _
    $region10: #{mlp_forward.1} parent=5 // pred_check_branch
      %204 = sbr.rel (%p201) target = $region12
    $region11: #{mlp_forward.1} parent=5 // pred_region
      %s205 = ssub.s32 %s13, 1
      // Predicated region
      $region13: #{mlp_forward.1} parent=11 // pred_check
        %p206 = pneg %p60
      $region14: #{mlp_forward.1} parent=11 // pred_check_branch
        %208 = sbr.rel (%p206) target = $region16
      $region15: #{mlp_forward.1} parent=11 // pred_region
        _
      $region16: #{mlp_forward.1} parent=11 // pred_fallthru
        _
      // Predicated region
      $region17: #{mlp_forward.1} parent=11 // pred_check
        %p209 = pneg %p81
      $region18: #{mlp_forward.1} parent=11 // pred_check_branch
        %211 = sbr.rel (%p209) target = $region20
      $region19: #{mlp_forward.1} parent=11 // pred_region
        _
      $region20: #{mlp_forward.1} parent=11 // pred_fallthru
        _
      // Predicated region
      $region21: #{mlp_forward.1} parent=11 // pred_check
        %p212 = pneg %p102
      $region22: #{mlp_forward.1} parent=11 // pred_check_branch
        %214 = sbr.rel (%p212) target = $region24
      $region23: #{mlp_forward.1} parent=11 // pred_region
        _
      $region24: #{mlp_forward.1} parent=11 // pred_fallthru
        _
      // Predicated region
      $region25: #{mlp_forward.1} parent=11 // pred_check
        %p215 = pneg %p123
      $region26: #{mlp_forward.1} parent=11 // pred_check_branch
        %217 = sbr.rel (%p215) target = $region28
      $region27: #{mlp_forward.1} parent=11 // pred_region
        _
      $region28: #{mlp_forward.1} parent=11 // pred_fallthru
        _
      // Predicated region
      $region29: #{mlp_forward.1} parent=11 // pred_check
        %p218 = pneg %p144
      $region30: #{mlp_forward.1} parent=11 // pred_check_branch
        %220 = sbr.rel (%p218) target = $region32
      $region31: #{mlp_forward.1} parent=11 // pred_region
        _
      $region32: #{mlp_forward.1} parent=11 // pred_fallthru
        _
      // Predicated region
      $region33: #{mlp_forward.1} parent=11 // pred_check
        %p221 = pneg %p165
      $region34: #{mlp_forward.1} parent=11 // pred_check_branch
        %223 = sbr.rel (%p221) target = $region36
      $region35: #{mlp_forward.1} parent=11 // pred_region
        _
      $region36: #{mlp_forward.1} parent=11 // pred_fallthru
        _
    $region12: #{mlp_forward.1} parent=5 // pred_fallthru
      _
    %p224 = scmp.lt.s32.totalorder %s13, 2
    // Predicated region
    $region37: #{mlp_forward.1} parent=5 // pred_check
      %p225 = pneg %p224
    $region38: #{mlp_forward.1} parent=5 // pred_check_branch
      %227 = sbr.rel (%p225) target = $region40
    $region39: #{mlp_forward.1} parent=5 // pred_region
      // Predicated region
      $region41: #{mlp_forward.1} parent=39 // pred_check
        %p228 = pneg %p33
      $region42: #{mlp_forward.1} parent=39 // pred_check_branch
        %230 = sbr.rel (%p228) target = $region44
      $region43: #{mlp_forward.1} parent=39 // pred_region
        %s231 = smul.u32 64, %s13
        %p232 = scmp.lt.s32.totalorder %s231, 127
        %s233 = scalar_select %p232, %s231, 127
        %s234 = smul.addr %s233, 7
        %s235 = smul.addr %s234, 8
        %s236 = scalar_lea.vmem %s0, %s235
        %s237 = smul.u32 64, %s13
      $region44: #{mlp_forward.1} parent=39 // pred_fallthru
        _
    $region40: #{mlp_forward.1} parent=5 // pred_fallthru
      _
    %p238 = scmp.le.s32.totalorder 1, %s13
    %p239 = scmp.lt.s32.totalorder %s13, 3
    %p240 = pnand %p238, %p239
    %p241 = pneg %p240
    // Predicated region
    $region45: #{mlp_forward.1} parent=5 // pred_check
      _
    $region46: #{mlp_forward.1} parent=5 // pred_check_branch
      %243 = sbr.rel (%p240) target = $region48
    $region47: #{mlp_forward.1} parent=5 // pred_region
      %s244 = ssub.s32 %s13, 1
      %s245 = smul.u32 64, %s18
      %p246 = scmp.lt.s32.totalorder %s245, 127
      %s247 = scalar_select %p246, %s245, 127
      %s248 = smul.addr %s247, 7
      %s249 = smul.addr %s248, 8
      %s250 = scalar_lea.vmem %s0, %s249
      %p251 = pneg %p39
      %p252 = pneg %p36
      %p253 = pneg %p60
      %p254 = pneg %p57
      %p255 = pneg %p81
      %p256 = pneg %p78
      %p257 = pneg %p102
      %p258 = pneg %p99
      %p259 = pneg %p123
      %p260 = pneg %p120
      %p261 = pneg %p144
      %p262 = pneg %p141
      %p263 = pneg %p165
      %p264 = pneg %p162
      %p265 = pneg %p191
      %p266 = pneg %p188
      %s267 = smul.u32 64, %s18
      %p268 = scmp.lt.s32.totalorder %s267, 127
      %s269 = scalar_select %p268, %s267, 127
      %s270 = smul.addr %s269, 8
      %s271 = scalar_lea.vmem %s7, %s270
      %s272 = smul.u32 64, %s18
      %p273 = scmp.lt.s32.totalorder %s272, 127
      %s274 = scalar_select %p273, %s272, 127
      %s275 = smul.addr %s274, 7
      %s276 = smul.addr %s275, 8
      %s277 = scalar_lea.vmem %s0, %s276
      %s278 = smul.u32 64, %s18
      %s279 = smul.u32 64, %s18
      %p280 = scmp.lt.s32.totalorder %s279, 127
      %s281 = scalar_select %p280, %s279, 127
      %s282 = smul.addr %s281, 8
      %s283 = scalar_lea.vmem %s7, %s282
      %s284 = smul.u32 64, %s18
      %v286 = vld [vmem:[%s277] sm:$0xff]
      %v287 = vld [vmem:[%s277 + $0x8] sm:$0xff]
      %v288 = vld [vmem:[%s277 + $0x10] sm:$0xff]
      %v289 = vld [vmem:[%s277 + $0x18] sm:$0xff]
      %v290 = vld [vmem:[%s277 + $0x20] sm:$0xff]
      %v291 = vld [vmem:[%s277 + $0x28] sm:$0xff]
      %v292 = vld [vmem:[%s277 + $0x30] sm:$0xff]
      %v293 = vld [vmem:[%s277 + $0x38] sm:$0xff]
      %v294 = vld [vmem:[%s277 + $0x40] sm:$0xff]
      %v295 = vld [vmem:[%s277 + $0x48] sm:$0xff]
      %v296 = vld [vmem:[%s277 + $0x50] sm:$0xff]
      %v297 = vld [vmem:[%s277 + $0x58] sm:$0xff]
      %v298 = vld [vmem:[%s277 + $0x60] sm:$0xff]
      %v299 = vld [vmem:[%s277 + $0x68] sm:$0xff]
      %v300 = vld [vmem:[%s277 + $0x70] sm:$0xff]
      %v301 = vld [vmem:[%s277 + $0x78] sm:$0xff]
      %v302 = vld [vmem:[%s277 + $0x80] sm:$0xff]
      %v303 = vld [vmem:[%s277 + $0x88] sm:$0xff]
      %v304 = vld [vmem:[%s277 + $0x90] sm:$0xff]
      %v305 = vld [vmem:[%s277 + $0x98] sm:$0xff]
      %v306 = vld [vmem:[%s277 + $0xa0] sm:$0xff]
      %v307 = vld [vmem:[%s277 + $0xa8] sm:$0xff]
      %v308 = vld [vmem:[%s277 + $0xb0] sm:$0xff]
      %v309 = vld [vmem:[%s277 + $0xb8] sm:$0xff]
      %v310 = vld [vmem:[%s277 + $0xc0] sm:$0xff]
      %v311 = vld [vmem:[%s277 + $0xc8] sm:$0xff]
      %v312 = vld [vmem:[%s277 + $0xd0] sm:$0xff]
      %v313 = vld [vmem:[%s277 + $0xd8] sm:$0xff]
      %v314 = vld [vmem:[%s277 + $0xe0] sm:$0xff]
      %v315 = vld [vmem:[%s277 + $0xe8] sm:$0xff]
      %v316 = vld [vmem:[%s277 + $0xf0] sm:$0xff]
      %v317 = vld [vmem:[%s277 + $0xf8] sm:$0xff]
      %v318 = vld [vmem:[%s277 + $0x100] sm:$0xff]
      %v319 = vld [vmem:[%s277 + $0x108] sm:$0xff]
      %v320 = vld [vmem:[%s277 + $0x110] sm:$0xff]
      %v321 = vld [vmem:[%s277 + $0x118] sm:$0xff]
      %v322 = vld [vmem:[%s277 + $0x120] sm:$0xff]
      %v323 = vld [vmem:[%s277 + $0x128] sm:$0xff]
      %v324 = vld [vmem:[%s277 + $0x130] sm:$0xff]
      %v325 = vld [vmem:[%s277 + $0x138] sm:$0xff]
      %v326 = vld [vmem:[%s277 + $0x140] sm:$0xff]
      %v327 = vld [vmem:[%s277 + $0x148] sm:$0xff]
      %v328 = vld [vmem:[%s277 + $0x150] sm:$0xff]
      %v329 = vld [vmem:[%s277 + $0x158] sm:$0xff]
      %v330 = vld [vmem:[%s277 + $0x160] sm:$0xff]
      %v331 = vld [vmem:[%s277 + $0x168] sm:$0xff]
      %v332 = vld [vmem:[%s277 + $0x170] sm:$0xff]
      %v333 = vld [vmem:[%s277 + $0x178] sm:$0xff]
      %v334 = vld [vmem:[%s277 + $0x180] sm:$0xff]
      %v335 = vld [vmem:[%s277 + $0x188] sm:$0xff]
      %v336 = vld [vmem:[%s277 + $0x190] sm:$0xff]
      %v337 = vld [vmem:[%s277 + $0x198] sm:$0xff]
      %v338 = vld [vmem:[%s277 + $0x1a0] sm:$0xff]
      %v339 = vld [vmem:[%s277 + $0x1a8] sm:$0xff]
      %v340 = vld [vmem:[%s277 + $0x1b0] sm:$0xff]
      %v341 = vld [vmem:[%s277 + $0x1b8] sm:$0xff]
      %v342 = vld [vmem:[%s277 + $0x1c0] sm:$0xff]
      %v343 = vld [vmem:[%s277 + $0x1c8] sm:$0xff]
      %v344 = vld [vmem:[%s277 + $0x1d0] sm:$0xff]
      %v345 = vld [vmem:[%s277 + $0x1d8] sm:$0xff]
      %v346 = vld [vmem:[%s277 + $0x1e0] sm:$0xff]
      %v347 = vld [vmem:[%s277 + $0x1e8] sm:$0xff]
      %v348 = vld [vmem:[%s277 + $0x1f0] sm:$0xff]
      %v349 = vld [vmem:[%s277 + $0x1f8] sm:$0xff]
      %v350 = vld [vmem:[%s277 + $0x200] sm:$0xff]
      %v351 = vld [vmem:[%s277 + $0x208] sm:$0xff]
      %v352 = vld [vmem:[%s277 + $0x210] sm:$0xff]
      %v353 = vld [vmem:[%s277 + $0x218] sm:$0xff]
      %v354 = vld [vmem:[%s277 + $0x220] sm:$0xff]
      %v355 = vld [vmem:[%s277 + $0x228] sm:$0xff]
      %v356 = vld [vmem:[%s277 + $0x230] sm:$0xff]
      %v357 = vld [vmem:[%s277 + $0x238] sm:$0xff]
      %v358 = vld [vmem:[%s277 + $0x240] sm:$0xff]
      %v359 = vld [vmem:[%s277 + $0x248] sm:$0xff]
      %v360 = vld [vmem:[%s277 + $0x250] sm:$0xff]
      %v361 = vld [vmem:[%s277 + $0x258] sm:$0xff]
      %v362 = vld [vmem:[%s277 + $0x260] sm:$0xff]
      %v363 = vld [vmem:[%s277 + $0x268] sm:$0xff]
      %v364 = vld [vmem:[%s277 + $0x270] sm:$0xff]
      %v365 = vld [vmem:[%s277 + $0x278] sm:$0xff]
      %v366 = vld [vmem:[%s277 + $0x280] sm:$0xff]
      %v367 = vld [vmem:[%s277 + $0x288] sm:$0xff]
      %v368 = vld [vmem:[%s277 + $0x290] sm:$0xff]
      %v369 = vld [vmem:[%s277 + $0x298] sm:$0xff]
      %v370 = vld [vmem:[%s277 + $0x2a0] sm:$0xff]
      %v371 = vld [vmem:[%s277 + $0x2a8] sm:$0xff]
      %v372 = vld [vmem:[%s277 + $0x2b0] sm:$0xff]
      %v373 = vld [vmem:[%s277 + $0x2b8] sm:$0xff]
      %v374 = vld [vmem:[%s277 + $0x2c0] sm:$0xff]
      %v375 = vld [vmem:[%s277 + $0x2c8] sm:$0xff]
      %v376 = vld [vmem:[%s277 + $0x2d0] sm:$0xff]
      %v377 = vld [vmem:[%s277 + $0x2d8] sm:$0xff]
      %v378 = vld [vmem:[%s277 + $0x2e0] sm:$0xff]
      %v379 = vld [vmem:[%s277 + $0x2e8] sm:$0xff]
      %v380 = vld [vmem:[%s277 + $0x2f0] sm:$0xff]
      %v381 = vld [vmem:[%s277 + $0x2f8] sm:$0xff]
      %v382 = vld [vmem:[%s277 + $0x300] sm:$0xff]
      %v383 = vld [vmem:[%s277 + $0x308] sm:$0xff]
      %v384 = vld [vmem:[%s277 + $0x310] sm:$0xff]
      %v385 = vld [vmem:[%s277 + $0x318] sm:$0xff]
      %v386 = vld [vmem:[%s277 + $0x320] sm:$0xff]
      %v387 = vld [vmem:[%s277 + $0x328] sm:$0xff]
      %v388 = vld [vmem:[%s277 + $0x330] sm:$0xff]
      %v389 = vld [vmem:[%s277 + $0x338] sm:$0xff]
      %v390 = vld [vmem:[%s277 + $0x340] sm:$0xff]
      %v391 = vld [vmem:[%s277 + $0x348] sm:$0xff]
      %v392 = vld [vmem:[%s277 + $0x350] sm:$0xff]
      %v393 = vld [vmem:[%s277 + $0x358] sm:$0xff]
      %v394 = vld [vmem:[%s277 + $0x360] sm:$0xff]
      %v395 = vld [vmem:[%s277 + $0x368] sm:$0xff]
      %v396 = vld [vmem:[%s277 + $0x370] sm:$0xff]
      %v397 = vld [vmem:[%s277 + $0x378] sm:$0xff]
      %v398 = vld [vmem:[%s277 + $0x380] sm:$0xff]
      %v399 = vld [vmem:[%s277 + $0x388] sm:$0xff]
      %v400 = vld [vmem:[%s277 + $0x390] sm:$0xff]
      %v401 = vld [vmem:[%s277 + $0x398] sm:$0xff]
      %v402 = vld [vmem:[%s277 + $0x3a0] sm:$0xff]
      %v403 = vld [vmem:[%s277 + $0x3a8] sm:$0xff]
      %v404 = vld [vmem:[%s277 + $0x3b0] sm:$0xff]
      %v405 = vld [vmem:[%s277 + $0x3b8] sm:$0xff]
      %v406 = vld [vmem:[%s277 + $0x3c0] sm:$0xff]
      %v407 = vld [vmem:[%s277 + $0x3c8] sm:$0xff]
      %v408 = vld [vmem:[%s277 + $0x3d0] sm:$0xff]
      %v409 = vld [vmem:[%s277 + $0x3d8] sm:$0xff]
      %v410 = vld [vmem:[%s277 + $0x3e0] sm:$0xff]
      %v411 = vld [vmem:[%s277 + $0x3e8] sm:$0xff]
      %v412 = vld [vmem:[%s277 + $0x3f0] sm:$0xff]
      %v413 = vld [vmem:[%s277 + $0x3f8] sm:$0xff]
      %v414 = vld [vmem:[%s277 + $0x400] sm:$0xff]
      %v415 = vld [vmem:[%s277 + $0x408] sm:$0xff]
      %v416 = vld [vmem:[%s277 + $0x410] sm:$0xff]
      %v417 = vld [vmem:[%s277 + $0x418] sm:$0xff]
      %v418 = vld [vmem:[%s277 + $0x420] sm:$0xff]
      %v419 = vld [vmem:[%s277 + $0x428] sm:$0xff]
      %v420 = vld [vmem:[%s277 + $0x430] sm:$0xff]
      %v421 = vld [vmem:[%s277 + $0x438] sm:$0xff]
      %v422 = vld [vmem:[%s277 + $0x440] sm:$0xff]
      %v423 = vld [vmem:[%s277 + $0x448] sm:$0xff]
      %v424 = vld [vmem:[%s277 + $0x450] sm:$0xff]
      %v425 = vld [vmem:[%s277 + $0x458] sm:$0xff]
      %v426 = vld [vmem:[%s277 + $0x460] sm:$0xff]
      %v427 = vld [vmem:[%s277 + $0x468] sm:$0xff]
      %v428 = vld [vmem:[%s277 + $0x470] sm:$0xff]
      %v429 = vld [vmem:[%s277 + $0x478] sm:$0xff]
      %v430 = vld [vmem:[%s277 + $0x480] sm:$0xff]
      %v431 = vld [vmem:[%s277 + $0x488] sm:$0xff]
      %v432 = vld [vmem:[%s277 + $0x490] sm:$0xff]
      %v433 = vld [vmem:[%s277 + $0x498] sm:$0xff]
      %v434 = vld [vmem:[%s277 + $0x4a0] sm:$0xff]
      %v435 = vld [vmem:[%s277 + $0x4a8] sm:$0xff]
      %v436 = vld [vmem:[%s277 + $0x4b0] sm:$0xff]
      %v437 = vld [vmem:[%s277 + $0x4b8] sm:$0xff]
      %v438 = vld [vmem:[%s277 + $0x4c0] sm:$0xff]
      %v439 = vld [vmem:[%s277 + $0x4c8] sm:$0xff]
      %v440 = vld [vmem:[%s277 + $0x4d0] sm:$0xff]
      %v441 = vld [vmem:[%s277 + $0x4d8] sm:$0xff]
      %v442 = vld [vmem:[%s277 + $0x4e0] sm:$0xff]
      %v443 = vld [vmem:[%s277 + $0x4e8] sm:$0xff]
      %v444 = vld [vmem:[%s277 + $0x4f0] sm:$0xff]
      %v445 = vld [vmem:[%s277 + $0x4f8] sm:$0xff]
      %v446 = vld [vmem:[%s277 + $0x500] sm:$0xff]
      %v447 = vld [vmem:[%s277 + $0x508] sm:$0xff]
      %v448 = vld [vmem:[%s277 + $0x510] sm:$0xff]
      %v449 = vld [vmem:[%s277 + $0x518] sm:$0xff]
      %v450 = vld [vmem:[%s277 + $0x520] sm:$0xff]
      %v451 = vld [vmem:[%s277 + $0x528] sm:$0xff]
      %v452 = vld [vmem:[%s277 + $0x530] sm:$0xff]
      %v453 = vld [vmem:[%s277 + $0x538] sm:$0xff]
      %v454 = vld [vmem:[%s277 + $0x540] sm:$0xff]
      %v455 = vld [vmem:[%s277 + $0x548] sm:$0xff]
      %v456 = vld [vmem:[%s277 + $0x550] sm:$0xff]
      %v457 = vld [vmem:[%s277 + $0x558] sm:$0xff]
      %v458 = vld [vmem:[%s277 + $0x560] sm:$0xff]
      %v459 = vld [vmem:[%s277 + $0x568] sm:$0xff]
      %v460 = vld [vmem:[%s277 + $0x570] sm:$0xff]
      %v461 = vld [vmem:[%s277 + $0x578] sm:$0xff]
      %v462 = vld [vmem:[%s277 + $0x580] sm:$0xff]
      %v463 = vld [vmem:[%s277 + $0x588] sm:$0xff]
      %v464 = vld [vmem:[%s277 + $0x590] sm:$0xff]
      %v465 = vld [vmem:[%s277 + $0x598] sm:$0xff]
      %v466 = vld [vmem:[%s277 + $0x5a0] sm:$0xff]
      %v467 = vld [vmem:[%s277 + $0x5a8] sm:$0xff]
      %v468 = vld [vmem:[%s277 + $0x5b0] sm:$0xff]
      %v469 = vld [vmem:[%s277 + $0x5b8] sm:$0xff]
      %v470 = vld [vmem:[%s277 + $0x5c0] sm:$0xff]
      %v471 = vld [vmem:[%s277 + $0x5c8] sm:$0xff]
      %v472 = vld [vmem:[%s277 + $0x5d0] sm:$0xff]
      %v473 = vld [vmem:[%s277 + $0x5d8] sm:$0xff]
      %v474 = vld [vmem:[%s277 + $0x5e0] sm:$0xff]
      %v475 = vld [vmem:[%s277 + $0x5e8] sm:$0xff]
      %v476 = vld [vmem:[%s277 + $0x5f0] sm:$0xff]
      %v477 = vld [vmem:[%s277 + $0x5f8] sm:$0xff]
      %v478 = vld [vmem:[%s277 + $0x600] sm:$0xff]
      %v479 = vld [vmem:[%s277 + $0x608] sm:$0xff]
      %v480 = vld [vmem:[%s277 + $0x610] sm:$0xff]
      %v481 = vld [vmem:[%s277 + $0x618] sm:$0xff]
      %v482 = vld [vmem:[%s277 + $0x620] sm:$0xff]
      %v483 = vld [vmem:[%s277 + $0x628] sm:$0xff]
      %v484 = vld [vmem:[%s277 + $0x630] sm:$0xff]
      %v485 = vld [vmem:[%s277 + $0x638] sm:$0xff]
      %v486 = vld [vmem:[%s277 + $0x640] sm:$0xff]
      %v487 = vld [vmem:[%s277 + $0x648] sm:$0xff]
      %v488 = vld [vmem:[%s277 + $0x650] sm:$0xff]
      %v489 = vld [vmem:[%s277 + $0x658] sm:$0xff]
      %v490 = vld [vmem:[%s277 + $0x660] sm:$0xff]
      %v491 = vld [vmem:[%s277 + $0x668] sm:$0xff]
      %v492 = vld [vmem:[%s277 + $0x670] sm:$0xff]
      %v493 = vld [vmem:[%s277 + $0x678] sm:$0xff]
      %v494 = vld [vmem:[%s277 + $0x680] sm:$0xff]
      %v495 = vld [vmem:[%s277 + $0x688] sm:$0xff]
      %v496 = vld [vmem:[%s277 + $0x690] sm:$0xff]
      %v497 = vld [vmem:[%s277 + $0x698] sm:$0xff]
      %v498 = vld [vmem:[%s277 + $0x6a0] sm:$0xff]
      %v499 = vld [vmem:[%s277 + $0x6a8] sm:$0xff]
      %v500 = vld [vmem:[%s277 + $0x6b0] sm:$0xff]
      %v501 = vld [vmem:[%s277 + $0x6b8] sm:$0xff]
      %v502 = vld [vmem:[%s277 + $0x6c0] sm:$0xff]
      %v503 = vld [vmem:[%s277 + $0x6c8] sm:$0xff]
      %v504 = vld [vmem:[%s277 + $0x6d0] sm:$0xff]
      %v505 = vld [vmem:[%s277 + $0x6d8] sm:$0xff]
      %v506 = vld [vmem:[%s277 + $0x6e0] sm:$0xff]
      %v507 = vld [vmem:[%s277 + $0x6e8] sm:$0xff]
      %v508 = vld [vmem:[%s277 + $0x6f0] sm:$0xff]
      %v509 = vld [vmem:[%s277 + $0x6f8] sm:$0xff]
      %v510 = vld [vmem:[%s277 + $0x700] sm:$0xff]
      %v511 = vld [vmem:[%s277 + $0x708] sm:$0xff]
      %v512 = vld [vmem:[%s277 + $0x710] sm:$0xff]
      %v513 = vld [vmem:[%s277 + $0x718] sm:$0xff]
      %v514 = vld [vmem:[%s277 + $0x720] sm:$0xff]
      %v515 = vld [vmem:[%s277 + $0x728] sm:$0xff]
      %v516 = vld [vmem:[%s277 + $0x730] sm:$0xff]
      %v517 = vld [vmem:[%s277 + $0x738] sm:$0xff]
      %v518 = vld [vmem:[%s277 + $0x740] sm:$0xff]
      %v519 = vld [vmem:[%s277 + $0x748] sm:$0xff]
      %v520 = vld [vmem:[%s277 + $0x750] sm:$0xff]
      %v521 = vld [vmem:[%s277 + $0x758] sm:$0xff]
      %v522 = vld [vmem:[%s277 + $0x760] sm:$0xff]
      %v523 = vld [vmem:[%s277 + $0x768] sm:$0xff]
      %v524 = vld [vmem:[%s277 + $0x770] sm:$0xff]
      %v525 = vld [vmem:[%s277 + $0x778] sm:$0xff]
      %v526 = vld [vmem:[%s277 + $0x780] sm:$0xff]
      %v527 = vld [vmem:[%s277 + $0x788] sm:$0xff]
      %v528 = vld [vmem:[%s277 + $0x790] sm:$0xff]
      %v529 = vld [vmem:[%s277 + $0x798] sm:$0xff]
      %v530 = vld [vmem:[%s277 + $0x7a0] sm:$0xff]
      %v531 = vld [vmem:[%s277 + $0x7a8] sm:$0xff]
      %v532 = vld [vmem:[%s277 + $0x7b0] sm:$0xff]
      %v533 = vld [vmem:[%s277 + $0x7b8] sm:$0xff]
      %v534 = vld [vmem:[%s277 + $0x7c0] sm:$0xff]
      %v535 = vld [vmem:[%s277 + $0x7c8] sm:$0xff]
      %v536 = vld [vmem:[%s277 + $0x7d0] sm:$0xff]
      %v537 = vld [vmem:[%s277 + $0x7d8] sm:$0xff]
      %v538 = vld [vmem:[%s277 + $0x7e0] sm:$0xff]
      %v539 = vld [vmem:[%s277 + $0x7e8] sm:$0xff]
      %v540 = vld [vmem:[%s277 + $0x7f0] sm:$0xff]
      %v541 = vld [vmem:[%s277 + $0x7f8] sm:$0xff]
      %v542 = vld [vmem:[%s277 + $0x800] sm:$0xff]
      %v543 = vld [vmem:[%s277 + $0x808] sm:$0xff]
      %v544 = vld [vmem:[%s277 + $0x810] sm:$0xff]
      %v545 = vld [vmem:[%s277 + $0x818] sm:$0xff]
      %v546 = vld [vmem:[%s277 + $0x820] sm:$0xff]
      %v547 = vld [vmem:[%s277 + $0x828] sm:$0xff]
      %v548 = vld [vmem:[%s277 + $0x830] sm:$0xff]
      %v549 = vld [vmem:[%s277 + $0x838] sm:$0xff]
      %v550 = vld [vmem:[%s277 + $0x840] sm:$0xff]
      %v551 = vld [vmem:[%s277 + $0x848] sm:$0xff]
      %v552 = vld [vmem:[%s277 + $0x850] sm:$0xff]
      %v553 = vld [vmem:[%s277 + $0x858] sm:$0xff]
      %v554 = vld [vmem:[%s277 + $0x860] sm:$0xff]
      %v555 = vld [vmem:[%s277 + $0x868] sm:$0xff]
      %v556 = vld [vmem:[%s277 + $0x870] sm:$0xff]
      %v557 = vld [vmem:[%s277 + $0x878] sm:$0xff]
      %v558 = vld [vmem:[%s277 + $0x880] sm:$0xff]
      %v559 = vld [vmem:[%s277 + $0x888] sm:$0xff]
      %v560 = vld [vmem:[%s277 + $0x890] sm:$0xff]
      %v561 = vld [vmem:[%s277 + $0x898] sm:$0xff]
      %v562 = vld [vmem:[%s277 + $0x8a0] sm:$0xff]
      %v563 = vld [vmem:[%s277 + $0x8a8] sm:$0xff]
      %v564 = vld [vmem:[%s277 + $0x8b0] sm:$0xff]
      %v565 = vld [vmem:[%s277 + $0x8b8] sm:$0xff]
      %v566 = vld [vmem:[%s277 + $0x8c0] sm:$0xff]
      %v567 = vld [vmem:[%s277 + $0x8c8] sm:$0xff]
      %v568 = vld [vmem:[%s277 + $0x8d0] sm:$0xff]
      %v569 = vld [vmem:[%s277 + $0x8d8] sm:$0xff]
      %v570 = vld [vmem:[%s277 + $0x8e0] sm:$0xff]
      %v571 = vld [vmem:[%s277 + $0x8e8] sm:$0xff]
      %v572 = vld [vmem:[%s277 + $0x8f0] sm:$0xff]
      %v573 = vld [vmem:[%s277 + $0x8f8] sm:$0xff]
      %v574 = vld [vmem:[%s277 + $0x900] sm:$0xff]
      %v575 = vld [vmem:[%s277 + $0x908] sm:$0xff]
      %v576 = vld [vmem:[%s277 + $0x910] sm:$0xff]
      %v577 = vld [vmem:[%s277 + $0x918] sm:$0xff]
      %v578 = vld [vmem:[%s277 + $0x920] sm:$0xff]
      %v579 = vld [vmem:[%s277 + $0x928] sm:$0xff]
      %v580 = vld [vmem:[%s277 + $0x930] sm:$0xff]
      %v581 = vld [vmem:[%s277 + $0x938] sm:$0xff]
      %v582 = vld [vmem:[%s277 + $0x940] sm:$0xff]
      %v583 = vld [vmem:[%s277 + $0x948] sm:$0xff]
      %v584 = vld [vmem:[%s277 + $0x950] sm:$0xff]
      %v585 = vld [vmem:[%s277 + $0x958] sm:$0xff]
      %v586 = vld [vmem:[%s277 + $0x960] sm:$0xff]
      %v587 = vld [vmem:[%s277 + $0x968] sm:$0xff]
      %v588 = vld [vmem:[%s277 + $0x970] sm:$0xff]
      %v589 = vld [vmem:[%s277 + $0x978] sm:$0xff]
      %v590 = vld [vmem:[%s277 + $0x980] sm:$0xff]
      %v591 = vld [vmem:[%s277 + $0x988] sm:$0xff]
      %v592 = vld [vmem:[%s277 + $0x990] sm:$0xff]
      %v593 = vld [vmem:[%s277 + $0x998] sm:$0xff]
      %v594 = vld [vmem:[%s277 + $0x9a0] sm:$0xff]
      %v595 = vld [vmem:[%s277 + $0x9a8] sm:$0xff]
      %v596 = vld [vmem:[%s277 + $0x9b0] sm:$0xff]
      %v597 = vld [vmem:[%s277 + $0x9b8] sm:$0xff]
      %v598 = vld [vmem:[%s277 + $0x9c0] sm:$0xff]
      %v599 = vld [vmem:[%s277 + $0x9c8] sm:$0xff]
      %v600 = vld [vmem:[%s277 + $0x9d0] sm:$0xff]
      %v601 = vld [vmem:[%s277 + $0x9d8] sm:$0xff]
      %v602 = vld [vmem:[%s277 + $0x9e0] sm:$0xff]
      %v603 = vld [vmem:[%s277 + $0x9e8] sm:$0xff]
      %v604 = vld [vmem:[%s277 + $0x9f0] sm:$0xff]
      %v605 = vld [vmem:[%s277 + $0x9f8] sm:$0xff]
      %v606 = vld [vmem:[%s277 + $0xa00] sm:$0xff]
      %v607 = vld [vmem:[%s277 + $0xa08] sm:$0xff]
      %v608 = vld [vmem:[%s277 + $0xa10] sm:$0xff]
      %v609 = vld [vmem:[%s277 + $0xa18] sm:$0xff]
      %v610 = vld [vmem:[%s277 + $0xa20] sm:$0xff]
      %v611 = vld [vmem:[%s277 + $0xa28] sm:$0xff]
      %v612 = vld [vmem:[%s277 + $0xa30] sm:$0xff]
      %v613 = vld [vmem:[%s277 + $0xa38] sm:$0xff]
      %v614 = vld [vmem:[%s277 + $0xa40] sm:$0xff]
      %v615 = vld [vmem:[%s277 + $0xa48] sm:$0xff]
      %v616 = vld [vmem:[%s277 + $0xa50] sm:$0xff]
      %v617 = vld [vmem:[%s277 + $0xa58] sm:$0xff]
      %v618 = vld [vmem:[%s277 + $0xa60] sm:$0xff]
      %v619 = vld [vmem:[%s277 + $0xa68] sm:$0xff]
      %v620 = vld [vmem:[%s277 + $0xa70] sm:$0xff]
      %v621 = vld [vmem:[%s277 + $0xa78] sm:$0xff]
      %v622 = vld [vmem:[%s277 + $0xa80] sm:$0xff]
      %v623 = vld [vmem:[%s277 + $0xa88] sm:$0xff]
      %v624 = vld [vmem:[%s277 + $0xa90] sm:$0xff]
      %v625 = vld [vmem:[%s277 + $0xa98] sm:$0xff]
      %v626 = vld [vmem:[%s277 + $0xaa0] sm:$0xff]
      %v627 = vld [vmem:[%s277 + $0xaa8] sm:$0xff]
      %v628 = vld [vmem:[%s277 + $0xab0] sm:$0xff]
      %v629 = vld [vmem:[%s277 + $0xab8] sm:$0xff]
      %v630 = vld [vmem:[%s277 + $0xac0] sm:$0xff]
      %v631 = vld [vmem:[%s277 + $0xac8] sm:$0xff]
      %v632 = vld [vmem:[%s277 + $0xad0] sm:$0xff]
      %v633 = vld [vmem:[%s277 + $0xad8] sm:$0xff]
      %v634 = vld [vmem:[%s277 + $0xae0] sm:$0xff]
      %v635 = vld [vmem:[%s277 + $0xae8] sm:$0xff]
      %v636 = vld [vmem:[%s277 + $0xaf0] sm:$0xff]
      %v637 = vld [vmem:[%s277 + $0xaf8] sm:$0xff]
      %v638 = vld [vmem:[%s277 + $0xb00] sm:$0xff]
      %v639 = vld [vmem:[%s277 + $0xb08] sm:$0xff]
      %v640 = vld [vmem:[%s277 + $0xb10] sm:$0xff]
      %v641 = vld [vmem:[%s277 + $0xb18] sm:$0xff]
      %v642 = vld [vmem:[%s277 + $0xb20] sm:$0xff]
      %v643 = vld [vmem:[%s277 + $0xb28] sm:$0xff]
      %v644 = vld [vmem:[%s277 + $0xb30] sm:$0xff]
      %v645 = vld [vmem:[%s277 + $0xb38] sm:$0xff]
      %v646 = vld [vmem:[%s277 + $0xb40] sm:$0xff]
      %v647 = vld [vmem:[%s277 + $0xb48] sm:$0xff]
      %v648 = vld [vmem:[%s277 + $0xb50] sm:$0xff]
      %v649 = vld [vmem:[%s277 + $0xb58] sm:$0xff]
      %v650 = vld [vmem:[%s277 + $0xb60] sm:$0xff]
      %v651 = vld [vmem:[%s277 + $0xb68] sm:$0xff]
      %v652 = vld [vmem:[%s277 + $0xb70] sm:$0xff]
      %v653 = vld [vmem:[%s277 + $0xb78] sm:$0xff]
      %v654 = vld [vmem:[%s277 + $0xb80] sm:$0xff]
      %v655 = vld [vmem:[%s277 + $0xb88] sm:$0xff]
      %v656 = vld [vmem:[%s277 + $0xb90] sm:$0xff]
      %v657 = vld [vmem:[%s277 + $0xb98] sm:$0xff]
      %v658 = vld [vmem:[%s277 + $0xba0] sm:$0xff]
      %v659 = vld [vmem:[%s277 + $0xba8] sm:$0xff]
      %v660 = vld [vmem:[%s277 + $0xbb0] sm:$0xff]
      %v661 = vld [vmem:[%s277 + $0xbb8] sm:$0xff]
      %v662 = vld [vmem:[%s277 + $0xbc0] sm:$0xff]
      %v663 = vld [vmem:[%s277 + $0xbc8] sm:$0xff]
      %v664 = vld [vmem:[%s277 + $0xbd0] sm:$0xff]
      %v665 = vld [vmem:[%s277 + $0xbd8] sm:$0xff]
      %v666 = vld [vmem:[%s277 + $0xbe0] sm:$0xff]
      %v667 = vld [vmem:[%s277 + $0xbe8] sm:$0xff]
      %v668 = vld [vmem:[%s277 + $0xbf0] sm:$0xff]
      %v669 = vld [vmem:[%s277 + $0xbf8] sm:$0xff]
      %v670 = vld [vmem:[%s277 + $0xc00] sm:$0xff]
      %v671 = vld [vmem:[%s277 + $0xc08] sm:$0xff]
      %v672 = vld [vmem:[%s277 + $0xc10] sm:$0xff]
      %v673 = vld [vmem:[%s277 + $0xc18] sm:$0xff]
      %v674 = vld [vmem:[%s277 + $0xc20] sm:$0xff]
      %v675 = vld [vmem:[%s277 + $0xc28] sm:$0xff]
      %v676 = vld [vmem:[%s277 + $0xc30] sm:$0xff]
      %v677 = vld [vmem:[%s277 + $0xc38] sm:$0xff]
      %v678 = vld [vmem:[%s277 + $0xc40] sm:$0xff]
      %v679 = vld [vmem:[%s277 + $0xc48] sm:$0xff]
      %v680 = vld [vmem:[%s277 + $0xc50] sm:$0xff]
      %v681 = vld [vmem:[%s277 + $0xc58] sm:$0xff]
      %v682 = vld [vmem:[%s277 + $0xc60] sm:$0xff]
      %v683 = vld [vmem:[%s277 + $0xc68] sm:$0xff]
      %v684 = vld [vmem:[%s277 + $0xc70] sm:$0xff]
      %v685 = vld [vmem:[%s277 + $0xc78] sm:$0xff]
      %v686 = vld [vmem:[%s277 + $0xc80] sm:$0xff]
      %v687 = vld [vmem:[%s277 + $0xc88] sm:$0xff]
      %v688 = vld [vmem:[%s277 + $0xc90] sm:$0xff]
      %v689 = vld [vmem:[%s277 + $0xc98] sm:$0xff]
      %v690 = vld [vmem:[%s277 + $0xca0] sm:$0xff]
      %v691 = vld [vmem:[%s277 + $0xca8] sm:$0xff]
      %v692 = vld [vmem:[%s277 + $0xcb0] sm:$0xff]
      %v693 = vld [vmem:[%s277 + $0xcb8] sm:$0xff]
      %v694 = vld [vmem:[%s277 + $0xcc0] sm:$0xff]
      %v695 = vld [vmem:[%s277 + $0xcc8] sm:$0xff]
      %v696 = vld [vmem:[%s277 + $0xcd0] sm:$0xff]
      %v697 = vld [vmem:[%s277 + $0xcd8] sm:$0xff]
      %v698 = vld [vmem:[%s277 + $0xce0] sm:$0xff]
      %v699 = vld [vmem:[%s277 + $0xce8] sm:$0xff]
      %v700 = vld [vmem:[%s277 + $0xcf0] sm:$0xff]
      %v701 = vld [vmem:[%s277 + $0xcf8] sm:$0xff]
      %v702 = vld [vmem:[%s277 + $0xd00] sm:$0xff]
      %v703 = vld [vmem:[%s277 + $0xd08] sm:$0xff]
      %v704 = vld [vmem:[%s277 + $0xd10] sm:$0xff]
      %v705 = vld [vmem:[%s277 + $0xd18] sm:$0xff]
      %v706 = vld [vmem:[%s277 + $0xd20] sm:$0xff]
      %v707 = vld [vmem:[%s277 + $0xd28] sm:$0xff]
      %v708 = vld [vmem:[%s277 + $0xd30] sm:$0xff]
      %v709 = vld [vmem:[%s277 + $0xd38] sm:$0xff]
      %v710 = vld [vmem:[%s277 + $0xd40] sm:$0xff]
      %v711 = vld [vmem:[%s277 + $0xd48] sm:$0xff]
      %v712 = vld [vmem:[%s277 + $0xd50] sm:$0xff]
      %v713 = vld [vmem:[%s277 + $0xd58] sm:$0xff]
      %v714 = vld [vmem:[%s277 + $0xd60] sm:$0xff]
      %v715 = vld [vmem:[%s277 + $0xd68] sm:$0xff]
      %v716 = vld [vmem:[%s277 + $0xd70] sm:$0xff]
      %v717 = vld [vmem:[%s277 + $0xd78] sm:$0xff]
      %v718 = vld [vmem:[%s277 + $0xd80] sm:$0xff]
      %v719 = vld [vmem:[%s277 + $0xd88] sm:$0xff]
      %v720 = vld [vmem:[%s277 + $0xd90] sm:$0xff]
      %v721 = vld [vmem:[%s277 + $0xd98] sm:$0xff]
      %v722 = vld [vmem:[%s277 + $0xda0] sm:$0xff]
      %v723 = vld [vmem:[%s277 + $0xda8] sm:$0xff]
      %v724 = vld [vmem:[%s277 + $0xdb0] sm:$0xff]
      %v725 = vld [vmem:[%s277 + $0xdb8] sm:$0xff]
      %v726 = vld [vmem:[%s277 + $0xdc0] sm:$0xff]
      %v727 = vld [vmem:[%s277 + $0xdc8] sm:$0xff]
      %v728 = vld [vmem:[%s277 + $0xdd0] sm:$0xff]
      %v729 = vld [vmem:[%s277 + $0xdd8] sm:$0xff]
      %v730 = vld [vmem:[%s277 + $0xde0] sm:$0xff]
      %v731 = vld [vmem:[%s277 + $0xde8] sm:$0xff]
      %v732 = vld [vmem:[%s277 + $0xdf0] sm:$0xff]
      %v733 = vld [vmem:[%s277 + $0xdf8] sm:$0xff]
      %v734 = vpack.c.bf16 %v293, %v286
      %v735 = vpack.c.bf16 %v294, %v287
      %v736 = vpack.c.bf16 %v295, %v288
      %v737 = vpack.c.bf16 %v296, %v289
      %v738 = vpack.c.bf16 %v297, %v290
      %v739 = vpack.c.bf16 %v298, %v291
      %v740 = vpack.c.bf16 %v299, %v292
      %v741 = vpack.c.bf16 %v307, %v300
      %v742 = vpack.c.bf16 %v308, %v301
      %v743 = vpack.c.bf16 %v309, %v302
      %v744 = vpack.c.bf16 %v310, %v303
      %v745 = vpack.c.bf16 %v311, %v304
      %v746 = vpack.c.bf16 %v312, %v305
      %v747 = vpack.c.bf16 %v313, %v306
      %v748 = vpack.c.bf16 %v321, %v314
      %v749 = vpack.c.bf16 %v322, %v315
      %v750 = vpack.c.bf16 %v323, %v316
      %v751 = vpack.c.bf16 %v324, %v317
      %v752 = vpack.c.bf16 %v325, %v318
      %v753 = vpack.c.bf16 %v326, %v319
      %v754 = vpack.c.bf16 %v327, %v320
      %v755 = vpack.c.bf16 %v335, %v328
      %v756 = vpack.c.bf16 %v336, %v329
      %v757 = vpack.c.bf16 %v337, %v330
      %v758 = vpack.c.bf16 %v338, %v331
      %v759 = vpack.c.bf16 %v339, %v332
      %v760 = vpack.c.bf16 %v340, %v333
      %v761 = vpack.c.bf16 %v341, %v334
      %v762 = vpack.c.bf16 %v349, %v342
      %v763 = vpack.c.bf16 %v350, %v343
      %v764 = vpack.c.bf16 %v351, %v344
      %v765 = vpack.c.bf16 %v352, %v345
      %v766 = vpack.c.bf16 %v353, %v346
      %v767 = vpack.c.bf16 %v354, %v347
      %v768 = vpack.c.bf16 %v355, %v348
      %v769 = vpack.c.bf16 %v363, %v356
      %v770 = vpack.c.bf16 %v364, %v357
      %v771 = vpack.c.bf16 %v365, %v358
      %v772 = vpack.c.bf16 %v366, %v359
      %v773 = vpack.c.bf16 %v367, %v360
      %v774 = vpack.c.bf16 %v368, %v361
      %v775 = vpack.c.bf16 %v369, %v362
      %v776 = vpack.c.bf16 %v377, %v370
      %v777 = vpack.c.bf16 %v378, %v371
      %v778 = vpack.c.bf16 %v379, %v372
      %v779 = vpack.c.bf16 %v380, %v373
      %v780 = vpack.c.bf16 %v381, %v374
      %v781 = vpack.c.bf16 %v382, %v375
      %v782 = vpack.c.bf16 %v383, %v376
      %v783 = vpack.c.bf16 %v391, %v384
      %v784 = vpack.c.bf16 %v392, %v385
      %v785 = vpack.c.bf16 %v393, %v386
      %v786 = vpack.c.bf16 %v394, %v387
      %v787 = vpack.c.bf16 %v395, %v388
      %v788 = vpack.c.bf16 %v396, %v389
      %v789 = vpack.c.bf16 %v397, %v390
      %v790 = vpack.c.bf16 %v405, %v398
      %v791 = vpack.c.bf16 %v406, %v399
      %v792 = vpack.c.bf16 %v407, %v400
      %v793 = vpack.c.bf16 %v408, %v401
      %v794 = vpack.c.bf16 %v409, %v402
      %v795 = vpack.c.bf16 %v410, %v403
      %v796 = vpack.c.bf16 %v411, %v404
      %v797 = vpack.c.bf16 %v419, %v412
      %v798 = vpack.c.bf16 %v420, %v413
      %v799 = vpack.c.bf16 %v421, %v414
      %v800 = vpack.c.bf16 %v422, %v415
      %v801 = vpack.c.bf16 %v423, %v416
      %v802 = vpack.c.bf16 %v424, %v417
      %v803 = vpack.c.bf16 %v425, %v418
      %v804 = vpack.c.bf16 %v433, %v426
      %v805 = vpack.c.bf16 %v434, %v427
      %v806 = vpack.c.bf16 %v435, %v428
      %v807 = vpack.c.bf16 %v436, %v429
      %v808 = vpack.c.bf16 %v437, %v430
      %v809 = vpack.c.bf16 %v438, %v431
      %v810 = vpack.c.bf16 %v439, %v432
      %v811 = vpack.c.bf16 %v447, %v440
      %v812 = vpack.c.bf16 %v448, %v441
      %v813 = vpack.c.bf16 %v449, %v442
      %v814 = vpack.c.bf16 %v450, %v443
      %v815 = vpack.c.bf16 %v451, %v444
      %v816 = vpack.c.bf16 %v452, %v445
      %v817 = vpack.c.bf16 %v453, %v446
      %v818 = vpack.c.bf16 %v461, %v454
      %v819 = vpack.c.bf16 %v462, %v455
      %v820 = vpack.c.bf16 %v463, %v456
      %v821 = vpack.c.bf16 %v464, %v457
      %v822 = vpack.c.bf16 %v465, %v458
      %v823 = vpack.c.bf16 %v466, %v459
      %v824 = vpack.c.bf16 %v467, %v460
      %v825 = vpack.c.bf16 %v475, %v468
      %v826 = vpack.c.bf16 %v476, %v469
      %v827 = vpack.c.bf16 %v477, %v470
      %v828 = vpack.c.bf16 %v478, %v471
      %v829 = vpack.c.bf16 %v479, %v472
      %v830 = vpack.c.bf16 %v480, %v473
      %v831 = vpack.c.bf16 %v481, %v474
      %v832 = vpack.c.bf16 %v489, %v482
      %v833 = vpack.c.bf16 %v490, %v483
      %v834 = vpack.c.bf16 %v491, %v484
      %v835 = vpack.c.bf16 %v492, %v485
      %v836 = vpack.c.bf16 %v493, %v486
      %v837 = vpack.c.bf16 %v494, %v487
      %v838 = vpack.c.bf16 %v495, %v488
      %v839 = vpack.c.bf16 %v503, %v496
      %v840 = vpack.c.bf16 %v504, %v497
      %v841 = vpack.c.bf16 %v505, %v498
      %v842 = vpack.c.bf16 %v506, %v499
      %v843 = vpack.c.bf16 %v507, %v500
      %v844 = vpack.c.bf16 %v508, %v501
      %v845 = vpack.c.bf16 %v509, %v502
      %v846 = vpack.c.bf16 %v517, %v510
      %v847 = vpack.c.bf16 %v518, %v511
      %v848 = vpack.c.bf16 %v519, %v512
      %v849 = vpack.c.bf16 %v520, %v513
      %v850 = vpack.c.bf16 %v521, %v514
      %v851 = vpack.c.bf16 %v522, %v515
      %v852 = vpack.c.bf16 %v523, %v516
      %v853 = vpack.c.bf16 %v531, %v524
      %v854 = vpack.c.bf16 %v532, %v525
      %v855 = vpack.c.bf16 %v533, %v526
      %v856 = vpack.c.bf16 %v534, %v527
      %v857 = vpack.c.bf16 %v535, %v528
      %v858 = vpack.c.bf16 %v536, %v529
      %v859 = vpack.c.bf16 %v537, %v530
      %v860 = vpack.c.bf16 %v545, %v538
      %v861 = vpack.c.bf16 %v546, %v539
      %v862 = vpack.c.bf16 %v547, %v540
      %v863 = vpack.c.bf16 %v548, %v541
      %v864 = vpack.c.bf16 %v549, %v542
      %v865 = vpack.c.bf16 %v550, %v543
      %v866 = vpack.c.bf16 %v551, %v544
      %v867 = vpack.c.bf16 %v559, %v552
      %v868 = vpack.c.bf16 %v560, %v553
      %v869 = vpack.c.bf16 %v561, %v554
      %v870 = vpack.c.bf16 %v562, %v555
      %v871 = vpack.c.bf16 %v563, %v556
      %v872 = vpack.c.bf16 %v564, %v557
      %v873 = vpack.c.bf16 %v565, %v558
      %v874 = vpack.c.bf16 %v573, %v566
      %v875 = vpack.c.bf16 %v574, %v567
      %v876 = vpack.c.bf16 %v575, %v568
      %v877 = vpack.c.bf16 %v576, %v569
      %v878 = vpack.c.bf16 %v577, %v570
      %v879 = vpack.c.bf16 %v578, %v571
      %v880 = vpack.c.bf16 %v579, %v572
      %v881 = vpack.c.bf16 %v587, %v580
      %v882 = vpack.c.bf16 %v588, %v581
      %v883 = vpack.c.bf16 %v589, %v582
      %v884 = vpack.c.bf16 %v590, %v583
      %v885 = vpack.c.bf16 %v591, %v584
      %v886 = vpack.c.bf16 %v592, %v585
      %v887 = vpack.c.bf16 %v593, %v586
      %v888 = vpack.c.bf16 %v601, %v594
      %v889 = vpack.c.bf16 %v602, %v595
      %v890 = vpack.c.bf16 %v603, %v596
      %v891 = vpack.c.bf16 %v604, %v597
      %v892 = vpack.c.bf16 %v605, %v598
      %v893 = vpack.c.bf16 %v606, %v599
      %v894 = vpack.c.bf16 %v607, %v600
      %v895 = vpack.c.bf16 %v615, %v608
      %v896 = vpack.c.bf16 %v616, %v609
      %v897 = vpack.c.bf16 %v617, %v610
      %v898 = vpack.c.bf16 %v618, %v611
      %v899 = vpack.c.bf16 %v619, %v612
      %v900 = vpack.c.bf16 %v620, %v613
      %v901 = vpack.c.bf16 %v621, %v614
      %v902 = vpack.c.bf16 %v629, %v622
      %v903 = vpack.c.bf16 %v630, %v623
      %v904 = vpack.c.bf16 %v631, %v624
      %v905 = vpack.c.bf16 %v632, %v625
      %v906 = vpack.c.bf16 %v633, %v626
      %v907 = vpack.c.bf16 %v634, %v627
      %v908 = vpack.c.bf16 %v635, %v628
      %v909 = vpack.c.bf16 %v643, %v636
      %v910 = vpack.c.bf16 %v644, %v637
      %v911 = vpack.c.bf16 %v645, %v638
      %v912 = vpack.c.bf16 %v646, %v639
      %v913 = vpack.c.bf16 %v647, %v640
      %v914 = vpack.c.bf16 %v648, %v641
      %v915 = vpack.c.bf16 %v649, %v642
      %v916 = vpack.c.bf16 %v657, %v650
      %v917 = vpack.c.bf16 %v658, %v651
      %v918 = vpack.c.bf16 %v659, %v652
      %v919 = vpack.c.bf16 %v660, %v653
      %v920 = vpack.c.bf16 %v661, %v654
      %v921 = vpack.c.bf16 %v662, %v655
      %v922 = vpack.c.bf16 %v663, %v656
      %v923 = vpack.c.bf16 %v671, %v664
      %v924 = vpack.c.bf16 %v672, %v665
      %v925 = vpack.c.bf16 %v673, %v666
      %v926 = vpack.c.bf16 %v674, %v667
      %v927 = vpack.c.bf16 %v675, %v668
      %v928 = vpack.c.bf16 %v676, %v669
      %v929 = vpack.c.bf16 %v677, %v670
      %v930 = vpack.c.bf16 %v685, %v678
      %v931 = vpack.c.bf16 %v686, %v679
      %v932 = vpack.c.bf16 %v687, %v680
      %v933 = vpack.c.bf16 %v688, %v681
      %v934 = vpack.c.bf16 %v689, %v682
      %v935 = vpack.c.bf16 %v690, %v683
      %v936 = vpack.c.bf16 %v691, %v684
      %v937 = vpack.c.bf16 %v699, %v692
      %v938 = vpack.c.bf16 %v700, %v693
      %v939 = vpack.c.bf16 %v701, %v694
      %v940 = vpack.c.bf16 %v702, %v695
      %v941 = vpack.c.bf16 %v703, %v696
      %v942 = vpack.c.bf16 %v704, %v697
      %v943 = vpack.c.bf16 %v705, %v698
      %v944 = vpack.c.bf16 %v713, %v706
      %v945 = vpack.c.bf16 %v714, %v707
      %v946 = vpack.c.bf16 %v715, %v708
      %v947 = vpack.c.bf16 %v716, %v709
      %v948 = vpack.c.bf16 %v717, %v710
      %v949 = vpack.c.bf16 %v718, %v711
      %v950 = vpack.c.bf16 %v719, %v712
      %v951 = vpack.c.bf16 %v727, %v720
      %v952 = vpack.c.bf16 %v728, %v721
      %v953 = vpack.c.bf16 %v729, %v722
      %v954 = vpack.c.bf16 %v730, %v723
      %v955 = vpack.c.bf16 %v731, %v724
      %v956 = vpack.c.bf16 %v732, %v725
      %v957 = vpack.c.bf16 %v733, %v726
      %v958 = vld [vmem:[%s1] sm:$0xff]
      %v959 = vld [vmem:[%s1 + $0x8] sm:$0xff]
      %v960 = vld [vmem:[%s1 + $0x10] sm:$0xff]
      %v961 = vld [vmem:[%s1 + $0x18] sm:$0xff]
      %v962 = vld [vmem:[%s1 + $0x20] sm:$0xff]
      %v963 = vld [vmem:[%s1 + $0x28] sm:$0xff]
      %v964 = vld [vmem:[%s1 + $0x30] sm:$0xff]
      %v965 = vld [vmem:[%s1 + $0x38] sm:$0xff]
      %v966 = vld [vmem:[%s1 + $0x40] sm:$0xff]
      %v967 = vld [vmem:[%s1 + $0x48] sm:$0xff]
      %v968 = vld [vmem:[%s1 + $0x50] sm:$0xff]
      %v969 = vld [vmem:[%s1 + $0x58] sm:$0xff]
      %v970 = vld [vmem:[%s1 + $0x60] sm:$0xff]
      %v971 = vld [vmem:[%s1 + $0x68] sm:$0xff]
      %v972 = vld [vmem:[%s1 + $0x70] sm:$0xff]
      %v973 = vld [vmem:[%s1 + $0x78] sm:$0xff]
      %v974 = vld [vmem:[%s1 + $0x80] sm:$0xff]
      %v975 = vld [vmem:[%s1 + $0x88] sm:$0xff]
      %v976 = vld [vmem:[%s1 + $0x90] sm:$0xff]
      %v977 = vld [vmem:[%s1 + $0x98] sm:$0xff]
      %v978 = vld [vmem:[%s1 + $0xa0] sm:$0xff]
      %v979 = vld [vmem:[%s1 + $0xa8] sm:$0xff]
      %v980 = vld [vmem:[%s1 + $0xb0] sm:$0xff]
      %v981 = vld [vmem:[%s1 + $0xb8] sm:$0xff]
      %v982 = vld [vmem:[%s1 + $0xc0] sm:$0xff]
      %v983 = vld [vmem:[%s1 + $0xc8] sm:$0xff]
      %v984 = vld [vmem:[%s1 + $0xd0] sm:$0xff]
      %v985 = vld [vmem:[%s1 + $0xd8] sm:$0xff]
      %v986 = vld [vmem:[%s1 + $0xe0] sm:$0xff]
      %v987 = vld [vmem:[%s1 + $0xe8] sm:$0xff]
      %v988 = vld [vmem:[%s1 + $0xf0] sm:$0xff]
      %v989 = vld [vmem:[%s1 + $0xf8] sm:$0xff]
      %v990 = vld [vmem:[%s1 + $0x100] sm:$0xff]
      %v991 = vld [vmem:[%s1 + $0x108] sm:$0xff]
      %v992 = vld [vmem:[%s1 + $0x110] sm:$0xff]
      %v993 = vld [vmem:[%s1 + $0x118] sm:$0xff]
      %v994 = vld [vmem:[%s1 + $0x120] sm:$0xff]
      %v995 = vld [vmem:[%s1 + $0x128] sm:$0xff]
      %v996 = vld [vmem:[%s1 + $0x130] sm:$0xff]
      %v997 = vld [vmem:[%s1 + $0x138] sm:$0xff]
      %v998 = vld [vmem:[%s1 + $0x140] sm:$0xff]
      %v999 = vld [vmem:[%s1 + $0x148] sm:$0xff]
      %v1000 = vld [vmem:[%s1 + $0x150] sm:$0xff]
      %v1001 = vld [vmem:[%s1 + $0x158] sm:$0xff]
      %v1002 = vld [vmem:[%s1 + $0x160] sm:$0xff]
      %v1003 = vld [vmem:[%s1 + $0x168] sm:$0xff]
      %v1004 = vld [vmem:[%s1 + $0x170] sm:$0xff]
      %v1005 = vld [vmem:[%s1 + $0x178] sm:$0xff]
      %v1006 = vld [vmem:[%s1 + $0x180] sm:$0xff]
      %v1007 = vld [vmem:[%s1 + $0x188] sm:$0xff]
      %v1008 = vld [vmem:[%s1 + $0x190] sm:$0xff]
      %v1009 = vld [vmem:[%s1 + $0x198] sm:$0xff]
      %v1010 = vld [vmem:[%s1 + $0x1a0] sm:$0xff]
      %v1011 = vld [vmem:[%s1 + $0x1a8] sm:$0xff]
      %v1012 = vld [vmem:[%s1 + $0x1b0] sm:$0xff]
      %v1013 = vld [vmem:[%s1 + $0x1b8] sm:$0xff]
      %v1014 = vld [vmem:[%s1 + $0x1c0] sm:$0xff]
      %v1015 = vld [vmem:[%s1 + $0x1c8] sm:$0xff]
      %v1016 = vld [vmem:[%s1 + $0x1d0] sm:$0xff]
      %v1017 = vld [vmem:[%s1 + $0x1d8] sm:$0xff]
      %v1018 = vld [vmem:[%s1 + $0x1e0] sm:$0xff]
      %v1019 = vld [vmem:[%s1 + $0x1e8] sm:$0xff]
      %v1020 = vld [vmem:[%s1 + $0x1f0] sm:$0xff]
      %v1021 = vld [vmem:[%s1 + $0x1f8] sm:$0xff]
      %v1022 = vld [vmem:[%s1 + $0x200] sm:$0xff]
      %v1023 = vld [vmem:[%s1 + $0x208] sm:$0xff]
      %v1024 = vld [vmem:[%s1 + $0x210] sm:$0xff]
      %v1025 = vld [vmem:[%s1 + $0x218] sm:$0xff]
      %v1026 = vld [vmem:[%s1 + $0x220] sm:$0xff]
      %v1027 = vld [vmem:[%s1 + $0x228] sm:$0xff]
      %v1028 = vld [vmem:[%s1 + $0x230] sm:$0xff]
      %v1029 = vld [vmem:[%s1 + $0x238] sm:$0xff]
      %v1030 = vld [vmem:[%s1 + $0x240] sm:$0xff]
      %v1031 = vld [vmem:[%s1 + $0x248] sm:$0xff]
      %v1032 = vld [vmem:[%s1 + $0x250] sm:$0xff]
      %v1033 = vld [vmem:[%s1 + $0x258] sm:$0xff]
      %v1034 = vld [vmem:[%s1 + $0x260] sm:$0xff]
      %v1035 = vld [vmem:[%s1 + $0x268] sm:$0xff]
      %v1036 = vld [vmem:[%s1 + $0x270] sm:$0xff]
      %v1037 = vld [vmem:[%s1 + $0x278] sm:$0xff]
      %v1038 = vld [vmem:[%s1 + $0x280] sm:$0xff]
      %v1039 = vld [vmem:[%s1 + $0x288] sm:$0xff]
      %v1040 = vld [vmem:[%s1 + $0x290] sm:$0xff]
      %v1041 = vld [vmem:[%s1 + $0x298] sm:$0xff]
      %v1042 = vld [vmem:[%s1 + $0x2a0] sm:$0xff]
      %v1043 = vld [vmem:[%s1 + $0x2a8] sm:$0xff]
      %v1044 = vld [vmem:[%s1 + $0x2b0] sm:$0xff]
      %v1045 = vld [vmem:[%s1 + $0x2b8] sm:$0xff]
      %v1046 = vld [vmem:[%s1 + $0x2c0] sm:$0xff]
      %v1047 = vld [vmem:[%s1 + $0x2c8] sm:$0xff]
      %v1048 = vld [vmem:[%s1 + $0x2d0] sm:$0xff]
      %v1049 = vld [vmem:[%s1 + $0x2d8] sm:$0xff]
      %v1050 = vld [vmem:[%s1 + $0x2e0] sm:$0xff]
      %v1051 = vld [vmem:[%s1 + $0x2e8] sm:$0xff]
      %v1052 = vld [vmem:[%s1 + $0x2f0] sm:$0xff]
      %v1053 = vld [vmem:[%s1 + $0x2f8] sm:$0xff]
      %v1054 = vld [vmem:[%s1 + $0x300] sm:$0xff]
      %v1055 = vld [vmem:[%s1 + $0x308] sm:$0xff]
      %v1056 = vld [vmem:[%s2] sm:$0x3]
      %v1058 = vlaneseq
      %v1059 = vshrl.u32 %v1058, 7
      %v1060 = vsub.s32 0, %v1059
      %v1061 = vrot.slane %v1056, %v1060
      %v1062 = vlaneseq
      %v1063 = vshrl.u32 %v1062, 7
      %v1064 = vsub.s32 1, %v1063
      %v1065 = vrot.slane %v1056, %v1064
      %v1166 = vunpack.c.l.b16 %v958
      %v1167 = vunpack.c.h.b16 %v958
      %v1168 = vunpack.c.l.b16 %v959
      %v1169 = vunpack.c.h.b16 %v959
      %v1170 = vunpack.c.l.b16 %v960
      %v1171 = vunpack.c.h.b16 %v960
      %v1172 = vunpack.c.l.b16 %v961
      %v1173 = vunpack.c.h.b16 %v961
      %v1174 = vunpack.c.l.b16 %v962
      %v1175 = vunpack.c.h.b16 %v962
      %v1176 = vunpack.c.l.b16 %v963
      %v1177 = vunpack.c.h.b16 %v963
      %v1178 = vunpack.c.l.b16 %v964
      %v1179 = vunpack.c.h.b16 %v964
      %v1180 = vunpack.c.l.b16 %v965
      %v1181 = vunpack.c.h.b16 %v965
      %v1182 = vunpack.c.l.b16 %v966
      %v1183 = vunpack.c.h.b16 %v966
      %v1184 = vunpack.c.l.b16 %v967
      %v1185 = vunpack.c.h.b16 %v967
      %v1186 = vunpack.c.l.b16 %v968
      %v1187 = vunpack.c.h.b16 %v968
      %v1188 = vunpack.c.l.b16 %v969
      %v1189 = vunpack.c.h.b16 %v969
      %v1190 = vunpack.c.l.b16 %v970
      %v1191 = vunpack.c.h.b16 %v970
      %v1192 = vunpack.c.l.b16 %v971
      %v1193 = vunpack.c.h.b16 %v971
      %v1194 = vunpack.c.l.b16 %v972
      %v1195 = vunpack.c.h.b16 %v972
      %v1196 = vunpack.c.l.b16 %v973
      %v1197 = vunpack.c.h.b16 %v973
      %v1198 = vunpack.c.l.b16 %v974
      %v1199 = vunpack.c.h.b16 %v974
      %v1200 = vunpack.c.l.b16 %v975
      %v1201 = vunpack.c.h.b16 %v975
      %v1202 = vunpack.c.l.b16 %v976
      %v1203 = vunpack.c.h.b16 %v976
      %v1204 = vunpack.c.l.b16 %v977
      %v1205 = vunpack.c.h.b16 %v977
      %v1206 = vunpack.c.l.b16 %v978
      %v1207 = vunpack.c.h.b16 %v978
      %v1208 = vunpack.c.l.b16 %v979
      %v1209 = vunpack.c.h.b16 %v979
      %v1210 = vunpack.c.l.b16 %v980
      %v1211 = vunpack.c.h.b16 %v980
      %v1212 = vunpack.c.l.b16 %v981
      %v1213 = vunpack.c.h.b16 %v981
      %v1214 = vunpack.c.l.b16 %v982
      %v1215 = vunpack.c.h.b16 %v982
      %v1216 = vunpack.c.l.b16 %v983
      %v1217 = vunpack.c.h.b16 %v983
      %v1218 = vunpack.c.l.b16 %v984
      %v1219 = vunpack.c.h.b16 %v984
      %v1220 = vunpack.c.l.b16 %v985
      %v1221 = vunpack.c.h.b16 %v985
      %v1222 = vunpack.c.l.b16 %v986
      %v1223 = vunpack.c.h.b16 %v986
      %v1224 = vunpack.c.l.b16 %v987
      %v1225 = vunpack.c.h.b16 %v987
      %v1226 = vunpack.c.l.b16 %v988
      %v1227 = vunpack.c.h.b16 %v988
      %v1228 = vunpack.c.l.b16 %v989
      %v1229 = vunpack.c.h.b16 %v989
      %v1230 = vunpack.c.l.b16 %v990
      %v1231 = vunpack.c.h.b16 %v990
      %v1232 = vunpack.c.l.b16 %v991
      %v1233 = vunpack.c.h.b16 %v991
      %v1234 = vunpack.c.l.b16 %v992
      %v1235 = vunpack.c.h.b16 %v992
      %v1236 = vunpack.c.l.b16 %v993
      %v1237 = vunpack.c.h.b16 %v993
      %v1238 = vunpack.c.l.b16 %v994
      %v1239 = vunpack.c.h.b16 %v994
      %v1240 = vunpack.c.l.b16 %v995
      %v1241 = vunpack.c.h.b16 %v995
      %v1242 = vunpack.c.l.b16 %v996
      %v1243 = vunpack.c.h.b16 %v996
      %v1244 = vunpack.c.l.b16 %v997
      %v1245 = vunpack.c.h.b16 %v997
      %v1246 = vunpack.c.l.b16 %v998
      %v1247 = vunpack.c.h.b16 %v998
      %v1248 = vunpack.c.l.b16 %v999
      %v1249 = vunpack.c.h.b16 %v999
      %v1250 = vunpack.c.l.b16 %v1000
      %v1251 = vunpack.c.h.b16 %v1000
      %v1252 = vunpack.c.l.b16 %v1001
      %v1253 = vunpack.c.h.b16 %v1001
      %v1254 = vunpack.c.l.b16 %v1002
      %v1255 = vunpack.c.h.b16 %v1002
      %v1256 = vunpack.c.l.b16 %v1003
      %v1257 = vunpack.c.h.b16 %v1003
      %v1258 = vunpack.c.l.b16 %v1004
      %v1259 = vunpack.c.h.b16 %v1004
      %v1260 = vunpack.c.l.b16 %v1005
      %v1261 = vunpack.c.h.b16 %v1005
      %v1262 = vunpack.c.l.b16 %v1006
      %v1263 = vunpack.c.h.b16 %v1006
      %v1264 = vunpack.c.l.b16 %v1007
      %v1265 = vunpack.c.h.b16 %v1007
      %v1266 = vunpack.c.l.b16 %v1008
      %v1267 = vunpack.c.h.b16 %v1008
      %v1268 = vunpack.c.l.b16 %v1009
      %v1269 = vunpack.c.h.b16 %v1009
      %v1270 = vunpack.c.l.b16 %v1010
      %v1271 = vunpack.c.h.b16 %v1010
      %v1272 = vunpack.c.l.b16 %v1011
      %v1273 = vunpack.c.h.b16 %v1011
      %v1274 = vunpack.c.l.b16 %v1012
      %v1275 = vunpack.c.h.b16 %v1012
      %v1276 = vunpack.c.l.b16 %v1013
      %v1277 = vunpack.c.h.b16 %v1013
      %v1278 = vunpack.c.l.b16 %v1014
      %v1279 = vunpack.c.h.b16 %v1014
      %v1280 = vunpack.c.l.b16 %v1015
      %v1281 = vunpack.c.h.b16 %v1015
      %v1282 = vunpack.c.l.b16 %v1016
      %v1283 = vunpack.c.h.b16 %v1016
      %v1284 = vunpack.c.l.b16 %v1017
      %v1285 = vunpack.c.h.b16 %v1017
      %v1286 = vunpack.c.l.b16 %v1018
      %v1287 = vunpack.c.h.b16 %v1018
      %v1288 = vunpack.c.l.b16 %v1019
      %v1289 = vunpack.c.h.b16 %v1019
      %v1290 = vunpack.c.l.b16 %v1020
      %v1291 = vunpack.c.h.b16 %v1020
      %v1292 = vunpack.c.l.b16 %v1021
      %v1293 = vunpack.c.h.b16 %v1021
      %v1294 = vunpack.c.l.b16 %v1022
      %v1295 = vunpack.c.h.b16 %v1022
      %v1296 = vunpack.c.l.b16 %v1023
      %v1297 = vunpack.c.h.b16 %v1023
      %v1298 = vunpack.c.l.b16 %v1024
      %v1299 = vunpack.c.h.b16 %v1024
      %v1300 = vunpack.c.l.b16 %v1025
      %v1301 = vunpack.c.h.b16 %v1025
      %v1302 = vunpack.c.l.b16 %v1026
      %v1303 = vunpack.c.h.b16 %v1026
      %v1304 = vunpack.c.l.b16 %v1027
      %v1305 = vunpack.c.h.b16 %v1027
      %v1306 = vunpack.c.l.b16 %v1028
      %v1307 = vunpack.c.h.b16 %v1028
      %v1308 = vunpack.c.l.b16 %v1029
      %v1309 = vunpack.c.h.b16 %v1029
      %v1310 = vunpack.c.l.b16 %v1030
      %v1311 = vunpack.c.h.b16 %v1030
      %v1312 = vunpack.c.l.b16 %v1031
      %v1313 = vunpack.c.h.b16 %v1031
      %v1314 = vunpack.c.l.b16 %v1032
      %v1315 = vunpack.c.h.b16 %v1032
      %v1316 = vunpack.c.l.b16 %v1033
      %v1317 = vunpack.c.h.b16 %v1033
      %v1318 = vunpack.c.l.b16 %v1034
      %v1319 = vunpack.c.h.b16 %v1034
      %v1320 = vunpack.c.l.b16 %v1035
      %v1321 = vunpack.c.h.b16 %v1035
      %v1322 = vunpack.c.l.b16 %v1036
      %v1323 = vunpack.c.h.b16 %v1036
      %v1324 = vunpack.c.l.b16 %v1037
      %v1325 = vunpack.c.h.b16 %v1037
      %v1326 = vunpack.c.l.b16 %v1038
      %v1327 = vunpack.c.h.b16 %v1038
      %v1328 = vunpack.c.l.b16 %v1039
      %v1329 = vunpack.c.h.b16 %v1039
      %v1330 = vunpack.c.l.b16 %v1040
      %v1331 = vunpack.c.h.b16 %v1040
      %v1332 = vunpack.c.l.b16 %v1041
      %v1333 = vunpack.c.h.b16 %v1041
      %v1334 = vunpack.c.l.b16 %v1042
      %v1335 = vunpack.c.h.b16 %v1042
      %v1336 = vunpack.c.l.b16 %v1043
      %v1337 = vunpack.c.h.b16 %v1043
      %v1338 = vunpack.c.l.b16 %v1044
      %v1339 = vunpack.c.h.b16 %v1044
      %v1340 = vunpack.c.l.b16 %v1045
      %v1341 = vunpack.c.h.b16 %v1045
      %v1342 = vunpack.c.l.b16 %v1046
      %v1343 = vunpack.c.h.b16 %v1046
      %v1344 = vunpack.c.l.b16 %v1047
      %v1345 = vunpack.c.h.b16 %v1047
      %v1346 = vunpack.c.l.b16 %v1048
      %v1347 = vunpack.c.h.b16 %v1048
      %v1348 = vunpack.c.l.b16 %v1049
      %v1349 = vunpack.c.h.b16 %v1049
      %v1350 = vunpack.c.l.b16 %v1050
      %v1351 = vunpack.c.h.b16 %v1050
      %v1352 = vunpack.c.l.b16 %v1051
      %v1353 = vunpack.c.h.b16 %v1051
      %v1354 = vunpack.c.l.b16 %v1052
      %v1355 = vunpack.c.h.b16 %v1052
      %v1356 = vunpack.c.l.b16 %v1053
      %v1357 = vunpack.c.h.b16 %v1053
      %v1358 = vunpack.c.l.b16 %v1054
      %v1359 = vunpack.c.h.b16 %v1054
      %v1360 = vunpack.c.l.b16 %v1055
      %v1361 = vunpack.c.h.b16 %v1055
      %v1362 = vpack.c.b16 %v1168, %v1166
      %v1363 = vpack.c.b16 %v1169, %v1167
      %v1364 = vpack.c.b16 %v1172, %v1170
      %v1365 = vpack.c.b16 %v1173, %v1171
      %v1366 = vpack.c.b16 %v1176, %v1174
      %v1367 = vpack.c.b16 %v1177, %v1175
      %v1368 = vpack.c.b16 %v1180, %v1178
      %v1369 = vpack.c.b16 %v1181, %v1179
      %v1370 = vpack.c.b16 %v1184, %v1182
      %v1371 = vpack.c.b16 %v1185, %v1183
      %v1372 = vpack.c.b16 %v1188, %v1186
      %v1373 = vpack.c.b16 %v1189, %v1187
      %v1374 = vpack.c.b16 %v1192, %v1190
      %v1375 = vpack.c.b16 %v1193, %v1191
      %v1376 = vpack.c.b16 %v1196, %v1194
      %v1377 = vpack.c.b16 %v1197, %v1195
      %v1378 = vpack.c.b16 %v1200, %v1198
      %v1379 = vpack.c.b16 %v1201, %v1199
      %v1380 = vpack.c.b16 %v1204, %v1202
      %v1381 = vpack.c.b16 %v1205, %v1203
      %v1382 = vpack.c.b16 %v1208, %v1206
      %v1383 = vpack.c.b16 %v1209, %v1207
      %v1384 = vpack.c.b16 %v1212, %v1210
      %v1385 = vpack.c.b16 %v1213, %v1211
      %v1386 = vpack.c.b16 %v1216, %v1214
      %v1387 = vpack.c.b16 %v1217, %v1215
      %v1388 = vpack.c.b16 %v1220, %v1218
      %v1389 = vpack.c.b16 %v1221, %v1219
      %v1390 = vpack.c.b16 %v1224, %v1222
      %v1391 = vpack.c.b16 %v1225, %v1223
      %v1392 = vpack.c.b16 %v1228, %v1226
      %v1393 = vpack.c.b16 %v1229, %v1227
      %v1394 = vpack.c.b16 %v1232, %v1230
      %v1395 = vpack.c.b16 %v1233, %v1231
      %v1396 = vpack.c.b16 %v1236, %v1234
      %v1397 = vpack.c.b16 %v1237, %v1235
      %v1398 = vpack.c.b16 %v1240, %v1238
      %v1399 = vpack.c.b16 %v1241, %v1239
      %v1400 = vpack.c.b16 %v1244, %v1242
      %v1401 = vpack.c.b16 %v1245, %v1243
      %v1402 = vpack.c.b16 %v1248, %v1246
      %v1403 = vpack.c.b16 %v1249, %v1247
      %v1404 = vpack.c.b16 %v1252, %v1250
      %v1405 = vpack.c.b16 %v1253, %v1251
      %v1406 = vpack.c.b16 %v1256, %v1254
      %v1407 = vpack.c.b16 %v1257, %v1255
      %v1408 = vpack.c.b16 %v1260, %v1258
      %v1409 = vpack.c.b16 %v1261, %v1259
      %v1410 = vpack.c.b16 %v1264, %v1262
      %v1411 = vpack.c.b16 %v1265, %v1263
      %v1412 = vpack.c.b16 %v1268, %v1266
      %v1413 = vpack.c.b16 %v1269, %v1267
      %v1414 = vpack.c.b16 %v1272, %v1270
      %v1415 = vpack.c.b16 %v1273, %v1271
      %v1416 = vpack.c.b16 %v1276, %v1274
      %v1417 = vpack.c.b16 %v1277, %v1275
      %v1418 = vpack.c.b16 %v1280, %v1278
      %v1419 = vpack.c.b16 %v1281, %v1279
      %v1420 = vpack.c.b16 %v1284, %v1282
      %v1421 = vpack.c.b16 %v1285, %v1283
      %v1422 = vpack.c.b16 %v1288, %v1286
      %v1423 = vpack.c.b16 %v1289, %v1287
      %v1424 = vpack.c.b16 %v1292, %v1290
      %v1425 = vpack.c.b16 %v1293, %v1291
      %v1426 = vpack.c.b16 %v1296, %v1294
      %v1427 = vpack.c.b16 %v1297, %v1295
      %v1428 = vpack.c.b16 %v1300, %v1298
      %v1429 = vpack.c.b16 %v1301, %v1299
      %v1430 = vpack.c.b16 %v1304, %v1302
      %v1431 = vpack.c.b16 %v1305, %v1303
      %v1432 = vpack.c.b16 %v1308, %v1306
      %v1433 = vpack.c.b16 %v1309, %v1307
      %v1434 = vpack.c.b16 %v1312, %v1310
      %v1435 = vpack.c.b16 %v1313, %v1311
      %v1436 = vpack.c.b16 %v1316, %v1314
      %v1437 = vpack.c.b16 %v1317, %v1315
      %v1438 = vpack.c.b16 %v1320, %v1318
      %v1439 = vpack.c.b16 %v1321, %v1319
      %v1440 = vpack.c.b16 %v1324, %v1322
      %v1441 = vpack.c.b16 %v1325, %v1323
      %v1442 = vpack.c.b16 %v1328, %v1326
      %v1443 = vpack.c.b16 %v1329, %v1327
      %v1444 = vpack.c.b16 %v1332, %v1330
      %v1445 = vpack.c.b16 %v1333, %v1331
      %v1446 = vpack.c.b16 %v1336, %v1334
      %v1447 = vpack.c.b16 %v1337, %v1335
      %v1448 = vpack.c.b16 %v1340, %v1338
      %v1449 = vpack.c.b16 %v1341, %v1339
      %v1450 = vpack.c.b16 %v1344, %v1342
      %v1451 = vpack.c.b16 %v1345, %v1343
      %v1452 = vpack.c.b16 %v1348, %v1346
      %v1453 = vpack.c.b16 %v1349, %v1347
      %v1454 = vpack.c.b16 %v1352, %v1350
      %v1455 = vpack.c.b16 %v1353, %v1351
      %v1456 = vpack.c.b16 %v1356, %v1354
      %v1457 = vpack.c.b16 %v1357, %v1355
      %v1458 = vpack.c.b16 %v1360, %v1358
      %v1459 = vpack.c.b16 %v1361, %v1359
      %vm1558 = vcmask 130048
      %v1560 = vsel %vm1558, %v740, 0
      %v1563 = vsel %vm1558, %v747, 0
      %v1566 = vsel %vm1558, %v754, 0
      %v1569 = vsel %vm1558, %v761, 0
      %v1572 = vsel %vm1558, %v768, 0
      %v1575 = vsel %vm1558, %v775, 0
      %v1578 = vsel %vm1558, %v782, 0
      %v1581 = vsel %vm1558, %v789, 0
      %v1584 = vsel %vm1558, %v796, 0
      %v1587 = vsel %vm1558, %v803, 0
      %v1590 = vsel %vm1558, %v810, 0
      %v1593 = vsel %vm1558, %v817, 0
      %v1596 = vsel %vm1558, %v824, 0
      %v1599 = vsel %vm1558, %v831, 0
      %v1602 = vsel %vm1558, %v838, 0
      %v1605 = vsel %vm1558, %v845, 0
      %v1608 = vsel %vm1558, %v852, 0
      %v1611 = vsel %vm1558, %v859, 0
      %v1614 = vsel %vm1558, %v866, 0
      %v1617 = vsel %vm1558, %v873, 0
      %v1620 = vsel %vm1558, %v880, 0
      %v1623 = vsel %vm1558, %v887, 0
      %v1626 = vsel %vm1558, %v894, 0
      %v1629 = vsel %vm1558, %v901, 0
      %v1632 = vsel %vm1558, %v908, 0
      %v1635 = vsel %vm1558, %v915, 0
      %v1638 = vsel %vm1558, %v922, 0
      %v1641 = vsel %vm1558, %v929, 0
      %v1644 = vsel %vm1558, %v936, 0
      %v1647 = vsel %vm1558, %v943, 0
      %v1650 = vsel %vm1558, %v950, 0
      %v1653 = vsel %vm1558, %v957, 0
      %1655 = vmatprep.subr.bf16.mxu0 %v1363
      %1656 = vmatpush1.bf16.msra.mxu0 %v1362
      %1657 = vmatprep.subr.bf16.mxu0 %v1365
      %1658 = vmatpush1.bf16.msra.mxu0 %v1364
      %1659 = vmatprep.subr.bf16.mxu0 %v1367
      %1660 = vmatpush1.bf16.msra.mxu0 %v1366
      %1661 = vmatprep.subr.bf16.mxu0 %v1369
      %1662 = vmatpush1.bf16.msra.mxu0 %v1368
      %1663 = vmatprep.subr.bf16.mxu0 %v1371
      %1664 = vmatpush1.bf16.msra.mxu0 %v1370
      %1665 = vmatprep.subr.bf16.mxu0 %v1373
      %1666 = vmatpush1.bf16.msra.mxu0 %v1372
      %1667 = vmatprep.subr.bf16.mxu0 %v1375
      %1668 = vmatpush1.bf16.msra.mxu0 %v1374
      %1669 = vmatprep.subr.bf16.mxu0 %v1377
      %1670 = vmatpush1.bf16.msra.mxu0 %v1376
      %1671 = vmatprep.subr.bf16.mxu0 %v1379
      %1672 = vmatpush1.bf16.msra.mxu0 %v1378
      %1673 = vmatprep.subr.bf16.mxu0 %v1381
      %1674 = vmatpush1.bf16.msra.mxu0 %v1380
      %1675 = vmatprep.subr.bf16.mxu0 %v1383
      %1676 = vmatpush1.bf16.msra.mxu0 %v1382
      %1677 = vmatprep.subr.bf16.mxu0 %v1385
      %1678 = vmatpush1.bf16.msra.mxu0 %v1384
      %1679 = vmatprep.subr.bf16.mxu0 %v1387
      %1680 = vmatpush1.bf16.msra.mxu0 %v1386
      %1681 = vmatprep.subr.bf16.mxu0 %v1389
      %1682 = vmatpush1.bf16.msra.mxu0 %v1388
      %1683 = vmatprep.subr.bf16.mxu0 %v1391
      %1684 = vmatpush1.bf16.msra.mxu0 %v1390
      %1685 = vmatprep.subr.bf16.mxu0 %v1393
      %1686 = vmatpush1.bf16.msra.mxu0 %v1392
      %1687 = vmatprep.mubr.bf16.mxu0 %v735
      %1688 = vmatmul.mubr.bf16.gmra.mrb[0].mxu0 %v734
      %v1689 = vpop.f32.mrb[0].mxu0
      %v1690 = vadd.f32 %v1061, %v1689
      %v1691 = vpop.f32.mrb[0].mxu0
      %v1692 = vadd.f32 %v1065, %v1691
      %v1693 = vpop.f32.mrb[0].mxu0
      %v1694 = vadd.f32 %v1061, %v1693
      %v1695 = vpop.f32.mrb[0].mxu0
      %v1696 = vadd.f32 %v1065, %v1695
      %1697 = vmatprep.mubr.bf16.mxu0 %v742
      %1698 = vmatmul.mubr.bf16.gmra.mrb[0].mxu0 %v741
      %v1699 = vpop.f32.mrb[0].mxu0
      %v1700 = vadd.f32 %v1061, %v1699
      %v1701 = vpop.f32.mrb[0].mxu0
      %v1702 = vadd.f32 %v1065, %v1701
      %v1703 = vpop.f32.mrb[0].mxu0
      %v1704 = vadd.f32 %v1061, %v1703
      %v1705 = vpop.f32.mrb[0].mxu0
      %v1706 = vadd.f32 %v1065, %v1705
      %1707 = vmatprep.mubr.bf16.mxu0 %v749
      %1708 = vmatmul.mubr.bf16.gmra.mrb[0].mxu0 %v748
      %v1709 = vpop.f32.mrb[0].mxu0
      %v1710 = vadd.f32 %v1061, %v1709
      %v1711 = vpop.f32.mrb[0].mxu0
      %v1712 = vadd.f32 %v1065, %v1711
      %v1713 = vpop.f32.mrb[0].mxu0
      %v1714 = vadd.f32 %v1061, %v1713
      %v1715 = vpop.f32.mrb[0].mxu0
      %v1716 = vadd.f32 %v1065, %v1715
      %1717 = vmatprep.mubr.bf16.mxu0 %v756
      %1718 = vmatmul.mubr.bf16.gmra.mrb[0].mxu0 %v755
      %v1719 = vpop.f32.mrb[0].mxu0
      %v1720 = vadd.f32 %v1061, %v1719
      %v1721 = vpop.f32.mrb[0].mxu0
      %v1722 = vadd.f32 %v1065, %v1721
      %v1723 = vpop.f32.mrb[0].mxu0
      %v1724 = vadd.f32 %v1061, %v1723
      %v1725 = vpop.f32.mrb[0].mxu0
      %v1726 = vadd.f32 %v1065, %v1725
      %1727 = vmatprep.mubr.bf16.mxu0 %v763
      %1728 = vmatmul.mubr.bf16.gmra.mrb[0].mxu0 %v762
      %v1729 = vpop.f32.mrb[0].mxu0
      %v1730 = vadd.f32 %v1061, %v1729
      %v1731 = vpop.f32.mrb[0].mxu0
      %v1732 = vadd.f32 %v1065, %v1731
      %v1733 = vpop.f32.mrb[0].mxu0
      %v1734 = vadd.f32 %v1061, %v1733
      %v1735 = vpop.f32.mrb[0].mxu0
      %v1736 = vadd.f32 %v1065, %v1735
      %1737 = vmatprep.mubr.bf16.mxu0 %v770
      %1738 = vmatmul.mubr.bf16.gmra.mrb[0].mxu0 %v769
      %v1739 = vpop.f32.mrb[0].mxu0
      %v1740 = vadd.f32 %v1061, %v1739
      %v1741 = vpop.f32.mrb[0].mxu0
      %v1742 = vadd.f32 %v1065, %v1741
      %v1743 = vpop.f32.mrb[0].mxu0
      %v1744 = vadd.f32 %v1061, %v1743
      %v1745 = vpop.f32.mrb[0].mxu0
      %v1746 = vadd.f32 %v1065, %v1745
      %1747 = vmatprep.mubr.bf16.mxu0 %v777
      %1748 = vmatmul.mubr.bf16.gmra.mrb[0].mxu0 %v776
      %v1749 = vpop.f32.mrb[0].mxu0
      %v1750 = vadd.f32 %v1061, %v1749
      %v1751 = vpop.f32.mrb[0].mxu0
      %v1752 = vadd.f32 %v1065, %v1751
      %v1753 = vpop.f32.mrb[0].mxu0
      %v1754 = vadd.f32 %v1061, %v1753
      %v1755 = vpop.f32.mrb[0].mxu0
      %v1756 = vadd.f32 %v1065, %v1755
      %1757 = vmatprep.mubr.bf16.mxu0 %v784
      %1758 = vmatmul.mubr.bf16.gmra.mrb[0].mxu0 %v783
      %v1759 = vpop.f32.mrb[0].mxu0
      %v1760 = vadd.f32 %v1061, %v1759
      %v1761 = vpop.f32.mrb[0].mxu0
      %v1762 = vadd.f32 %v1065, %v1761
      %v1763 = vpop.f32.mrb[0].mxu0
      %v1764 = vadd.f32 %v1061, %v1763
      %v1765 = vpop.f32.mrb[0].mxu0
      %v1766 = vadd.f32 %v1065, %v1765
      %1767 = vmatprep.mubr.bf16.mxu0 %v791
      %1768 = vmatmul.mubr.bf16.gmra.mrb[0].mxu0 %v790
      %v1769 = vpop.f32.mrb[0].mxu0
      %v1770 = vadd.f32 %v1061, %v1769
      %v1771 = vpop.f32.mrb[0].mxu0
      %v1772 = vadd.f32 %v1065, %v1771
      %v1773 = vpop.f32.mrb[0].mxu0
      %v1774 = vadd.f32 %v1061, %v1773
      %v1775 = vpop.f32.mrb[0].mxu0
      %v1776 = vadd.f32 %v1065, %v1775
      %1777 = vmatprep.mubr.bf16.mxu0 %v798
      %1778 = vmatmul.mubr.bf16.gmra.mrb[0].mxu0 %v797
      %v1779 = vpop.f32.mrb[0].mxu0
      %v1780 = vadd.f32 %v1061, %v1779
      %v1781 = vpop.f32.mrb[0].mxu0
      %v1782 = vadd.f32 %v1065, %v1781
      %v1783 = vpop.f32.mrb[0].mxu0
      %v1784 = vadd.f32 %v1061, %v1783
      %v1785 = vpop.f32.mrb[0].mxu0
      %v1786 = vadd.f32 %v1065, %v1785
      %1787 = vmatprep.mubr.bf16.mxu0 %v805
      %1788 = vmatmul.mubr.bf16.gmra.mrb[0].mxu0 %v804
      %v1789 = vpop.f32.mrb[0].mxu0
      %v1790 = vadd.f32 %v1061, %v1789
      %v1791 = vpop.f32.mrb[0].mxu0
      %v1792 = vadd.f32 %v1065, %v1791
      %v1793 = vpop.f32.mrb[0].mxu0
      %v1794 = vadd.f32 %v1061, %v1793
      %v1795 = vpop.f32.mrb[0].mxu0
      %v1796 = vadd.f32 %v1065, %v1795
      %1797 = vmatprep.mubr.bf16.mxu0 %v812
      %1798 = vmatmul.mubr.bf16.gmra.mrb[0].mxu0 %v811
      %v1799 = vpop.f32.mrb[0].mxu0
      %v1800 = vadd.f32 %v1061, %v1799
      %v1801 = vpop.f32.mrb[0].mxu0
      %v1802 = vadd.f32 %v1065, %v1801
      %v1803 = vpop.f32.mrb[0].mxu0
      %v1804 = vadd.f32 %v1061, %v1803
      %v1805 = vpop.f32.mrb[0].mxu0
      %v1806 = vadd.f32 %v1065, %v1805
      %1807 = vmatprep.mubr.bf16.mxu0 %v819
      %1808 = vmatmul.mubr.bf16.gmra.mrb[0].mxu0 %v818
      %v1809 = vpop.f32.mrb[0].mxu0
      %v1810 = vadd.f32 %v1061, %v1809
      %v1811 = vpop.f32.mrb[0].mxu0
      %v1812 = vadd.f32 %v1065, %v1811
      %v1813 = vpop.f32.mrb[0].mxu0
      %v1814 = vadd.f32 %v1061, %v1813
      %v1815 = vpop.f32.mrb[0].mxu0
      %v1816 = vadd.f32 %v1065, %v1815
      %1817 = vmatprep.mubr.bf16.mxu0 %v826
      %1818 = vmatmul.mubr.bf16.gmra.mrb[0].mxu0 %v825
      %v1819 = vpop.f32.mrb[0].mxu0
      %v1820 = vadd.f32 %v1061, %v1819
      %v1821 = vpop.f32.mrb[0].mxu0
      %v1822 = vadd.f32 %v1065, %v1821
      %v1823 = vpop.f32.mrb[0].mxu0
      %v1824 = vadd.f32 %v1061, %v1823
      %v1825 = vpop.f32.mrb[0].mxu0
      %v1826 = vadd.f32 %v1065, %v1825
      %1827 = vmatprep.mubr.bf16.mxu0 %v833
      %1828 = vmatmul.mubr.bf16.gmra.mrb[0].mxu0 %v832
      %v1829 = vpop.f32.mrb[0].mxu0
      %v1830 = vadd.f32 %v1061, %v1829
      %v1831 = vpop.f32.mrb[0].mxu0
      %v1832 = vadd.f32 %v1065, %v1831
      %v1833 = vpop.f32.mrb[0].mxu0
      %v1834 = vadd.f32 %v1061, %v1833
      %v1835 = vpop.f32.mrb[0].mxu0
      %v1836 = vadd.f32 %v1065, %v1835
      %1837 = vmatprep.mubr.bf16.mxu0 %v840
      %1838 = vmatmul.mubr.bf16.gmra.mrb[0].mxu0 %v839
      %v1839 = vpop.f32.mrb[0].mxu0
      %v1840 = vadd.f32 %v1061, %v1839
      %v1841 = vpop.f32.mrb[0].mxu0
      %v1842 = vadd.f32 %v1065, %v1841
      %v1843 = vpop.f32.mrb[0].mxu0
      %v1844 = vadd.f32 %v1061, %v1843
      %v1845 = vpop.f32.mrb[0].mxu0
      %v1846 = vadd.f32 %v1065, %v1845
      %1847 = vmatprep.mubr.bf16.mxu0 %v847
      %1848 = vmatmul.mubr.bf16.gmra.mrb[0].mxu0 %v846
      %v1849 = vpop.f32.mrb[0].mxu0
      %v1850 = vadd.f32 %v1061, %v1849
      %v1851 = vpop.f32.mrb[0].mxu0
      %v1852 = vadd.f32 %v1065, %v1851
      %v1853 = vpop.f32.mrb[0].mxu0
      %v1854 = vadd.f32 %v1061, %v1853
      %v1855 = vpop.f32.mrb[0].mxu0
      %v1856 = vadd.f32 %v1065, %v1855
      %1857 = vmatprep.mubr.bf16.mxu0 %v854
      %1858 = vmatmul.mubr.bf16.gmra.mrb[0].mxu0 %v853
      %v1859 = vpop.f32.mrb[0].mxu0
      %v1860 = vadd.f32 %v1061, %v1859
      %v1861 = vpop.f32.mrb[0].mxu0
      %v1862 = vadd.f32 %v1065, %v1861
      %v1863 = vpop.f32.mrb[0].mxu0
      %v1864 = vadd.f32 %v1061, %v1863
      %v1865 = vpop.f32.mrb[0].mxu0
      %v1866 = vadd.f32 %v1065, %v1865
      %1867 = vmatprep.mubr.bf16.mxu0 %v861
      %1868 = vmatmul.mubr.bf16.gmra.mrb[0].mxu0 %v860
      %v1869 = vpop.f32.mrb[0].mxu0
      %v1870 = vadd.f32 %v1061, %v1869
      %v1871 = vpop.f32.mrb[0].mxu0
      %v1872 = vadd.f32 %v1065, %v1871
      %v1873 = vpop.f32.mrb[0].mxu0
      %v1874 = vadd.f32 %v1061, %v1873
      %v1875 = vpop.f32.mrb[0].mxu0
      %v1876 = vadd.f32 %v1065, %v1875
      %1877 = vmatprep.mubr.bf16.mxu0 %v868
      %1878 = vmatmul.mubr.bf16.gmra.mrb[0].mxu0 %v867
      %v1879 = vpop.f32.mrb[0].mxu0
      %v1880 = vadd.f32 %v1061, %v1879
      %v1881 = vpop.f32.mrb[0].mxu0
      %v1882 = vadd.f32 %v1065, %v1881
      %v1883 = vpop.f32.mrb[0].mxu0
      %v1884 = vadd.f32 %v1061, %v1883
      %v1885 = vpop.f32.mrb[0].mxu0
      %v1886 = vadd.f32 %v1065, %v1885
      %1887 = vmatprep.mubr.bf16.mxu0 %v875
      %1888 = vmatmul.mubr.bf16.gmra.mrb[0].mxu0 %v874
      %v1889 = vpop.f32.mrb[0].mxu0
      %v1890 = vadd.f32 %v1061, %v1889
      %v1891 = vpop.f32.mrb[0].mxu0
      %v1892 = vadd.f32 %v1065, %v1891
      %v1893 = vpop.f32.mrb[0].mxu0
      %v1894 = vadd.f32 %v1061, %v1893
      %v1895 = vpop.f32.mrb[0].mxu0
      %v1896 = vadd.f32 %v1065, %v1895
      %1897 = vmatprep.mubr.bf16.mxu0 %v882
      %1898 = vmatmul.mubr.bf16.gmra.mrb[0].mxu0 %v881
      %v1899 = vpop.f32.mrb[0].mxu0
      %v1900 = vadd.f32 %v1061, %v1899
      %v1901 = vpop.f32.mrb[0].mxu0
      %v1902 = vadd.f32 %v1065, %v1901
      %v1903 = vpop.f32.mrb[0].mxu0
      %v1904 = vadd.f32 %v1061, %v1903
      %v1905 = vpop.f32.mrb[0].mxu0
      %v1906 = vadd.f32 %v1065, %v1905
      %1907 = vmatprep.mubr.bf16.mxu0 %v889
      %1908 = vmatmul.mubr.bf16.gmra.mrb[0].mxu0 %v888
      %v1909 = vpop.f32.mrb[0].mxu0
      %v1910 = vadd.f32 %v1061, %v1909
      %v1911 = vpop.f32.mrb[0].mxu0
      %v1912 = vadd.f32 %v1065, %v1911
      %v1913 = vpop.f32.mrb[0].mxu0
      %v1914 = vadd.f32 %v1061, %v1913
      %v1915 = vpop.f32.mrb[0].mxu0
      %v1916 = vadd.f32 %v1065, %v1915
      %1917 = vmatprep.mubr.bf16.mxu0 %v896
      %1918 = vmatmul.mubr.bf16.gmra.mrb[0].mxu0 %v895
      %v1919 = vpop.f32.mrb[0].mxu0
      %v1920 = vadd.f32 %v1061, %v1919
      %v1921 = vpop.f32.mrb[0].mxu0
      %v1922 = vadd.f32 %v1065, %v1921
      %v1923 = vpop.f32.mrb[0].mxu0
      %v1924 = vadd.f32 %v1061, %v1923
      %v1925 = vpop.f32.mrb[0].mxu0
      %v1926 = vadd.f32 %v1065, %v1925
      %1927 = vmatprep.mubr.bf16.mxu0 %v903
      %1928 = vmatmul.mubr.bf16.gmra.mrb[0].mxu0 %v902
      %v1929 = vpop.f32.mrb[0].mxu0
      %v1930 = vadd.f32 %v1061, %v1929
      %v1931 = vpop.f32.mrb[0].mxu0
      %v1932 = vadd.f32 %v1065, %v1931
      %v1933 = vpop.f32.mrb[0].mxu0
      %v1934 = vadd.f32 %v1061, %v1933
      %v1935 = vpop.f32.mrb[0].mxu0
      %v1936 = vadd.f32 %v1065, %v1935
      %1937 = vmatprep.mubr.bf16.mxu0 %v910
      %1938 = vmatmul.mubr.bf16.gmra.mrb[0].mxu0 %v909
      %v1939 = vpop.f32.mrb[0].mxu0
      %v1940 = vadd.f32 %v1061, %v1939
      %v1941 = vpop.f32.mrb[0].mxu0
      %v1942 = vadd.f32 %v1065, %v1941
      %v1943 = vpop.f32.mrb[0].mxu0
      %v1944 = vadd.f32 %v1061, %v1943
      %v1945 = vpop.f32.mrb[0].mxu0
      %v1946 = vadd.f32 %v1065, %v1945
      %1947 = vmatprep.mubr.bf16.mxu0 %v917
      %1948 = vmatmul.mubr.bf16.gmra.mrb[0].mxu0 %v916
      %v1949 = vpop.f32.mrb[0].mxu0
      %v1950 = vadd.f32 %v1061, %v1949
      %v1951 = vpop.f32.mrb[0].mxu0
      %v1952 = vadd.f32 %v1065, %v1951
      %v1953 = vpop.f32.mrb[0].mxu0
      %v1954 = vadd.f32 %v1061, %v1953
      %v1955 = vpop.f32.mrb[0].mxu0
      %v1956 = vadd.f32 %v1065, %v1955
      %1957 = vmatprep.mubr.bf16.mxu0 %v924
      %1958 = vmatmul.mubr.bf16.gmra.mrb[0].mxu0 %v923
      %v1959 = vpop.f32.mrb[0].mxu0
      %v1960 = vadd.f32 %v1061, %v1959
      %v1961 = vpop.f32.mrb[0].mxu0
      %v1962 = vadd.f32 %v1065, %v1961
      %v1963 = vpop.f32.mrb[0].mxu0
      %v1964 = vadd.f32 %v1061, %v1963
      %v1965 = vpop.f32.mrb[0].mxu0
      %v1966 = vadd.f32 %v1065, %v1965
      %1967 = vmatprep.mubr.bf16.mxu0 %v931
      %1968 = vmatmul.mubr.bf16.gmra.mrb[0].mxu0 %v930
      %v1969 = vpop.f32.mrb[0].mxu0
      %v1970 = vadd.f32 %v1061, %v1969
      %v1971 = vpop.f32.mrb[0].mxu0
      %v1972 = vadd.f32 %v1065, %v1971
      %v1973 = vpop.f32.mrb[0].mxu0
      %v1974 = vadd.f32 %v1061, %v1973
      %v1975 = vpop.f32.mrb[0].mxu0
      %v1976 = vadd.f32 %v1065, %v1975
      %1977 = vmatprep.mubr.bf16.mxu0 %v938
      %1978 = vmatmul.mubr.bf16.gmra.mrb[0].mxu0 %v937
      %v1979 = vpop.f32.mrb[0].mxu0
      %v1980 = vadd.f32 %v1061, %v1979
      %v1981 = vpop.f32.mrb[0].mxu0
      %v1982 = vadd.f32 %v1065, %v1981
      %v1983 = vpop.f32.mrb[0].mxu0
      %v1984 = vadd.f32 %v1061, %v1983
      %v1985 = vpop.f32.mrb[0].mxu0
      %v1986 = vadd.f32 %v1065, %v1985
      %1987 = vmatprep.mubr.bf16.mxu0 %v945
      %1988 = vmatmul.mubr.bf16.gmra.mrb[0].mxu0 %v944
      %v1989 = vpop.f32.mrb[0].mxu0
      %v1990 = vadd.f32 %v1061, %v1989
      %v1991 = vpop.f32.mrb[0].mxu0
      %v1992 = vadd.f32 %v1065, %v1991
      %v1993 = vpop.f32.mrb[0].mxu0
      %v1994 = vadd.f32 %v1061, %v1993
      %v1995 = vpop.f32.mrb[0].mxu0
      %v1996 = vadd.f32 %v1065, %v1995
      %1997 = vmatprep.mubr.bf16.mxu0 %v952
      %1998 = vmatmul.mubr.bf16.gmra.mrb[0].mxu0 %v951
      %v1999 = vpop.f32.mrb[0].mxu0
      %v2000 = vadd.f32 %v1061, %v1999
      %v2001 = vpop.f32.mrb[0].mxu0
      %v2002 = vadd.f32 %v1065, %v2001
      %v2003 = vpop.f32.mrb[0].mxu0
      %v2004 = vadd.f32 %v1061, %v2003
      %v2005 = vpop.f32.mrb[0].mxu0
      %v2006 = vadd.f32 %v1065, %v2005
      %2007 = vdwg.mxu0
      %2008 = vmatprep.subr.bf16.mxu0 %v1395
      %2009 = vmatpush1.bf16.msra.mxu0 %v1394
      %2010 = vmatprep.subr.bf16.mxu0 %v1397
      %2011 = vmatpush1.bf16.msra.mxu0 %v1396
      %2012 = vmatprep.subr.bf16.mxu0 %v1399
      %2013 = vmatpush1.bf16.msra.mxu0 %v1398
      %2014 = vmatprep.subr.bf16.mxu0 %v1401
      %2015 = vmatpush1.bf16.msra.mxu0 %v1400
      %2016 = vmatprep.subr.bf16.mxu0 %v1403
      %2017 = vmatpush1.bf16.msra.mxu0 %v1402
      %2018 = vmatprep.subr.bf16.mxu0 %v1405
      %2019 = vmatpush1.bf16.msra.mxu0 %v1404
      %2020 = vmatprep.subr.bf16.mxu0 %v1407
      %2021 = vmatpush1.bf16.msra.mxu0 %v1406
      %2022 = vmatprep.subr.bf16.mxu0 %v1409
      %2023 = vmatpush1.bf16.msra.mxu0 %v1408
      %2024 = vmatprep.subr.bf16.mxu0 %v1411
      %2025 = vmatpush1.bf16.msra.mxu0 %v1410
      %2026 = vmatprep.subr.bf16.mxu0 %v1413
      %2027 = vmatpush1.bf16.msra.mxu0 %v1412
      %2028 = vmatprep.subr.bf16.mxu0 %v1415
      %2029 = vmatpush1.bf16.msra.mxu0 %v1414
      %2030 = vmatprep.subr.bf16.mxu0 %v1417
      %2031 = vmatpush1.bf16.msra.mxu0 %v1416
      %2032 = vmatprep.subr.bf16.mxu0 %v1419
      %2033 = vmatpush1.bf16.msra.mxu0 %v1418
      %2034 = vmatprep.subr.bf16.mxu0 %v1421
      %2035 = vmatpush1.bf16.msra.mxu0 %v1420
      %2036 = vmatprep.subr.bf16.mxu0 %v1423
      %2037 = vmatpush1.bf16.msra.mxu0 %v1422
      %2038 = vmatprep.subr.bf16.mxu0 %v1425
      %2039 = vmatpush1.bf16.msra.mxu0 %v1424
      %2040 = vmatprep.mubr.bf16.mxu0 %v737
      %2041 = vmatmul.mubr.bf16.gmra.mrb[0].mxu0 %v736
      %v2042 = vpop.f32.mrb[0].mxu0
      %v2043 = vadd.f32 %v1690, %v2042
      %v2044 = vpop.f32.mrb[0].mxu0
      %v2045 = vadd.f32 %v1692, %v2044
      %v2046 = vpop.f32.mrb[0].mxu0
      %v2047 = vadd.f32 %v1694, %v2046
      %v2048 = vpop.f32.mrb[0].mxu0
      %v2049 = vadd.f32 %v1696, %v2048
      %2050 = vmatprep.mubr.bf16.mxu0 %v744
      %2051 = vmatmul.mubr.bf16.gmra.mrb[0].mxu0 %v743
      %v2052 = vpop.f32.mrb[0].mxu0
      %v2053 = vadd.f32 %v1700, %v2052
      %v2054 = vpop.f32.mrb[0].mxu0
      %v2055 = vadd.f32 %v1702, %v2054
      %v2056 = vpop.f32.mrb[0].mxu0
      %v2057 = vadd.f32 %v1704, %v2056
      %v2058 = vpop.f32.mrb[0].mxu0
      %v2059 = vadd.f32 %v1706, %v2058
      %2060 = vmatprep.mubr.bf16.mxu0 %v751
      %2061 = vmatmul.mubr.bf16.gmra.mrb[0].mxu0 %v750
      %v2062 = vpop.f32.mrb[0].mxu0
      %v2063 = vadd.f32 %v1710, %v2062
      %v2064 = vpop.f32.mrb[0].mxu0
      %v2065 = vadd.f32 %v1712, %v2064
      %v2066 = vpop.f32.mrb[0].mxu0
      %v2067 = vadd.f32 %v1714, %v2066
      %v2068 = vpop.f32.mrb[0].mxu0
      %v2069 = vadd.f32 %v1716, %v2068
      %2070 = vmatprep.mubr.bf16.mxu0 %v758
      %2071 = vmatmul.mubr.bf16.gmra.mrb[0].mxu0 %v757
      %v2072 = vpop.f32.mrb[0].mxu0
      %v2073 = vadd.f32 %v1720, %v2072
      %v2074 = vpop.f32.mrb[0].mxu0
      %v2075 = vadd.f32 %v1722, %v2074
      %v2076 = vpop.f32.mrb[0].mxu0
      %v2077 = vadd.f32 %v1724, %v2076
      %v2078 = vpop.f32.mrb[0].mxu0
      %v2079 = vadd.f32 %v1726, %v2078
      %2080 = vmatprep.mubr.bf16.mxu0 %v765
      %2081 = vmatmul.mubr.bf16.gmra.mrb[0].mxu0 %v764
      %v2082 = vpop.f32.mrb[0].mxu0
      %v2083 = vadd.f32 %v1730, %v2082
      %v2084 = vpop.f32.mrb[0].mxu0
      %v2085 = vadd.f32 %v1732, %v2084
      %v2086 = vpop.f32.mrb[0].mxu0
      %v2087 = vadd.f32 %v1734, %v2086
      %v2088 = vpop.f32.mrb[0].mxu0
      %v2089 = vadd.f32 %v1736, %v2088
      %2090 = vmatprep.mubr.bf16.mxu0 %v772
      %2091 = vmatmul.mubr.bf16.gmra.mrb[0].mxu0 %v771
      %v2092 = vpop.f32.mrb[0].mxu0
      %v2093 = vadd.f32 %v1740, %v2092
      %v2094 = vpop.f32.mrb[0].mxu0
      %v2095 = vadd.f32 %v1742, %v2094
      %v2096 = vpop.f32.mrb[0].mxu0
      %v2097 = vadd.f32 %v1744, %v2096
      %v2098 = vpop.f32.mrb[0].mxu0
      %v2099 = vadd.f32 %v1746, %v2098
      %2100 = vmatprep.mubr.bf16.mxu0 %v779
      %2101 = vmatmul.mubr.bf16.gmra.mrb[0].mxu0 %v778
      %v2102 = vpop.f32.mrb[0].mxu0
      %v2103 = vadd.f32 %v1750, %v2102
      %v2104 = vpop.f32.mrb[0].mxu0
      %v2105 = vadd.f32 %v1752, %v2104
      %v2106 = vpop.f32.mrb[0].mxu0
      %v2107 = vadd.f32 %v1754, %v2106
      %v2108 = vpop.f32.mrb[0].mxu0
      %v2109 = vadd.f32 %v1756, %v2108
      %2110 = vmatprep.mubr.bf16.mxu0 %v786
      %2111 = vmatmul.mubr.bf16.gmra.mrb[0].mxu0 %v785
      %v2112 = vpop.f32.mrb[0].mxu0
      %v2113 = vadd.f32 %v1760, %v2112
      %v2114 = vpop.f32.mrb[0].mxu0
      %v2115 = vadd.f32 %v1762, %v2114
      %v2116 = vpop.f32.mrb[0].mxu0
      %v2117 = vadd.f32 %v1764, %v2116
      %v2118 = vpop.f32.mrb[0].mxu0
      %v2119 = vadd.f32 %v1766, %v2118
      %2120 = vmatprep.mubr.bf16.mxu0 %v793
      %2121 = vmatmul.mubr.bf16.gmra.mrb[0].mxu0 %v792
      %v2122 = vpop.f32.mrb[0].mxu0
      %v2123 = vadd.f32 %v1770, %v2122
      %v2124 = vpop.f32.mrb[0].mxu0
      %v2125 = vadd.f32 %v1772, %v2124
      %v2126 = vpop.f32.mrb[0].mxu0
      %v2127 = vadd.f32 %v1774, %v2126
      %v2128 = vpop.f32.mrb[0].mxu0
      %v2129 = vadd.f32 %v1776, %v2128
      %2130 = vmatprep.mubr.bf16.mxu0 %v800
      %2131 = vmatmul.mubr.bf16.gmra.mrb[0].mxu0 %v799
      %v2132 = vpop.f32.mrb[0].mxu0
      %v2133 = vadd.f32 %v1780, %v2132
      %v2134 = vpop.f32.mrb[0].mxu0
      %v2135 = vadd.f32 %v1782, %v2134
      %v2136 = vpop.f32.mrb[0].mxu0
      %v2137 = vadd.f32 %v1784, %v2136
      %v2138 = vpop.f32.mrb[0].mxu0
      %v2139 = vadd.f32 %v1786, %v2138
      %2140 = vmatprep.mubr.bf16.mxu0 %v807
      %2141 = vmatmul.mubr.bf16.gmra.mrb[0].mxu0 %v806
      %v2142 = vpop.f32.mrb[0].mxu0
      %v2143 = vadd.f32 %v1790, %v2142
      %v2144 = vpop.f32.mrb[0].mxu0
      %v2145 = vadd.f32 %v1792, %v2144
      %v2146 = vpop.f32.mrb[0].mxu0
      %v2147 = vadd.f32 %v1794, %v2146
      %v2148 = vpop.f32.mrb[0].mxu0
      %v2149 = vadd.f32 %v1796, %v2148
      %2150 = vmatprep.mubr.bf16.mxu0 %v814
      %2151 = vmatmul.mubr.bf16.gmra.mrb[0].mxu0 %v813
      %v2152 = vpop.f32.mrb[0].mxu0
      %v2153 = vadd.f32 %v1800, %v2152
      %v2154 = vpop.f32.mrb[0].mxu0
      %v2155 = vadd.f32 %v1802, %v2154
      %v2156 = vpop.f32.mrb[0].mxu0
      %v2157 = vadd.f32 %v1804, %v2156
      %v2158 = vpop.f32.mrb[0].mxu0
      %v2159 = vadd.f32 %v1806, %v2158
      %2160 = vmatprep.mubr.bf16.mxu0 %v821
      %2161 = vmatmul.mubr.bf16.gmra.mrb[0].mxu0 %v820
      %v2162 = vpop.f32.mrb[0].mxu0
      %v2163 = vadd.f32 %v1810, %v2162
      %v2164 = vpop.f32.mrb[0].mxu0
      %v2165 = vadd.f32 %v1812, %v2164
      %v2166 = vpop.f32.mrb[0].mxu0
      %v2167 = vadd.f32 %v1814, %v2166
      %v2168 = vpop.f32.mrb[0].mxu0
      %v2169 = vadd.f32 %v1816, %v2168
      %2170 = vmatprep.mubr.bf16.mxu0 %v828
      %2171 = vmatmul.mubr.bf16.gmra.mrb[0].mxu0 %v827
      %v2172 = vpop.f32.mrb[0].mxu0
      %v2173 = vadd.f32 %v1820, %v2172
      %v2174 = vpop.f32.mrb[0].mxu0
      %v2175 = vadd.f32 %v1822, %v2174
      %v2176 = vpop.f32.mrb[0].mxu0
      %v2177 = vadd.f32 %v1824, %v2176
      %v2178 = vpop.f32.mrb[0].mxu0
      %v2179 = vadd.f32 %v1826, %v2178
      %2180 = vmatprep.mubr.bf16.mxu0 %v835
      %2181 = vmatmul.mubr.bf16.gmra.mrb[0].mxu0 %v834
      %v2182 = vpop.f32.mrb[0].mxu0
      %v2183 = vadd.f32 %v1830, %v2182
      %v2184 = vpop.f32.mrb[0].mxu0
      %v2185 = vadd.f32 %v1832, %v2184
      %v2186 = vpop.f32.mrb[0].mxu0
      %v2187 = vadd.f32 %v1834, %v2186
      %v2188 = vpop.f32.mrb[0].mxu0
      %v2189 = vadd.f32 %v1836, %v2188
      %2190 = vmatprep.mubr.bf16.mxu0 %v842
      %2191 = vmatmul.mubr.bf16.gmra.mrb[0].mxu0 %v841
      %v2192 = vpop.f32.mrb[0].mxu0
      %v2193 = vadd.f32 %v1840, %v2192
      %v2194 = vpop.f32.mrb[0].mxu0
      %v2195 = vadd.f32 %v1842, %v2194
      %v2196 = vpop.f32.mrb[0].mxu0
      %v2197 = vadd.f32 %v1844, %v2196
      %v2198 = vpop.f32.mrb[0].mxu0
      %v2199 = vadd.f32 %v1846, %v2198
      %2200 = vmatprep.mubr.bf16.mxu0 %v849
      %2201 = vmatmul.mubr.bf16.gmra.mrb[0].mxu0 %v848
      %v2202 = vpop.f32.mrb[0].mxu0
      %v2203 = vadd.f32 %v1850, %v2202
      %v2204 = vpop.f32.mrb[0].mxu0
      %v2205 = vadd.f32 %v1852, %v2204
      %v2206 = vpop.f32.mrb[0].mxu0
      %v2207 = vadd.f32 %v1854, %v2206
      %v2208 = vpop.f32.mrb[0].mxu0
      %v2209 = vadd.f32 %v1856, %v2208
      %2210 = vmatprep.mubr.bf16.mxu0 %v856
      %2211 = vmatmul.mubr.bf16.gmra.mrb[0].mxu0 %v855
      %v2212 = vpop.f32.mrb[0].mxu0
      %v2213 = vadd.f32 %v1860, %v2212
      %v2214 = vpop.f32.mrb[0].mxu0
      %v2215 = vadd.f32 %v1862, %v2214
      %v2216 = vpop.f32.mrb[0].mxu0
      %v2217 = vadd.f32 %v1864, %v2216
      %v2218 = vpop.f32.mrb[0].mxu0
      %v2219 = vadd.f32 %v1866, %v2218
      %2220 = vmatprep.mubr.bf16.mxu0 %v863
      %2221 = vmatmul.mubr.bf16.gmra.mrb[0].mxu0 %v862
      %v2222 = vpop.f32.mrb[0].mxu0
      %v2223 = vadd.f32 %v1870, %v2222
      %v2224 = vpop.f32.mrb[0].mxu0
      %v2225 = vadd.f32 %v1872, %v2224
      %v2226 = vpop.f32.mrb[0].mxu0
      %v2227 = vadd.f32 %v1874, %v2226
      %v2228 = vpop.f32.mrb[0].mxu0
      %v2229 = vadd.f32 %v1876, %v2228
      %2230 = vmatprep.mubr.bf16.mxu0 %v870
      %2231 = vmatmul.mubr.bf16.gmra.mrb[0].mxu0 %v869
      %v2232 = vpop.f32.mrb[0].mxu0
      %v2233 = vadd.f32 %v1880, %v2232
      %v2234 = vpop.f32.mrb[0].mxu0
      %v2235 = vadd.f32 %v1882, %v2234
      %v2236 = vpop.f32.mrb[0].mxu0
      %v2237 = vadd.f32 %v1884, %v2236
      %v2238 = vpop.f32.mrb[0].mxu0
      %v2239 = vadd.f32 %v1886, %v2238
      %2240 = vmatprep.mubr.bf16.mxu0 %v877
      %2241 = vmatmul.mubr.bf16.gmra.mrb[0].mxu0 %v876
      %v2242 = vpop.f32.mrb[0].mxu0
      %v2243 = vadd.f32 %v1890, %v2242
      %v2244 = vpop.f32.mrb[0].mxu0
      %v2245 = vadd.f32 %v1892, %v2244
      %v2246 = vpop.f32.mrb[0].mxu0
      %v2247 = vadd.f32 %v1894, %v2246
      %v2248 = vpop.f32.mrb[0].mxu0
      %v2249 = vadd.f32 %v1896, %v2248
      %2250 = vmatprep.mubr.bf16.mxu0 %v884
      %2251 = vmatmul.mubr.bf16.gmra.mrb[0].mxu0 %v883
      %v2252 = vpop.f32.mrb[0].mxu0
      %v2253 = vadd.f32 %v1900, %v2252
      %v2254 = vpop.f32.mrb[0].mxu0
      %v2255 = vadd.f32 %v1902, %v2254
      %v2256 = vpop.f32.mrb[0].mxu0
      %v2257 = vadd.f32 %v1904, %v2256
      %v2258 = vpop.f32.mrb[0].mxu0
      %v2259 = vadd.f32 %v1906, %v2258
      %2260 = vmatprep.mubr.bf16.mxu0 %v891
      %2261 = vmatmul.mubr.bf16.gmra.mrb[0].mxu0 %v890
      %v2262 = vpop.f32.mrb[0].mxu0
      %v2263 = vadd.f32 %v1910, %v2262
      %v2264 = vpop.f32.mrb[0].mxu0
      %v2265 = vadd.f32 %v1912, %v2264
      %v2266 = vpop.f32.mrb[0].mxu0
      %v2267 = vadd.f32 %v1914, %v2266
      %v2268 = vpop.f32.mrb[0].mxu0
      %v2269 = vadd.f32 %v1916, %v2268
      %2270 = vmatprep.mubr.bf16.mxu0 %v898
      %2271 = vmatmul.mubr.bf16.gmra.mrb[0].mxu0 %v897
      %v2272 = vpop.f32.mrb[0].mxu0
      %v2273 = vadd.f32 %v1920, %v2272
      %v2274 = vpop.f32.mrb[0].mxu0
      %v2275 = vadd.f32 %v1922, %v2274
      %v2276 = vpop.f32.mrb[0].mxu0
      %v2277 = vadd.f32 %v1924, %v2276
      %v2278 = vpop.f32.mrb[0].mxu0
      %v2279 = vadd.f32 %v1926, %v2278
      %2280 = vmatprep.mubr.bf16.mxu0 %v905
      %2281 = vmatmul.mubr.bf16.gmra.mrb[0].mxu0 %v904
      %v2282 = vpop.f32.mrb[0].mxu0
      %v2283 = vadd.f32 %v1930, %v2282
      %v2284 = vpop.f32.mrb[0].mxu0
      %v2285 = vadd.f32 %v1932, %v2284
      %v2286 = vpop.f32.mrb[0].mxu0
      %v2287 = vadd.f32 %v1934, %v2286
      %v2288 = vpop.f32.mrb[0].mxu0
      %v2289 = vadd.f32 %v1936, %v2288
      %2290 = vmatprep.mubr.bf16.mxu0 %v912
      %2291 = vmatmul.mubr.bf16.gmra.mrb[0].mxu0 %v911
      %v2292 = vpop.f32.mrb[0].mxu0
      %v2293 = vadd.f32 %v1940, %v2292
      %v2294 = vpop.f32.mrb[0].mxu0
      %v2295 = vadd.f32 %v1942, %v2294
      %v2296 = vpop.f32.mrb[0].mxu0
      %v2297 = vadd.f32 %v1944, %v2296
      %v2298 = vpop.f32.mrb[0].mxu0
      %v2299 = vadd.f32 %v1946, %v2298
      %2300 = vmatprep.mubr.bf16.mxu0 %v919
      %2301 = vmatmul.mubr.bf16.gmra.mrb[0].mxu0 %v918
      %v2302 = vpop.f32.mrb[0].mxu0
      %v2303 = vadd.f32 %v1950, %v2302
      %v2304 = vpop.f32.mrb[0].mxu0
      %v2305 = vadd.f32 %v1952, %v2304
      %v2306 = vpop.f32.mrb[0].mxu0
      %v2307 = vadd.f32 %v1954, %v2306
      %v2308 = vpop.f32.mrb[0].mxu0
      %v2309 = vadd.f32 %v1956, %v2308
      %2310 = vmatprep.mubr.bf16.mxu0 %v926
      %2311 = vmatmul.mubr.bf16.gmra.mrb[0].mxu0 %v925
      %v2312 = vpop.f32.mrb[0].mxu0
      %v2313 = vadd.f32 %v1960, %v2312
      %v2314 = vpop.f32.mrb[0].mxu0
      %v2315 = vadd.f32 %v1962, %v2314
      %v2316 = vpop.f32.mrb[0].mxu0
      %v2317 = vadd.f32 %v1964, %v2316
      %v2318 = vpop.f32.mrb[0].mxu0
      %v2319 = vadd.f32 %v1966, %v2318
      %2320 = vmatprep.mubr.bf16.mxu0 %v933
      %2321 = vmatmul.mubr.bf16.gmra.mrb[0].mxu0 %v932
      %v2322 = vpop.f32.mrb[0].mxu0
      %v2323 = vadd.f32 %v1970, %v2322
      %v2324 = vpop.f32.mrb[0].mxu0
      %v2325 = vadd.f32 %v1972, %v2324
      %v2326 = vpop.f32.mrb[0].mxu0
      %v2327 = vadd.f32 %v1974, %v2326
      %v2328 = vpop.f32.mrb[0].mxu0
      %v2329 = vadd.f32 %v1976, %v2328
      %2330 = vmatprep.mubr.bf16.mxu0 %v940
      %2331 = vmatmul.mubr.bf16.gmra.mrb[0].mxu0 %v939
      %v2332 = vpop.f32.mrb[0].mxu0
      %v2333 = vadd.f32 %v1980, %v2332
      %v2334 = vpop.f32.mrb[0].mxu0
      %v2335 = vadd.f32 %v1982, %v2334
      %v2336 = vpop.f32.mrb[0].mxu0
      %v2337 = vadd.f32 %v1984, %v2336
      %v2338 = vpop.f32.mrb[0].mxu0
      %v2339 = vadd.f32 %v1986, %v2338
      %2340 = vmatprep.mubr.bf16.mxu0 %v947
      %2341 = vmatmul.mubr.bf16.gmra.mrb[0].mxu0 %v946
      %v2342 = vpop.f32.mrb[0].mxu0
      %v2343 = vadd.f32 %v1990, %v2342
      %v2344 = vpop.f32.mrb[0].mxu0
      %v2345 = vadd.f32 %v1992, %v2344
      %v2346 = vpop.f32.mrb[0].mxu0
      %v2347 = vadd.f32 %v1994, %v2346
      %v2348 = vpop.f32.mrb[0].mxu0
      %v2349 = vadd.f32 %v1996, %v2348
      %2350 = vmatprep.mubr.bf16.mxu0 %v954
      %2351 = vmatmul.mubr.bf16.gmra.mrb[0].mxu0 %v953
      %v2352 = vpop.f32.mrb[0].mxu0
      %v2353 = vadd.f32 %v2000, %v2352
      %v2354 = vpop.f32.mrb[0].mxu0
      %v2355 = vadd.f32 %v2002, %v2354
      %v2356 = vpop.f32.mrb[0].mxu0
      %v2357 = vadd.f32 %v2004, %v2356
      %v2358 = vpop.f32.mrb[0].mxu0
      %v2359 = vadd.f32 %v2006, %v2358
      %2360 = vdwg.mxu0
      %2361 = vmatprep.subr.bf16.mxu0 %v1427
      %2362 = vmatpush1.bf16.msra.mxu0 %v1426
      %2363 = vmatprep.subr.bf16.mxu0 %v1429
      %2364 = vmatpush1.bf16.msra.mxu0 %v1428
      %2365 = vmatprep.subr.bf16.mxu0 %v1431
      %2366 = vmatpush1.bf16.msra.mxu0 %v1430
      %2367 = vmatprep.subr.bf16.mxu0 %v1433
      %2368 = vmatpush1.bf16.msra.mxu0 %v1432
      %2369 = vmatprep.subr.bf16.mxu0 %v1435
      %2370 = vmatpush1.bf16.msra.mxu0 %v1434
      %2371 = vmatprep.subr.bf16.mxu0 %v1437
      %2372 = vmatpush1.bf16.msra.mxu0 %v1436
      %2373 = vmatprep.subr.bf16.mxu0 %v1439
      %2374 = vmatpush1.bf16.msra.mxu0 %v1438
      %2375 = vmatprep.subr.bf16.mxu0 %v1441
      %2376 = vmatpush1.bf16.msra.mxu0 %v1440
      %2377 = vmatprep.subr.bf16.mxu0 %v1443
      %2378 = vmatpush1.bf16.msra.mxu0 %v1442
      %2379 = vmatprep.subr.bf16.mxu0 %v1445
      %2380 = vmatpush1.bf16.msra.mxu0 %v1444
      %2381 = vmatprep.subr.bf16.mxu0 %v1447
      %2382 = vmatpush1.bf16.msra.mxu0 %v1446
      %2383 = vmatprep.subr.bf16.mxu0 %v1449
      %2384 = vmatpush1.bf16.msra.mxu0 %v1448
      %2385 = vmatprep.subr.bf16.mxu0 %v1451
      %2386 = vmatpush1.bf16.msra.mxu0 %v1450
      %2387 = vmatprep.subr.bf16.mxu0 %v1453
      %2388 = vmatpush1.bf16.msra.mxu0 %v1452
      %2389 = vmatprep.subr.bf16.mxu0 %v1455
      %2390 = vmatpush1.bf16.msra.mxu0 %v1454
      %2391 = vmatprep.subr.bf16.mxu0 %v1457
      %2392 = vmatpush1.bf16.msra.mxu0 %v1456
      %2393 = vmatprep.mubr.bf16.mxu0 %v739
      %2394 = vmatmul.mubr.bf16.gmra.mrb[0].mxu0 %v738
      %v2395 = vpop.f32.mrb[0].mxu0
      %v2396 = vadd.f32 %v2043, %v2395
      %v2397 = vpop.f32.mrb[0].mxu0
      %v2398 = vadd.f32 %v2045, %v2397
      %v2399 = vpop.f32.mrb[0].mxu0
      %v2400 = vadd.f32 %v2047, %v2399
      %v2401 = vpop.f32.mrb[0].mxu0
      %v2402 = vadd.f32 %v2049, %v2401
      %2403 = vmatprep.mubr.bf16.mxu0 %v746
      %2404 = vmatmul.mubr.bf16.gmra.mrb[0].mxu0 %v745
      %v2405 = vpop.f32.mrb[0].mxu0
      %v2406 = vadd.f32 %v2053, %v2405
      %v2407 = vpop.f32.mrb[0].mxu0
      %v2408 = vadd.f32 %v2055, %v2407
      %v2409 = vpop.f32.mrb[0].mxu0
      %v2410 = vadd.f32 %v2057, %v2409
      %v2411 = vpop.f32.mrb[0].mxu0
      %v2412 = vadd.f32 %v2059, %v2411
      %2413 = vmatprep.mubr.bf16.mxu0 %v753
      %2414 = vmatmul.mubr.bf16.gmra.mrb[0].mxu0 %v752
      %v2415 = vpop.f32.mrb[0].mxu0
      %v2416 = vadd.f32 %v2063, %v2415
      %v2417 = vpop.f32.mrb[0].mxu0
      %v2418 = vadd.f32 %v2065, %v2417
      %v2419 = vpop.f32.mrb[0].mxu0
      %v2420 = vadd.f32 %v2067, %v2419
      %v2421 = vpop.f32.mrb[0].mxu0
      %v2422 = vadd.f32 %v2069, %v2421
      %2423 = vmatprep.mubr.bf16.mxu0 %v760
      %2424 = vmatmul.mubr.bf16.gmra.mrb[0].mxu0 %v759
      %v2425 = vpop.f32.mrb[0].mxu0
      %v2426 = vadd.f32 %v2073, %v2425
      %v2427 = vpop.f32.mrb[0].mxu0
      %v2428 = vadd.f32 %v2075, %v2427
      %v2429 = vpop.f32.mrb[0].mxu0
      %v2430 = vadd.f32 %v2077, %v2429
      %v2431 = vpop.f32.mrb[0].mxu0
      %v2432 = vadd.f32 %v2079, %v2431
      %2433 = vmatprep.mubr.bf16.mxu0 %v767
      %2434 = vmatmul.mubr.bf16.gmra.mrb[0].mxu0 %v766
      %v2435 = vpop.f32.mrb[0].mxu0
      %v2436 = vadd.f32 %v2083, %v2435
      %v2437 = vpop.f32.mrb[0].mxu0
      %v2438 = vadd.f32 %v2085, %v2437
      %v2439 = vpop.f32.mrb[0].mxu0
      %v2440 = vadd.f32 %v2087, %v2439
      %v2441 = vpop.f32.mrb[0].mxu0
      %v2442 = vadd.f32 %v2089, %v2441
      %2443 = vmatprep.mubr.bf16.mxu0 %v774
      %2444 = vmatmul.mubr.bf16.gmra.mrb[0].mxu0 %v773
      %v2445 = vpop.f32.mrb[0].mxu0
      %v2446 = vadd.f32 %v2093, %v2445
      %v2447 = vpop.f32.mrb[0].mxu0
      %v2448 = vadd.f32 %v2095, %v2447
      %v2449 = vpop.f32.mrb[0].mxu0
      %v2450 = vadd.f32 %v2097, %v2449
      %v2451 = vpop.f32.mrb[0].mxu0
      %v2452 = vadd.f32 %v2099, %v2451
      %2453 = vmatprep.mubr.bf16.mxu0 %v781
      %2454 = vmatmul.mubr.bf16.gmra.mrb[0].mxu0 %v780
      %v2455 = vpop.f32.mrb[0].mxu0
      %v2456 = vadd.f32 %v2103, %v2455
      %v2457 = vpop.f32.mrb[0].mxu0
      %v2458 = vadd.f32 %v2105, %v2457
      %v2459 = vpop.f32.mrb[0].mxu0
      %v2460 = vadd.f32 %v2107, %v2459
      %v2461 = vpop.f32.mrb[0].mxu0
      %v2462 = vadd.f32 %v2109, %v2461
      %2463 = vmatprep.mubr.bf16.mxu0 %v788
      %2464 = vmatmul.mubr.bf16.gmra.mrb[0].mxu0 %v787
      %v2465 = vpop.f32.mrb[0].mxu0
      %v2466 = vadd.f32 %v2113, %v2465
      %v2467 = vpop.f32.mrb[0].mxu0
      %v2468 = vadd.f32 %v2115, %v2467
      %v2469 = vpop.f32.mrb[0].mxu0
      %v2470 = vadd.f32 %v2117, %v2469
      %v2471 = vpop.f32.mrb[0].mxu0
      %v2472 = vadd.f32 %v2119, %v2471
      %2473 = vmatprep.mubr.bf16.mxu0 %v795
      %2474 = vmatmul.mubr.bf16.gmra.mrb[0].mxu0 %v794
      %v2475 = vpop.f32.mrb[0].mxu0
      %v2476 = vadd.f32 %v2123, %v2475
      %v2477 = vpop.f32.mrb[0].mxu0
      %v2478 = vadd.f32 %v2125, %v2477
      %v2479 = vpop.f32.mrb[0].mxu0
      %v2480 = vadd.f32 %v2127, %v2479
      %v2481 = vpop.f32.mrb[0].mxu0
      %v2482 = vadd.f32 %v2129, %v2481
      %2483 = vmatprep.mubr.bf16.mxu0 %v802
      %2484 = vmatmul.mubr.bf16.gmra.mrb[0].mxu0 %v801
      %v2485 = vpop.f32.mrb[0].mxu0
      %v2486 = vadd.f32 %v2133, %v2485
      %v2487 = vpop.f32.mrb[0].mxu0
      %v2488 = vadd.f32 %v2135, %v2487
      %v2489 = vpop.f32.mrb[0].mxu0
      %v2490 = vadd.f32 %v2137, %v2489
      %v2491 = vpop.f32.mrb[0].mxu0
      %v2492 = vadd.f32 %v2139, %v2491
      %2493 = vmatprep.mubr.bf16.mxu0 %v809
      %2494 = vmatmul.mubr.bf16.gmra.mrb[0].mxu0 %v808
      %v2495 = vpop.f32.mrb[0].mxu0
      %v2496 = vadd.f32 %v2143, %v2495
      %v2497 = vpop.f32.mrb[0].mxu0
      %v2498 = vadd.f32 %v2145, %v2497
      %v2499 = vpop.f32.mrb[0].mxu0
      %v2500 = vadd.f32 %v2147, %v2499
      %v2501 = vpop.f32.mrb[0].mxu0
      %v2502 = vadd.f32 %v2149, %v2501
      %2503 = vmatprep.mubr.bf16.mxu0 %v816
      %2504 = vmatmul.mubr.bf16.gmra.mrb[0].mxu0 %v815
      %v2505 = vpop.f32.mrb[0].mxu0
      %v2506 = vadd.f32 %v2153, %v2505
      %v2507 = vpop.f32.mrb[0].mxu0
      %v2508 = vadd.f32 %v2155, %v2507
      %v2509 = vpop.f32.mrb[0].mxu0
      %v2510 = vadd.f32 %v2157, %v2509
      %v2511 = vpop.f32.mrb[0].mxu0
      %v2512 = vadd.f32 %v2159, %v2511
      %2513 = vmatprep.mubr.bf16.mxu0 %v823
      %2514 = vmatmul.mubr.bf16.gmra.mrb[0].mxu0 %v822
      %v2515 = vpop.f32.mrb[0].mxu0
      %v2516 = vadd.f32 %v2163, %v2515
      %v2517 = vpop.f32.mrb[0].mxu0
      %v2518 = vadd.f32 %v2165, %v2517
      %v2519 = vpop.f32.mrb[0].mxu0
      %v2520 = vadd.f32 %v2167, %v2519
      %v2521 = vpop.f32.mrb[0].mxu0
      %v2522 = vadd.f32 %v2169, %v2521
      %2523 = vmatprep.mubr.bf16.mxu0 %v830
      %2524 = vmatmul.mubr.bf16.gmra.mrb[0].mxu0 %v829
      %v2525 = vpop.f32.mrb[0].mxu0
      %v2526 = vadd.f32 %v2173, %v2525
      %v2527 = vpop.f32.mrb[0].mxu0
      %v2528 = vadd.f32 %v2175, %v2527
      %v2529 = vpop.f32.mrb[0].mxu0
      %v2530 = vadd.f32 %v2177, %v2529
      %v2531 = vpop.f32.mrb[0].mxu0
      %v2532 = vadd.f32 %v2179, %v2531
      %2533 = vmatprep.mubr.bf16.mxu0 %v837
      %2534 = vmatmul.mubr.bf16.gmra.mrb[0].mxu0 %v836
      %v2535 = vpop.f32.mrb[0].mxu0
      %v2536 = vadd.f32 %v2183, %v2535
      %v2537 = vpop.f32.mrb[0].mxu0
      %v2538 = vadd.f32 %v2185, %v2537
      %v2539 = vpop.f32.mrb[0].mxu0
      %v2540 = vadd.f32 %v2187, %v2539
      %v2541 = vpop.f32.mrb[0].mxu0
      %v2542 = vadd.f32 %v2189, %v2541
      %2543 = vmatprep.mubr.bf16.mxu0 %v844
      %2544 = vmatmul.mubr.bf16.gmra.mrb[0].mxu0 %v843
      %v2545 = vpop.f32.mrb[0].mxu0
      %v2546 = vadd.f32 %v2193, %v2545
      %v2547 = vpop.f32.mrb[0].mxu0
      %v2548 = vadd.f32 %v2195, %v2547
      %v2549 = vpop.f32.mrb[0].mxu0
      %v2550 = vadd.f32 %v2197, %v2549
      %v2551 = vpop.f32.mrb[0].mxu0
      %v2552 = vadd.f32 %v2199, %v2551
      %2553 = vmatprep.mubr.bf16.mxu0 %v851
      %2554 = vmatmul.mubr.bf16.gmra.mrb[0].mxu0 %v850
      %v2555 = vpop.f32.mrb[0].mxu0
      %v2556 = vadd.f32 %v2203, %v2555
      %v2557 = vpop.f32.mrb[0].mxu0
      %v2558 = vadd.f32 %v2205, %v2557
      %v2559 = vpop.f32.mrb[0].mxu0
      %v2560 = vadd.f32 %v2207, %v2559
      %v2561 = vpop.f32.mrb[0].mxu0
      %v2562 = vadd.f32 %v2209, %v2561
      %2563 = vmatprep.mubr.bf16.mxu0 %v858
      %2564 = vmatmul.mubr.bf16.gmra.mrb[0].mxu0 %v857
      %v2565 = vpop.f32.mrb[0].mxu0
      %v2566 = vadd.f32 %v2213, %v2565
      %v2567 = vpop.f32.mrb[0].mxu0
      %v2568 = vadd.f32 %v2215, %v2567
      %v2569 = vpop.f32.mrb[0].mxu0
      %v2570 = vadd.f32 %v2217, %v2569
      %v2571 = vpop.f32.mrb[0].mxu0
      %v2572 = vadd.f32 %v2219, %v2571
      %2573 = vmatprep.mubr.bf16.mxu0 %v865
      %2574 = vmatmul.mubr.bf16.gmra.mrb[0].mxu0 %v864
      %v2575 = vpop.f32.mrb[0].mxu0
      %v2576 = vadd.f32 %v2223, %v2575
      %v2577 = vpop.f32.mrb[0].mxu0
      %v2578 = vadd.f32 %v2225, %v2577
      %v2579 = vpop.f32.mrb[0].mxu0
      %v2580 = vadd.f32 %v2227, %v2579
      %v2581 = vpop.f32.mrb[0].mxu0
      %v2582 = vadd.f32 %v2229, %v2581
      %2583 = vmatprep.mubr.bf16.mxu0 %v872
      %2584 = vmatmul.mubr.bf16.gmra.mrb[0].mxu0 %v871
      %v2585 = vpop.f32.mrb[0].mxu0
      %v2586 = vadd.f32 %v2233, %v2585
      %v2587 = vpop.f32.mrb[0].mxu0
      %v2588 = vadd.f32 %v2235, %v2587
      %v2589 = vpop.f32.mrb[0].mxu0
      %v2590 = vadd.f32 %v2237, %v2589
      %v2591 = vpop.f32.mrb[0].mxu0
      %v2592 = vadd.f32 %v2239, %v2591
      %2593 = vmatprep.mubr.bf16.mxu0 %v879
      %2594 = vmatmul.mubr.bf16.gmra.mrb[0].mxu0 %v878
      %v2595 = vpop.f32.mrb[0].mxu0
      %v2596 = vadd.f32 %v2243, %v2595
      %v2597 = vpop.f32.mrb[0].mxu0
      %v2598 = vadd.f32 %v2245, %v2597
      %v2599 = vpop.f32.mrb[0].mxu0
      %v2600 = vadd.f32 %v2247, %v2599
      %v2601 = vpop.f32.mrb[0].mxu0
      %v2602 = vadd.f32 %v2249, %v2601
      %2603 = vmatprep.mubr.bf16.mxu0 %v886
      %2604 = vmatmul.mubr.bf16.gmra.mrb[0].mxu0 %v885
      %v2605 = vpop.f32.mrb[0].mxu0
      %v2606 = vadd.f32 %v2253, %v2605
      %v2607 = vpop.f32.mrb[0].mxu0
      %v2608 = vadd.f32 %v2255, %v2607
      %v2609 = vpop.f32.mrb[0].mxu0
      %v2610 = vadd.f32 %v2257, %v2609
      %v2611 = vpop.f32.mrb[0].mxu0
      %v2612 = vadd.f32 %v2259, %v2611
      %2613 = vmatprep.mubr.bf16.mxu0 %v893
      %2614 = vmatmul.mubr.bf16.gmra.mrb[0].mxu0 %v892
      %v2615 = vpop.f32.mrb[0].mxu0
      %v2616 = vadd.f32 %v2263, %v2615
      %v2617 = vpop.f32.mrb[0].mxu0
      %v2618 = vadd.f32 %v2265, %v2617
      %v2619 = vpop.f32.mrb[0].mxu0
      %v2620 = vadd.f32 %v2267, %v2619
      %v2621 = vpop.f32.mrb[0].mxu0
      %v2622 = vadd.f32 %v2269, %v2621
      %2623 = vmatprep.mubr.bf16.mxu0 %v900
      %2624 = vmatmul.mubr.bf16.gmra.mrb[0].mxu0 %v899
      %v2625 = vpop.f32.mrb[0].mxu0
      %v2626 = vadd.f32 %v2273, %v2625
      %v2627 = vpop.f32.mrb[0].mxu0
      %v2628 = vadd.f32 %v2275, %v2627
      %v2629 = vpop.f32.mrb[0].mxu0
      %v2630 = vadd.f32 %v2277, %v2629
      %v2631 = vpop.f32.mrb[0].mxu0
      %v2632 = vadd.f32 %v2279, %v2631
      %2633 = vmatprep.mubr.bf16.mxu0 %v907
      %2634 = vmatmul.mubr.bf16.gmra.mrb[0].mxu0 %v906
      %v2635 = vpop.f32.mrb[0].mxu0
      %v2636 = vadd.f32 %v2283, %v2635
      %v2637 = vpop.f32.mrb[0].mxu0
      %v2638 = vadd.f32 %v2285, %v2637
      %v2639 = vpop.f32.mrb[0].mxu0
      %v2640 = vadd.f32 %v2287, %v2639
      %v2641 = vpop.f32.mrb[0].mxu0
      %v2642 = vadd.f32 %v2289, %v2641
      %2643 = vmatprep.mubr.bf16.mxu0 %v914
      %2644 = vmatmul.mubr.bf16.gmra.mrb[0].mxu0 %v913
      %v2645 = vpop.f32.mrb[0].mxu0
      %v2646 = vadd.f32 %v2293, %v2645
      %v2647 = vpop.f32.mrb[0].mxu0
      %v2648 = vadd.f32 %v2295, %v2647
      %v2649 = vpop.f32.mrb[0].mxu0
      %v2650 = vadd.f32 %v2297, %v2649
      %v2651 = vpop.f32.mrb[0].mxu0
      %v2652 = vadd.f32 %v2299, %v2651
      %2653 = vmatprep.mubr.bf16.mxu0 %v921
      %2654 = vmatmul.mubr.bf16.gmra.mrb[0].mxu0 %v920
      %v2655 = vpop.f32.mrb[0].mxu0
      %v2656 = vadd.f32 %v2303, %v2655
      %v2657 = vpop.f32.mrb[0].mxu0
      %v2658 = vadd.f32 %v2305, %v2657
      %v2659 = vpop.f32.mrb[0].mxu0
      %v2660 = vadd.f32 %v2307, %v2659
      %v2661 = vpop.f32.mrb[0].mxu0
      %v2662 = vadd.f32 %v2309, %v2661
      %2663 = vmatprep.mubr.bf16.mxu0 %v928
      %2664 = vmatmul.mubr.bf16.gmra.mrb[0].mxu0 %v927
      %v2665 = vpop.f32.mrb[0].mxu0
      %v2666 = vadd.f32 %v2313, %v2665
      %v2667 = vpop.f32.mrb[0].mxu0
      %v2668 = vadd.f32 %v2315, %v2667
      %v2669 = vpop.f32.mrb[0].mxu0
      %v2670 = vadd.f32 %v2317, %v2669
      %v2671 = vpop.f32.mrb[0].mxu0
      %v2672 = vadd.f32 %v2319, %v2671
      %2673 = vmatprep.mubr.bf16.mxu0 %v935
      %2674 = vmatmul.mubr.bf16.gmra.mrb[0].mxu0 %v934
      %v2675 = vpop.f32.mrb[0].mxu0
      %v2676 = vadd.f32 %v2323, %v2675
      %v2677 = vpop.f32.mrb[0].mxu0
      %v2678 = vadd.f32 %v2325, %v2677
      %v2679 = vpop.f32.mrb[0].mxu0
      %v2680 = vadd.f32 %v2327, %v2679
      %v2681 = vpop.f32.mrb[0].mxu0
      %v2682 = vadd.f32 %v2329, %v2681
      %2683 = vmatprep.mubr.bf16.mxu0 %v942
      %2684 = vmatmul.mubr.bf16.gmra.mrb[0].mxu0 %v941
      %v2685 = vpop.f32.mrb[0].mxu0
      %v2686 = vadd.f32 %v2333, %v2685
      %v2687 = vpop.f32.mrb[0].mxu0
      %v2688 = vadd.f32 %v2335, %v2687
      %v2689 = vpop.f32.mrb[0].mxu0
      %v2690 = vadd.f32 %v2337, %v2689
      %v2691 = vpop.f32.mrb[0].mxu0
      %v2692 = vadd.f32 %v2339, %v2691
      %2693 = vmatprep.mubr.bf16.mxu0 %v949
      %2694 = vmatmul.mubr.bf16.gmra.mrb[0].mxu0 %v948
      %v2695 = vpop.f32.mrb[0].mxu0
      %v2696 = vadd.f32 %v2343, %v2695
      %v2697 = vpop.f32.mrb[0].mxu0
      %v2698 = vadd.f32 %v2345, %v2697
      %v2699 = vpop.f32.mrb[0].mxu0
      %v2700 = vadd.f32 %v2347, %v2699
      %v2701 = vpop.f32.mrb[0].mxu0
      %v2702 = vadd.f32 %v2349, %v2701
      %2703 = vmatprep.mubr.bf16.mxu0 %v956
      %2704 = vmatmul.mubr.bf16.gmra.mrb[0].mxu0 %v955
      %v2705 = vpop.f32.mrb[0].mxu0
      %v2706 = vadd.f32 %v2353, %v2705
      %v2707 = vpop.f32.mrb[0].mxu0
      %v2708 = vadd.f32 %v2355, %v2707
      %v2709 = vpop.f32.mrb[0].mxu0
      %v2710 = vadd.f32 %v2357, %v2709
      %v2711 = vpop.f32.mrb[0].mxu0
      %v2712 = vadd.f32 %v2359, %v2711
      %2713 = vdwg.mxu0
      %2714 = vmatprep.subr.bf16.mxu0 %v1459
      %2715 = vmatpush1.bf16.msra.mxu0 %v1458
      %2716 = vmatprep.subr.bf16.mxu0 0
      %2717 = vmatpush1.bf16.msra.mxu0 0
      %2718 = vmatprep.subr.bf16.mxu0 0
      %2719 = vmatpush1.bf16.msra.mxu0 0
      %2720 = vmatprep.subr.bf16.mxu0 0
      %2721 = vmatpush1.bf16.msra.mxu0 0
      %2722 = vmatprep.subr.bf16.mxu0 0
      %2723 = vmatpush1.bf16.msra.mxu0 0
      %2724 = vmatprep.subr.bf16.mxu0 0
      %2725 = vmatpush1.bf16.msra.mxu0 0
      %2726 = vmatprep.subr.bf16.mxu0 0
      %2727 = vmatpush1.bf16.msra.mxu0 0
      %2728 = vmatprep.subr.bf16.mxu0 0
      %2729 = vmatpush1.bf16.msra.mxu0 0
      %2730 = vmatprep.subr.bf16.mxu0 0
      %2731 = vmatpush1.bf16.msra.mxu0 0
      %2732 = vmatprep.subr.bf16.mxu0 0
      %2733 = vmatpush1.bf16.msra.mxu0 0
      %2734 = vmatprep.subr.bf16.mxu0 0
      %2735 = vmatpush1.bf16.msra.mxu0 0
      %2736 = vmatprep.subr.bf16.mxu0 0
      %2737 = vmatpush1.bf16.msra.mxu0 0
      %2738 = vmatprep.subr.bf16.mxu0 0
      %2739 = vmatpush1.bf16.msra.mxu0 0
      %2740 = vmatprep.subr.bf16.mxu0 0
      %2741 = vmatpush1.bf16.msra.mxu0 0
      %2742 = vmatprep.subr.bf16.mxu0 0
      %2743 = vmatpush1.bf16.msra.mxu0 0
      %2744 = vmatprep.subr.bf16.mxu0 0
      %2745 = vmatpush1.bf16.msra.mxu0 0
      %2746 = vmatprep.mubr.bf16.mxu0 0
      %2747 = vmatmul.mubr.bf16.gmra.mrb[0].mxu0 %v1560
      %v2748 = vpop.f32.mrb[0].mxu0
      %v2749 = vadd.f32 %v2396, %v2748
      %v2750 = vpop.f32.mrb[0].mxu0
      %v2751 = vadd.f32 %v2398, %v2750
      %v2752 = vpop.f32.mrb[0].mxu0
      %v2753 = vadd.f32 %v2400, %v2752
      %v2754 = vpop.f32.mrb[0].mxu0
      %v2755 = vadd.f32 %v2402, %v2754
      %2756 = vmatprep.mubr.bf16.mxu0 0
      %2757 = vmatmul.mubr.bf16.gmra.mrb[0].mxu0 %v1563
      %v2758 = vpop.f32.mrb[0].mxu0
      %v2759 = vadd.f32 %v2406, %v2758
      %v2760 = vpop.f32.mrb[0].mxu0
      %v2761 = vadd.f32 %v2408, %v2760
      %v2762 = vpop.f32.mrb[0].mxu0
      %v2763 = vadd.f32 %v2410, %v2762
      %v2764 = vpop.f32.mrb[0].mxu0
      %v2765 = vadd.f32 %v2412, %v2764
      %2766 = vmatprep.mubr.bf16.mxu0 0
      %2767 = vmatmul.mubr.bf16.gmra.mrb[0].mxu0 %v1566
      %v2768 = vpop.f32.mrb[0].mxu0
      %v2769 = vadd.f32 %v2416, %v2768
      %v2770 = vpop.f32.mrb[0].mxu0
      %v2771 = vadd.f32 %v2418, %v2770
      %v2772 = vpop.f32.mrb[0].mxu0
      %v2773 = vadd.f32 %v2420, %v2772
      %v2774 = vpop.f32.mrb[0].mxu0
      %v2775 = vadd.f32 %v2422, %v2774
      %2776 = vmatprep.mubr.bf16.mxu0 0
      %2777 = vmatmul.mubr.bf16.gmra.mrb[0].mxu0 %v1569
      %v2778 = vpop.f32.mrb[0].mxu0
      %v2779 = vadd.f32 %v2426, %v2778
      %v2780 = vpop.f32.mrb[0].mxu0
      %v2781 = vadd.f32 %v2428, %v2780
      %v2782 = vpop.f32.mrb[0].mxu0
      %v2783 = vadd.f32 %v2430, %v2782
      %v2784 = vpop.f32.mrb[0].mxu0
      %v2785 = vadd.f32 %v2432, %v2784
      %2786 = vmatprep.mubr.bf16.mxu0 0
      %2787 = vmatmul.mubr.bf16.gmra.mrb[0].mxu0 %v1572
      %v2788 = vpop.f32.mrb[0].mxu0
      %v2789 = vadd.f32 %v2436, %v2788
      %v2790 = vpop.f32.mrb[0].mxu0
      %v2791 = vadd.f32 %v2438, %v2790
      %v2792 = vpop.f32.mrb[0].mxu0
      %v2793 = vadd.f32 %v2440, %v2792
      %v2794 = vpop.f32.mrb[0].mxu0
      %v2795 = vadd.f32 %v2442, %v2794
      %2796 = vmatprep.mubr.bf16.mxu0 0
      %2797 = vmatmul.mubr.bf16.gmra.mrb[0].mxu0 %v1575
      %v2798 = vpop.f32.mrb[0].mxu0
      %v2799 = vadd.f32 %v2446, %v2798
      %v2800 = vpop.f32.mrb[0].mxu0
      %v2801 = vadd.f32 %v2448, %v2800
      %v2802 = vpop.f32.mrb[0].mxu0
      %v2803 = vadd.f32 %v2450, %v2802
      %v2804 = vpop.f32.mrb[0].mxu0
      %v2805 = vadd.f32 %v2452, %v2804
      %2806 = vmatprep.mubr.bf16.mxu0 0
      %2807 = vmatmul.mubr.bf16.gmra.mrb[0].mxu0 %v1578
      %v2808 = vpop.f32.mrb[0].mxu0
      %v2809 = vadd.f32 %v2456, %v2808
      %v2810 = vpop.f32.mrb[0].mxu0
      %v2811 = vadd.f32 %v2458, %v2810
      %v2812 = vpop.f32.mrb[0].mxu0
      %v2813 = vadd.f32 %v2460, %v2812
      %v2814 = vpop.f32.mrb[0].mxu0
      %v2815 = vadd.f32 %v2462, %v2814
      %2816 = vmatprep.mubr.bf16.mxu0 0
      %2817 = vmatmul.mubr.bf16.gmra.mrb[0].mxu0 %v1581
      %v2818 = vpop.f32.mrb[0].mxu0
      %v2819 = vadd.f32 %v2466, %v2818
      %v2820 = vpop.f32.mrb[0].mxu0
      %v2821 = vadd.f32 %v2468, %v2820
      %v2822 = vpop.f32.mrb[0].mxu0
      %v2823 = vadd.f32 %v2470, %v2822
      %v2824 = vpop.f32.mrb[0].mxu0
      %v2825 = vadd.f32 %v2472, %v2824
      %2826 = vmatprep.mubr.bf16.mxu0 0
      %2827 = vmatmul.mubr.bf16.gmra.mrb[0].mxu0 %v1584
      %v2828 = vpop.f32.mrb[0].mxu0
      %v2829 = vadd.f32 %v2476, %v2828
      %v2830 = vpop.f32.mrb[0].mxu0
      %v2831 = vadd.f32 %v2478, %v2830
      %v2832 = vpop.f32.mrb[0].mxu0
      %v2833 = vadd.f32 %v2480, %v2832
      %v2834 = vpop.f32.mrb[0].mxu0
      %v2835 = vadd.f32 %v2482, %v2834
      %2836 = vmatprep.mubr.bf16.mxu0 0
      %2837 = vmatmul.mubr.bf16.gmra.mrb[0].mxu0 %v1587
      %v2838 = vpop.f32.mrb[0].mxu0
      %v2839 = vadd.f32 %v2486, %v2838
      %v2840 = vpop.f32.mrb[0].mxu0
      %v2841 = vadd.f32 %v2488, %v2840
      %v2842 = vpop.f32.mrb[0].mxu0
      %v2843 = vadd.f32 %v2490, %v2842
      %v2844 = vpop.f32.mrb[0].mxu0
      %v2845 = vadd.f32 %v2492, %v2844
      %2846 = vmatprep.mubr.bf16.mxu0 0
      %2847 = vmatmul.mubr.bf16.gmra.mrb[0].mxu0 %v1590
      %v2848 = vpop.f32.mrb[0].mxu0
      %v2849 = vadd.f32 %v2496, %v2848
      %v2850 = vpop.f32.mrb[0].mxu0
      %v2851 = vadd.f32 %v2498, %v2850
      %v2852 = vpop.f32.mrb[0].mxu0
      %v2853 = vadd.f32 %v2500, %v2852
      %v2854 = vpop.f32.mrb[0].mxu0
      %v2855 = vadd.f32 %v2502, %v2854
      %2856 = vmatprep.mubr.bf16.mxu0 0
      %2857 = vmatmul.mubr.bf16.gmra.mrb[0].mxu0 %v1593
      %v2858 = vpop.f32.mrb[0].mxu0
      %v2859 = vadd.f32 %v2506, %v2858
      %v2860 = vpop.f32.mrb[0].mxu0
      %v2861 = vadd.f32 %v2508, %v2860
      %v2862 = vpop.f32.mrb[0].mxu0
      %v2863 = vadd.f32 %v2510, %v2862
      %v2864 = vpop.f32.mrb[0].mxu0
      %v2865 = vadd.f32 %v2512, %v2864
      %2866 = vmatprep.mubr.bf16.mxu0 0
      %2867 = vmatmul.mubr.bf16.gmra.mrb[0].mxu0 %v1596
      %v2868 = vpop.f32.mrb[0].mxu0
      %v2869 = vadd.f32 %v2516, %v2868
      %v2870 = vpop.f32.mrb[0].mxu0
      %v2871 = vadd.f32 %v2518, %v2870
      %v2872 = vpop.f32.mrb[0].mxu0
      %v2873 = vadd.f32 %v2520, %v2872
      %v2874 = vpop.f32.mrb[0].mxu0
      %v2875 = vadd.f32 %v2522, %v2874
      %2876 = vmatprep.mubr.bf16.mxu0 0
      %2877 = vmatmul.mubr.bf16.gmra.mrb[0].mxu0 %v1599
      %v2878 = vpop.f32.mrb[0].mxu0
      %v2879 = vadd.f32 %v2526, %v2878
      %v2880 = vpop.f32.mrb[0].mxu0
      %v2881 = vadd.f32 %v2528, %v2880
      %v2882 = vpop.f32.mrb[0].mxu0
      %v2883 = vadd.f32 %v2530, %v2882
      %v2884 = vpop.f32.mrb[0].mxu0
      %v2885 = vadd.f32 %v2532, %v2884
      %2886 = vmatprep.mubr.bf16.mxu0 0
      %2887 = vmatmul.mubr.bf16.gmra.mrb[0].mxu0 %v1602
      %v2888 = vpop.f32.mrb[0].mxu0
      %v2889 = vadd.f32 %v2536, %v2888
      %v2890 = vpop.f32.mrb[0].mxu0
      %v2891 = vadd.f32 %v2538, %v2890
      %v2892 = vpop.f32.mrb[0].mxu0
      %v2893 = vadd.f32 %v2540, %v2892
      %v2894 = vpop.f32.mrb[0].mxu0
      %v2895 = vadd.f32 %v2542, %v2894
      %2896 = vmatprep.mubr.bf16.mxu0 0
      %2897 = vmatmul.mubr.bf16.gmra.mrb[0].mxu0 %v1605
      %v2898 = vpop.f32.mrb[0].mxu0
      %v2899 = vadd.f32 %v2546, %v2898
      %v2900 = vpop.f32.mrb[0].mxu0
      %v2901 = vadd.f32 %v2548, %v2900
      %v2902 = vpop.f32.mrb[0].mxu0
      %v2903 = vadd.f32 %v2550, %v2902
      %v2904 = vpop.f32.mrb[0].mxu0
      %v2905 = vadd.f32 %v2552, %v2904
      %2906 = vmatprep.mubr.bf16.mxu0 0
      %2907 = vmatmul.mubr.bf16.gmra.mrb[0].mxu0 %v1608
      %v2908 = vpop.f32.mrb[0].mxu0
      %v2909 = vadd.f32 %v2556, %v2908
      %v2910 = vpop.f32.mrb[0].mxu0
      %v2911 = vadd.f32 %v2558, %v2910
      %v2912 = vpop.f32.mrb[0].mxu0
      %v2913 = vadd.f32 %v2560, %v2912
      %v2914 = vpop.f32.mrb[0].mxu0
      %v2915 = vadd.f32 %v2562, %v2914
      %2916 = vmatprep.mubr.bf16.mxu0 0
      %2917 = vmatmul.mubr.bf16.gmra.mrb[0].mxu0 %v1611
      %v2918 = vpop.f32.mrb[0].mxu0
      %v2919 = vadd.f32 %v2566, %v2918
      %v2920 = vpop.f32.mrb[0].mxu0
      %v2921 = vadd.f32 %v2568, %v2920
      %v2922 = vpop.f32.mrb[0].mxu0
      %v2923 = vadd.f32 %v2570, %v2922
      %v2924 = vpop.f32.mrb[0].mxu0
      %v2925 = vadd.f32 %v2572, %v2924
      %2926 = vmatprep.mubr.bf16.mxu0 0
      %2927 = vmatmul.mubr.bf16.gmra.mrb[0].mxu0 %v1614
      %v2928 = vpop.f32.mrb[0].mxu0
      %v2929 = vadd.f32 %v2576, %v2928
      %v2930 = vpop.f32.mrb[0].mxu0
      %v2931 = vadd.f32 %v2578, %v2930
      %v2932 = vpop.f32.mrb[0].mxu0
      %v2933 = vadd.f32 %v2580, %v2932
      %v2934 = vpop.f32.mrb[0].mxu0
      %v2935 = vadd.f32 %v2582, %v2934
      %2936 = vmatprep.mubr.bf16.mxu0 0
      %2937 = vmatmul.mubr.bf16.gmra.mrb[0].mxu0 %v1617
      %v2938 = vpop.f32.mrb[0].mxu0
      %v2939 = vadd.f32 %v2586, %v2938
      %v2940 = vpop.f32.mrb[0].mxu0
      %v2941 = vadd.f32 %v2588, %v2940
      %v2942 = vpop.f32.mrb[0].mxu0
      %v2943 = vadd.f32 %v2590, %v2942
      %v2944 = vpop.f32.mrb[0].mxu0
      %v2945 = vadd.f32 %v2592, %v2944
      %2946 = vmatprep.mubr.bf16.mxu0 0
      %2947 = vmatmul.mubr.bf16.gmra.mrb[0].mxu0 %v1620
      %v2948 = vpop.f32.mrb[0].mxu0
      %v2949 = vadd.f32 %v2596, %v2948
      %v2950 = vpop.f32.mrb[0].mxu0
      %v2951 = vadd.f32 %v2598, %v2950
      %v2952 = vpop.f32.mrb[0].mxu0
      %v2953 = vadd.f32 %v2600, %v2952
      %v2954 = vpop.f32.mrb[0].mxu0
      %v2955 = vadd.f32 %v2602, %v2954
      %2956 = vmatprep.mubr.bf16.mxu0 0
      %2957 = vmatmul.mubr.bf16.gmra.mrb[0].mxu0 %v1623
      %v2958 = vpop.f32.mrb[0].mxu0
      %v2959 = vadd.f32 %v2606, %v2958
      %v2960 = vpop.f32.mrb[0].mxu0
      %v2961 = vadd.f32 %v2608, %v2960
      %v2962 = vpop.f32.mrb[0].mxu0
      %v2963 = vadd.f32 %v2610, %v2962
      %v2964 = vpop.f32.mrb[0].mxu0
      %v2965 = vadd.f32 %v2612, %v2964
      %2966 = vmatprep.mubr.bf16.mxu0 0
      %2967 = vmatmul.mubr.bf16.gmra.mrb[0].mxu0 %v1626
      %v2968 = vpop.f32.mrb[0].mxu0
      %v2969 = vadd.f32 %v2616, %v2968
      %v2970 = vpop.f32.mrb[0].mxu0
      %v2971 = vadd.f32 %v2618, %v2970
      %v2972 = vpop.f32.mrb[0].mxu0
      %v2973 = vadd.f32 %v2620, %v2972
      %v2974 = vpop.f32.mrb[0].mxu0
      %v2975 = vadd.f32 %v2622, %v2974
      %2976 = vmatprep.mubr.bf16.mxu0 0
      %2977 = vmatmul.mubr.bf16.gmra.mrb[0].mxu0 %v1629
      %v2978 = vpop.f32.mrb[0].mxu0
      %v2979 = vadd.f32 %v2626, %v2978
      %v2980 = vpop.f32.mrb[0].mxu0
      %v2981 = vadd.f32 %v2628, %v2980
      %v2982 = vpop.f32.mrb[0].mxu0
      %v2983 = vadd.f32 %v2630, %v2982
      %v2984 = vpop.f32.mrb[0].mxu0
      %v2985 = vadd.f32 %v2632, %v2984
      %2986 = vmatprep.mubr.bf16.mxu0 0
      %2987 = vmatmul.mubr.bf16.gmra.mrb[0].mxu0 %v1632
      %v2988 = vpop.f32.mrb[0].mxu0
      %v2989 = vadd.f32 %v2636, %v2988
      %v2990 = vpop.f32.mrb[0].mxu0
      %v2991 = vadd.f32 %v2638, %v2990
      %v2992 = vpop.f32.mrb[0].mxu0
      %v2993 = vadd.f32 %v2640, %v2992
      %v2994 = vpop.f32.mrb[0].mxu0
      %v2995 = vadd.f32 %v2642, %v2994
      %2996 = vmatprep.mubr.bf16.mxu0 0
      %2997 = vmatmul.mubr.bf16.gmra.mrb[0].mxu0 %v1635
      %v2998 = vpop.f32.mrb[0].mxu0
      %v2999 = vadd.f32 %v2646, %v2998
      %v3000 = vpop.f32.mrb[0].mxu0
      %v3001 = vadd.f32 %v2648, %v3000
      %v3002 = vpop.f32.mrb[0].mxu0
      %v3003 = vadd.f32 %v2650, %v3002
      %v3004 = vpop.f32.mrb[0].mxu0
      %v3005 = vadd.f32 %v2652, %v3004
      %3006 = vmatprep.mubr.bf16.mxu0 0
      %3007 = vmatmul.mubr.bf16.gmra.mrb[0].mxu0 %v1638
      %v3008 = vpop.f32.mrb[0].mxu0
      %v3009 = vadd.f32 %v2656, %v3008
      %v3010 = vpop.f32.mrb[0].mxu0
      %v3011 = vadd.f32 %v2658, %v3010
      %v3012 = vpop.f32.mrb[0].mxu0
      %v3013 = vadd.f32 %v2660, %v3012
      %v3014 = vpop.f32.mrb[0].mxu0
      %v3015 = vadd.f32 %v2662, %v3014
      %3016 = vmatprep.mubr.bf16.mxu0 0
      %3017 = vmatmul.mubr.bf16.gmra.mrb[0].mxu0 %v1641
      %v3018 = vpop.f32.mrb[0].mxu0
      %v3019 = vadd.f32 %v2666, %v3018
      %v3020 = vpop.f32.mrb[0].mxu0
      %v3021 = vadd.f32 %v2668, %v3020
      %v3022 = vpop.f32.mrb[0].mxu0
      %v3023 = vadd.f32 %v2670, %v3022
      %v3024 = vpop.f32.mrb[0].mxu0
      %v3025 = vadd.f32 %v2672, %v3024
      %3026 = vmatprep.mubr.bf16.mxu0 0
      %3027 = vmatmul.mubr.bf16.gmra.mrb[0].mxu0 %v1644
      %v3028 = vpop.f32.mrb[0].mxu0
      %v3029 = vadd.f32 %v2676, %v3028
      %v3030 = vpop.f32.mrb[0].mxu0
      %v3031 = vadd.f32 %v2678, %v3030
      %v3032 = vpop.f32.mrb[0].mxu0
      %v3033 = vadd.f32 %v2680, %v3032
      %v3034 = vpop.f32.mrb[0].mxu0
      %v3035 = vadd.f32 %v2682, %v3034
      %3036 = vmatprep.mubr.bf16.mxu0 0
      %3037 = vmatmul.mubr.bf16.gmra.mrb[0].mxu0 %v1647
      %v3038 = vpop.f32.mrb[0].mxu0
      %v3039 = vadd.f32 %v2686, %v3038
      %v3040 = vpop.f32.mrb[0].mxu0
      %v3041 = vadd.f32 %v2688, %v3040
      %v3042 = vpop.f32.mrb[0].mxu0
      %v3043 = vadd.f32 %v2690, %v3042
      %v3044 = vpop.f32.mrb[0].mxu0
      %v3045 = vadd.f32 %v2692, %v3044
      %3046 = vmatprep.mubr.bf16.mxu0 0
      %3047 = vmatmul.mubr.bf16.gmra.mrb[0].mxu0 %v1650
      %v3048 = vpop.f32.mrb[0].mxu0
      %v3049 = vadd.f32 %v2696, %v3048
      %v3050 = vpop.f32.mrb[0].mxu0
      %v3051 = vadd.f32 %v2698, %v3050
      %v3052 = vpop.f32.mrb[0].mxu0
      %v3053 = vadd.f32 %v2700, %v3052
      %v3054 = vpop.f32.mrb[0].mxu0
      %v3055 = vadd.f32 %v2702, %v3054
      %3056 = vmatprep.mubr.bf16.mxu0 0
      %3057 = vmatmul.mubr.bf16.gmra.mrb[0].mxu0 %v1653
      %v3058 = vpop.f32.mrb[0].mxu0
      %v3059 = vadd.f32 %v2706, %v3058
      %v3060 = vpop.f32.mrb[0].mxu0
      %v3061 = vadd.f32 %v2708, %v3060
      %v3062 = vpop.f32.mrb[0].mxu0
      %v3063 = vadd.f32 %v2710, %v3062
      %v3064 = vpop.f32.mrb[0].mxu0
      %v3065 = vadd.f32 %v2712, %v3064
      %3066 = vdwg.mxu0
      %v3067 = vmax.f32 %v2749, 0.0
      %v3068 = vmax.f32 %v2751, 0.0
      %v3069 = vmax.f32 %v2753, 0.0
      %v3070 = vmax.f32 %v2755, 0.0
      %v3071 = vmax.f32 %v2759, 0.0
      %v3072 = vmax.f32 %v2761, 0.0
      %v3073 = vmax.f32 %v2763, 0.0
      %v3074 = vmax.f32 %v2765, 0.0
      %v3075 = vmax.f32 %v2769, 0.0
      %v3076 = vmax.f32 %v2771, 0.0
      %v3077 = vmax.f32 %v2773, 0.0
      %v3078 = vmax.f32 %v2775, 0.0
      %v3079 = vmax.f32 %v2779, 0.0
      %v3080 = vmax.f32 %v2781, 0.0
      %v3081 = vmax.f32 %v2783, 0.0
      %v3082 = vmax.f32 %v2785, 0.0
      %v3083 = vmax.f32 %v2789, 0.0
      %v3084 = vmax.f32 %v2791, 0.0
      %v3085 = vmax.f32 %v2793, 0.0
      %v3086 = vmax.f32 %v2795, 0.0
      %v3087 = vmax.f32 %v2799, 0.0
      %v3088 = vmax.f32 %v2801, 0.0
      %v3089 = vmax.f32 %v2803, 0.0
      %v3090 = vmax.f32 %v2805, 0.0
      %v3091 = vmax.f32 %v2809, 0.0
      %v3092 = vmax.f32 %v2811, 0.0
      %v3093 = vmax.f32 %v2813, 0.0
      %v3094 = vmax.f32 %v2815, 0.0
      %v3095 = vmax.f32 %v2819, 0.0
      %v3096 = vmax.f32 %v2821, 0.0
      %v3097 = vmax.f32 %v2823, 0.0
      %v3098 = vmax.f32 %v2825, 0.0
      %v3099 = vmax.f32 %v2829, 0.0
      %v3100 = vmax.f32 %v2831, 0.0
      %v3101 = vmax.f32 %v2833, 0.0
      %v3102 = vmax.f32 %v2835, 0.0
      %v3103 = vmax.f32 %v2839, 0.0
      %v3104 = vmax.f32 %v2841, 0.0
      %v3105 = vmax.f32 %v2843, 0.0
      %v3106 = vmax.f32 %v2845, 0.0
      %v3107 = vmax.f32 %v2849, 0.0
      %v3108 = vmax.f32 %v2851, 0.0
      %v3109 = vmax.f32 %v2853, 0.0
      %v3110 = vmax.f32 %v2855, 0.0
      %v3111 = vmax.f32 %v2859, 0.0
      %v3112 = vmax.f32 %v2861, 0.0
      %v3113 = vmax.f32 %v2863, 0.0
      %v3114 = vmax.f32 %v2865, 0.0
      %v3115 = vmax.f32 %v2869, 0.0
      %v3116 = vmax.f32 %v2871, 0.0
      %v3117 = vmax.f32 %v2873, 0.0
      %v3118 = vmax.f32 %v2875, 0.0
      %v3119 = vmax.f32 %v2879, 0.0
      %v3120 = vmax.f32 %v2881, 0.0
      %v3121 = vmax.f32 %v2883, 0.0
      %v3122 = vmax.f32 %v2885, 0.0
      %v3123 = vmax.f32 %v2889, 0.0
      %v3124 = vmax.f32 %v2891, 0.0
      %v3125 = vmax.f32 %v2893, 0.0
      %v3126 = vmax.f32 %v2895, 0.0
      %v3127 = vmax.f32 %v2899, 0.0
      %v3128 = vmax.f32 %v2901, 0.0
      %v3129 = vmax.f32 %v2903, 0.0
      %v3130 = vmax.f32 %v2905, 0.0
      %v3131 = vmax.f32 %v2909, 0.0
      %v3132 = vmax.f32 %v2911, 0.0
      %v3133 = vmax.f32 %v2913, 0.0
      %v3134 = vmax.f32 %v2915, 0.0
      %v3135 = vmax.f32 %v2919, 0.0
      %v3136 = vmax.f32 %v2921, 0.0
      %v3137 = vmax.f32 %v2923, 0.0
      %v3138 = vmax.f32 %v2925, 0.0
      %v3139 = vmax.f32 %v2929, 0.0
      %v3140 = vmax.f32 %v2931, 0.0
      %v3141 = vmax.f32 %v2933, 0.0
      %v3142 = vmax.f32 %v2935, 0.0
      %v3143 = vmax.f32 %v2939, 0.0
      %v3144 = vmax.f32 %v2941, 0.0
      %v3145 = vmax.f32 %v2943, 0.0
      %v3146 = vmax.f32 %v2945, 0.0
      %v3147 = vmax.f32 %v2949, 0.0
      %v3148 = vmax.f32 %v2951, 0.0
      %v3149 = vmax.f32 %v2953, 0.0
      %v3150 = vmax.f32 %v2955, 0.0
      %v3151 = vmax.f32 %v2959, 0.0
      %v3152 = vmax.f32 %v2961, 0.0
      %v3153 = vmax.f32 %v2963, 0.0
      %v3154 = vmax.f32 %v2965, 0.0
      %v3155 = vmax.f32 %v2969, 0.0
      %v3156 = vmax.f32 %v2971, 0.0
      %v3157 = vmax.f32 %v2973, 0.0
      %v3158 = vmax.f32 %v2975, 0.0
      %v3159 = vmax.f32 %v2979, 0.0
      %v3160 = vmax.f32 %v2981, 0.0
      %v3161 = vmax.f32 %v2983, 0.0
      %v3162 = vmax.f32 %v2985, 0.0
      %v3163 = vmax.f32 %v2989, 0.0
      %v3164 = vmax.f32 %v2991, 0.0
      %v3165 = vmax.f32 %v2993, 0.0
      %v3166 = vmax.f32 %v2995, 0.0
      %v3167 = vmax.f32 %v2999, 0.0
      %v3168 = vmax.f32 %v3001, 0.0
      %v3169 = vmax.f32 %v3003, 0.0
      %v3170 = vmax.f32 %v3005, 0.0
      %v3171 = vmax.f32 %v3009, 0.0
      %v3172 = vmax.f32 %v3011, 0.0
      %v3173 = vmax.f32 %v3013, 0.0
      %v3174 = vmax.f32 %v3015, 0.0
      %v3175 = vmax.f32 %v3019, 0.0
      %v3176 = vmax.f32 %v3021, 0.0
      %v3177 = vmax.f32 %v3023, 0.0
      %v3178 = vmax.f32 %v3025, 0.0
      %v3179 = vmax.f32 %v3029, 0.0
      %v3180 = vmax.f32 %v3031, 0.0
      %v3181 = vmax.f32 %v3033, 0.0
      %v3182 = vmax.f32 %v3035, 0.0
      %v3183 = vmax.f32 %v3039, 0.0
      %v3184 = vmax.f32 %v3041, 0.0
      %v3185 = vmax.f32 %v3043, 0.0
      %v3186 = vmax.f32 %v3045, 0.0
      %v3187 = vmax.f32 %v3049, 0.0
      %v3188 = vmax.f32 %v3051, 0.0
      %v3189 = vmax.f32 %v3053, 0.0
      %v3190 = vmax.f32 %v3055, 0.0
      %v3191 = vmax.f32 %v3059, 0.0
      %v3192 = vmax.f32 %v3061, 0.0
      %v3193 = vmax.f32 %v3063, 0.0
      %v3194 = vmax.f32 %v3065, 0.0
      %v3195 = vpack.c.bf16 %v3069, %v3067
      %v3196 = vpack.c.bf16 %v3070, %v3068
      %v3197 = vpack.c.bf16 %v3073, %v3071
      %v3198 = vpack.c.bf16 %v3074, %v3072
      %v3199 = vpack.c.bf16 %v3077, %v3075
      %v3200 = vpack.c.bf16 %v3078, %v3076
      %v3201 = vpack.c.bf16 %v3081, %v3079
      %v3202 = vpack.c.bf16 %v3082, %v3080
      %v3203 = vpack.c.bf16 %v3085, %v3083
      %v3204 = vpack.c.bf16 %v3086, %v3084
      %v3205 = vpack.c.bf16 %v3089, %v3087
      %v3206 = vpack.c.bf16 %v3090, %v3088
      %v3207 = vpack.c.bf16 %v3093, %v3091
      %v3208 = vpack.c.bf16 %v3094, %v3092
      %v3209 = vpack.c.bf16 %v3097, %v3095
      %v3210 = vpack.c.bf16 %v3098, %v3096
      %v3211 = vpack.c.bf16 %v3101, %v3099
      %v3212 = vpack.c.bf16 %v3102, %v3100
      %v3213 = vpack.c.bf16 %v3105, %v3103
      %v3214 = vpack.c.bf16 %v3106, %v3104
      %v3215 = vpack.c.bf16 %v3109, %v3107
      %v3216 = vpack.c.bf16 %v3110, %v3108
      %v3217 = vpack.c.bf16 %v3113, %v3111
      %v3218 = vpack.c.bf16 %v3114, %v3112
      %v3219 = vpack.c.bf16 %v3117, %v3115
      %v3220 = vpack.c.bf16 %v3118, %v3116
      %v3221 = vpack.c.bf16 %v3121, %v3119
      %v3222 = vpack.c.bf16 %v3122, %v3120
      %v3223 = vpack.c.bf16 %v3125, %v3123
      %v3224 = vpack.c.bf16 %v3126, %v3124
      %v3225 = vpack.c.bf16 %v3129, %v3127
      %v3226 = vpack.c.bf16 %v3130, %v3128
      %v3227 = vpack.c.bf16 %v3133, %v3131
      %v3228 = vpack.c.bf16 %v3134, %v3132
      %v3229 = vpack.c.bf16 %v3137, %v3135
      %v3230 = vpack.c.bf16 %v3138, %v3136
      %v3231 = vpack.c.bf16 %v3141, %v3139
      %v3232 = vpack.c.bf16 %v3142, %v3140
      %v3233 = vpack.c.bf16 %v3145, %v3143
      %v3234 = vpack.c.bf16 %v3146, %v3144
      %v3235 = vpack.c.bf16 %v3149, %v3147
      %v3236 = vpack.c.bf16 %v3150, %v3148
      %v3237 = vpack.c.bf16 %v3153, %v3151
      %v3238 = vpack.c.bf16 %v3154, %v3152
      %v3239 = vpack.c.bf16 %v3157, %v3155
      %v3240 = vpack.c.bf16 %v3158, %v3156
      %v3241 = vpack.c.bf16 %v3161, %v3159
      %v3242 = vpack.c.bf16 %v3162, %v3160
      %v3243 = vpack.c.bf16 %v3165, %v3163
      %v3244 = vpack.c.bf16 %v3166, %v3164
      %v3245 = vpack.c.bf16 %v3169, %v3167
      %v3246 = vpack.c.bf16 %v3170, %v3168
      %v3247 = vpack.c.bf16 %v3173, %v3171
      %v3248 = vpack.c.bf16 %v3174, %v3172
      %v3249 = vpack.c.bf16 %v3177, %v3175
      %v3250 = vpack.c.bf16 %v3178, %v3176
      %v3251 = vpack.c.bf16 %v3181, %v3179
      %v3252 = vpack.c.bf16 %v3182, %v3180
      %v3253 = vpack.c.bf16 %v3185, %v3183
      %v3254 = vpack.c.bf16 %v3186, %v3184
      %v3255 = vpack.c.bf16 %v3189, %v3187
      %v3256 = vpack.c.bf16 %v3190, %v3188
      %v3257 = vpack.c.bf16 %v3193, %v3191
      %v3258 = vpack.c.bf16 %v3194, %v3192
      %v3259 = vld [vmem:[%s3] sm:$0xf]
      %v3260 = vld [vmem:[%s3 + $0x4] sm:$0xf]
      %v3261 = vld [vmem:[%s3 + $0x8] sm:$0xf]
      %v3262 = vld [vmem:[%s3 + $0xc] sm:$0xf]
      %v3263 = vld [vmem:[%s3 + $0x10] sm:$0xf]
      %v3264 = vld [vmem:[%s3 + $0x14] sm:$0xf]
      %v3265 = vld [vmem:[%s3 + $0x18] sm:$0xf]
      %v3266 = vld [vmem:[%s3 + $0x1c] sm:$0xf]
      %v3267 = vld [vmem:[%s3 + $0x20] sm:$0xf]
      %v3268 = vld [vmem:[%s3 + $0x24] sm:$0xf]
      %v3269 = vld [vmem:[%s3 + $0x28] sm:$0xf]
      %v3270 = vld [vmem:[%s3 + $0x2c] sm:$0xf]
      %v3271 = vld [vmem:[%s3 + $0x30] sm:$0xf]
      %v3272 = vld [vmem:[%s3 + $0x34] sm:$0xf]
      %v3273 = vld [vmem:[%s3 + $0x38] sm:$0xf]
      %v3274 = vld [vmem:[%s3 + $0x3c] sm:$0xf]
      %v3275 = vld [vmem:[%s3 + $0x40] sm:$0xf]
      %v3276 = vld [vmem:[%s3 + $0x44] sm:$0xf]
      %v3277 = vld [vmem:[%s3 + $0x48] sm:$0xf]
      %v3278 = vld [vmem:[%s3 + $0x4c] sm:$0xf]
      %v3279 = vld [vmem:[%s3 + $0x50] sm:$0xf]
      %v3280 = vld [vmem:[%s3 + $0x54] sm:$0xf]
      %v3281 = vld [vmem:[%s3 + $0x58] sm:$0xf]
      %v3282 = vld [vmem:[%s3 + $0x5c] sm:$0xf]
      %v3283 = vld [vmem:[%s3 + $0x60] sm:$0xf]
      %v3284 = vld [vmem:[%s3 + $0x64] sm:$0xf]
      %v3285 = vld [vmem:[%s3 + $0x68] sm:$0xf]
      %v3286 = vld [vmem:[%s3 + $0x6c] sm:$0xf]
      %v3287 = vld [vmem:[%s3 + $0x70] sm:$0xf]
      %v3288 = vld [vmem:[%s3 + $0x74] sm:$0xf]
      %v3289 = vld [vmem:[%s3 + $0x78] sm:$0xf]
      %v3290 = vld [vmem:[%s3 + $0x7c] sm:$0xf]
      %v3291 = vld [vmem:[%s4] sm:$0x1]
      %v3293 = vlaneseq
      %v3294 = vshrl.u32 %v3293, 7
      %v3295 = vsub.s32 0, %v3294
      %v3296 = vrot.slane %v3291, %v3295
      %v3330 = vunpack.c.l.b16 %v3259
      %v3331 = vunpack.c.l.b16 %v3260
      %v3332 = vunpack.c.l.b16 %v3261
      %v3333 = vunpack.c.l.b16 %v3262
      %v3334 = vunpack.c.l.b16 %v3263
      %v3335 = vunpack.c.l.b16 %v3264
      %v3336 = vunpack.c.l.b16 %v3265
      %v3337 = vunpack.c.l.b16 %v3266
      %v3338 = vunpack.c.l.b16 %v3267
      %v3339 = vunpack.c.l.b16 %v3268
      %v3340 = vunpack.c.l.b16 %v3269
      %v3341 = vunpack.c.l.b16 %v3270
      %v3342 = vunpack.c.l.b16 %v3271
      %v3343 = vunpack.c.l.b16 %v3272
      %v3344 = vunpack.c.l.b16 %v3273
      %v3345 = vunpack.c.l.b16 %v3274
      %v3346 = vunpack.c.l.b16 %v3275
      %v3347 = vunpack.c.l.b16 %v3276
      %v3348 = vunpack.c.l.b16 %v3277
      %v3349 = vunpack.c.l.b16 %v3278
      %v3350 = vunpack.c.l.b16 %v3279
      %v3351 = vunpack.c.l.b16 %v3280
      %v3352 = vunpack.c.l.b16 %v3281
      %v3353 = vunpack.c.l.b16 %v3282
      %v3354 = vunpack.c.l.b16 %v3283
      %v3355 = vunpack.c.l.b16 %v3284
      %v3356 = vunpack.c.l.b16 %v3285
      %v3357 = vunpack.c.l.b16 %v3286
      %v3358 = vunpack.c.l.b16 %v3287
      %v3359 = vunpack.c.l.b16 %v3288
      %v3360 = vunpack.c.l.b16 %v3289
      %v3361 = vunpack.c.l.b16 %v3290
      %v3362 = vpack.c.b16 %v3331, %v3330
      %v3363 = vpack.c.b16 %v3333, %v3332
      %v3364 = vpack.c.b16 %v3335, %v3334
      %v3365 = vpack.c.b16 %v3337, %v3336
      %v3366 = vpack.c.b16 %v3339, %v3338
      %v3367 = vpack.c.b16 %v3341, %v3340
      %v3368 = vpack.c.b16 %v3343, %v3342
      %v3369 = vpack.c.b16 %v3345, %v3344
      %v3370 = vpack.c.b16 %v3347, %v3346
      %v3371 = vpack.c.b16 %v3349, %v3348
      %v3372 = vpack.c.b16 %v3351, %v3350
      %v3373 = vpack.c.b16 %v3353, %v3352
      %v3374 = vpack.c.b16 %v3355, %v3354
      %v3375 = vpack.c.b16 %v3357, %v3356
      %v3376 = vpack.c.b16 %v3359, %v3358
      %v3377 = vpack.c.b16 %v3361, %v3360
      %3394 = vmatprep.subr.bf16.mxu0 0
      %3395 = vmatpush1.bf16.msra.mxu0 %v3362
      %3396 = vmatprep.subr.bf16.mxu0 0
      %3397 = vmatpush1.bf16.msra.mxu0 %v3363
      %3398 = vmatprep.subr.bf16.mxu0 0
      %3399 = vmatpush1.bf16.msra.mxu0 %v3364
      %3400 = vmatprep.subr.bf16.mxu0 0
      %3401 = vmatpush1.bf16.msra.mxu0 %v3365
      %3402 = vmatprep.subr.bf16.mxu0 0
      %3403 = vmatpush1.bf16.msra.mxu0 %v3366
      %3404 = vmatprep.subr.bf16.mxu0 0
      %3405 = vmatpush1.bf16.msra.mxu0 %v3367
      %3406 = vmatprep.subr.bf16.mxu0 0
      %3407 = vmatpush1.bf16.msra.mxu0 %v3368
      %3408 = vmatprep.subr.bf16.mxu0 0
      %3409 = vmatpush1.bf16.msra.mxu0 %v3369
      %3410 = vmatprep.subr.bf16.mxu0 0
      %3411 = vmatpush1.bf16.msra.mxu0 %v3370
      %3412 = vmatprep.subr.bf16.mxu0 0
      %3413 = vmatpush1.bf16.msra.mxu0 %v3371
      %3414 = vmatprep.subr.bf16.mxu0 0
      %3415 = vmatpush1.bf16.msra.mxu0 %v3372
      %3416 = vmatprep.subr.bf16.mxu0 0
      %3417 = vmatpush1.bf16.msra.mxu0 %v3373
      %3418 = vmatprep.subr.bf16.mxu0 0
      %3419 = vmatpush1.bf16.msra.mxu0 %v3374
      %3420 = vmatprep.subr.bf16.mxu0 0
      %3421 = vmatpush1.bf16.msra.mxu0 %v3375
      %3422 = vmatprep.subr.bf16.mxu0 0
      %3423 = vmatpush1.bf16.msra.mxu0 %v3376
      %3424 = vmatprep.subr.bf16.mxu0 0
      %3425 = vmatpush1.bf16.msra.mxu0 %v3377
      %3426 = vmatprep.mubr.bf16.mxu0 %v3196
      %3427 = vmatmul.mubr.bf16.gmra.mrb[0].mxu0 %v3195
      %v3428 = vpop.f32.mrb[0].mxu0
      %v3429 = vadd.f32 %v3296, %v3428
      %v3430 = vpop.f32.mrb[0].mxu0
      %v3431 = vpop.f32.mrb[0].mxu0
      %v3432 = vadd.f32 %v3296, %v3431
      %v3433 = vpop.f32.mrb[0].mxu0
      %3434 = vmatprep.mubr.bf16.mxu0 %v3198
      %3435 = vmatmul.mubr.bf16.gmra.mrb[0].mxu0 %v3197
      %v3436 = vpop.f32.mrb[0].mxu0
      %v3437 = vadd.f32 %v3296, %v3436
      %v3438 = vpop.f32.mrb[0].mxu0
      %v3439 = vpop.f32.mrb[0].mxu0
      %v3440 = vadd.f32 %v3296, %v3439
      %v3441 = vpop.f32.mrb[0].mxu0
      %3442 = vmatprep.mubr.bf16.mxu0 %v3200
      %3443 = vmatmul.mubr.bf16.gmra.mrb[0].mxu0 %v3199
      %v3444 = vpop.f32.mrb[0].mxu0
      %v3445 = vadd.f32 %v3296, %v3444
      %v3446 = vpop.f32.mrb[0].mxu0
      %v3447 = vpop.f32.mrb[0].mxu0
      %v3448 = vadd.f32 %v3296, %v3447
      %v3449 = vpop.f32.mrb[0].mxu0
      %3450 = vmatprep.mubr.bf16.mxu0 %v3202
      %3451 = vmatmul.mubr.bf16.gmra.mrb[0].mxu0 %v3201
      %v3452 = vpop.f32.mrb[0].mxu0
      %v3453 = vadd.f32 %v3296, %v3452
      %v3454 = vpop.f32.mrb[0].mxu0
      %v3455 = vpop.f32.mrb[0].mxu0
      %v3456 = vadd.f32 %v3296, %v3455
      %v3457 = vpop.f32.mrb[0].mxu0
      %3458 = vmatprep.mubr.bf16.mxu0 %v3204
      %3459 = vmatmul.mubr.bf16.gmra.mrb[0].mxu0 %v3203
      %v3460 = vpop.f32.mrb[0].mxu0
      %v3461 = vadd.f32 %v3296, %v3460
      %v3462 = vpop.f32.mrb[0].mxu0
      %v3463 = vpop.f32.mrb[0].mxu0
      %v3464 = vadd.f32 %v3296, %v3463
      %v3465 = vpop.f32.mrb[0].mxu0
      %3466 = vmatprep.mubr.bf16.mxu0 %v3206
      %3467 = vmatmul.mubr.bf16.gmra.mrb[0].mxu0 %v3205
      %v3468 = vpop.f32.mrb[0].mxu0
      %v3469 = vadd.f32 %v3296, %v3468
      %v3470 = vpop.f32.mrb[0].mxu0
      %v3471 = vpop.f32.mrb[0].mxu0
      %v3472 = vadd.f32 %v3296, %v3471
      %v3473 = vpop.f32.mrb[0].mxu0
      %3474 = vmatprep.mubr.bf16.mxu0 %v3208
      %3475 = vmatmul.mubr.bf16.gmra.mrb[0].mxu0 %v3207
      %v3476 = vpop.f32.mrb[0].mxu0
      %v3477 = vadd.f32 %v3296, %v3476
      %v3478 = vpop.f32.mrb[0].mxu0
      %v3479 = vpop.f32.mrb[0].mxu0
      %v3480 = vadd.f32 %v3296, %v3479
      %v3481 = vpop.f32.mrb[0].mxu0
      %3482 = vmatprep.mubr.bf16.mxu0 %v3210
      %3483 = vmatmul.mubr.bf16.gmra.mrb[0].mxu0 %v3209
      %v3484 = vpop.f32.mrb[0].mxu0
      %v3485 = vadd.f32 %v3296, %v3484
      %v3486 = vpop.f32.mrb[0].mxu0
      %v3487 = vpop.f32.mrb[0].mxu0
      %v3488 = vadd.f32 %v3296, %v3487
      %v3489 = vpop.f32.mrb[0].mxu0
      %3490 = vmatprep.mubr.bf16.mxu0 %v3212
      %3491 = vmatmul.mubr.bf16.gmra.mrb[0].mxu0 %v3211
      %v3492 = vpop.f32.mrb[0].mxu0
      %v3493 = vadd.f32 %v3296, %v3492
      %v3494 = vpop.f32.mrb[0].mxu0
      %v3495 = vpop.f32.mrb[0].mxu0
      %v3496 = vadd.f32 %v3296, %v3495
      %v3497 = vpop.f32.mrb[0].mxu0
      %3498 = vmatprep.mubr.bf16.mxu0 %v3214
      %3499 = vmatmul.mubr.bf16.gmra.mrb[0].mxu0 %v3213
      %v3500 = vpop.f32.mrb[0].mxu0
      %v3501 = vadd.f32 %v3296, %v3500
      %v3502 = vpop.f32.mrb[0].mxu0
      %v3503 = vpop.f32.mrb[0].mxu0
      %v3504 = vadd.f32 %v3296, %v3503
      %v3505 = vpop.f32.mrb[0].mxu0
      %3506 = vmatprep.mubr.bf16.mxu0 %v3216
      %3507 = vmatmul.mubr.bf16.gmra.mrb[0].mxu0 %v3215
      %v3508 = vpop.f32.mrb[0].mxu0
      %v3509 = vadd.f32 %v3296, %v3508
      %v3510 = vpop.f32.mrb[0].mxu0
      %v3511 = vpop.f32.mrb[0].mxu0
      %v3512 = vadd.f32 %v3296, %v3511
      %v3513 = vpop.f32.mrb[0].mxu0
      %3514 = vmatprep.mubr.bf16.mxu0 %v3218
      %3515 = vmatmul.mubr.bf16.gmra.mrb[0].mxu0 %v3217
      %v3516 = vpop.f32.mrb[0].mxu0
      %v3517 = vadd.f32 %v3296, %v3516
      %v3518 = vpop.f32.mrb[0].mxu0
      %v3519 = vpop.f32.mrb[0].mxu0
      %v3520 = vadd.f32 %v3296, %v3519
      %v3521 = vpop.f32.mrb[0].mxu0
      %3522 = vmatprep.mubr.bf16.mxu0 %v3220
      %3523 = vmatmul.mubr.bf16.gmra.mrb[0].mxu0 %v3219
      %v3524 = vpop.f32.mrb[0].mxu0
      %v3525 = vadd.f32 %v3296, %v3524
      %v3526 = vpop.f32.mrb[0].mxu0
      %v3527 = vpop.f32.mrb[0].mxu0
      %v3528 = vadd.f32 %v3296, %v3527
      %v3529 = vpop.f32.mrb[0].mxu0
      %3530 = vmatprep.mubr.bf16.mxu0 %v3222
      %3531 = vmatmul.mubr.bf16.gmra.mrb[0].mxu0 %v3221
      %v3532 = vpop.f32.mrb[0].mxu0
      %v3533 = vadd.f32 %v3296, %v3532
      %v3534 = vpop.f32.mrb[0].mxu0
      %v3535 = vpop.f32.mrb[0].mxu0
      %v3536 = vadd.f32 %v3296, %v3535
      %v3537 = vpop.f32.mrb[0].mxu0
      %3538 = vmatprep.mubr.bf16.mxu0 %v3224
      %3539 = vmatmul.mubr.bf16.gmra.mrb[0].mxu0 %v3223
      %v3540 = vpop.f32.mrb[0].mxu0
      %v3541 = vadd.f32 %v3296, %v3540
      %v3542 = vpop.f32.mrb[0].mxu0
      %v3543 = vpop.f32.mrb[0].mxu0
      %v3544 = vadd.f32 %v3296, %v3543
      %v3545 = vpop.f32.mrb[0].mxu0
      %3546 = vmatprep.mubr.bf16.mxu0 %v3226
      %3547 = vmatmul.mubr.bf16.gmra.mrb[0].mxu0 %v3225
      %v3548 = vpop.f32.mrb[0].mxu0
      %v3549 = vadd.f32 %v3296, %v3548
      %v3550 = vpop.f32.mrb[0].mxu0
      %v3551 = vpop.f32.mrb[0].mxu0
      %v3552 = vadd.f32 %v3296, %v3551
      %v3553 = vpop.f32.mrb[0].mxu0
      %3554 = vmatprep.mubr.bf16.mxu0 %v3228
      %3555 = vmatmul.mubr.bf16.gmra.mrb[0].mxu0 %v3227
      %v3556 = vpop.f32.mrb[0].mxu0
      %v3557 = vadd.f32 %v3296, %v3556
      %v3558 = vpop.f32.mrb[0].mxu0
      %v3559 = vpop.f32.mrb[0].mxu0
      %v3560 = vadd.f32 %v3296, %v3559
      %v3561 = vpop.f32.mrb[0].mxu0
      %3562 = vmatprep.mubr.bf16.mxu0 %v3230
      %3563 = vmatmul.mubr.bf16.gmra.mrb[0].mxu0 %v3229
      %v3564 = vpop.f32.mrb[0].mxu0
      %v3565 = vadd.f32 %v3296, %v3564
      %v3566 = vpop.f32.mrb[0].mxu0
      %v3567 = vpop.f32.mrb[0].mxu0
      %v3568 = vadd.f32 %v3296, %v3567
      %v3569 = vpop.f32.mrb[0].mxu0
      %3570 = vmatprep.mubr.bf16.mxu0 %v3232
      %3571 = vmatmul.mubr.bf16.gmra.mrb[0].mxu0 %v3231
      %v3572 = vpop.f32.mrb[0].mxu0
      %v3573 = vadd.f32 %v3296, %v3572
      %v3574 = vpop.f32.mrb[0].mxu0
      %v3575 = vpop.f32.mrb[0].mxu0
      %v3576 = vadd.f32 %v3296, %v3575
      %v3577 = vpop.f32.mrb[0].mxu0
      %3578 = vmatprep.mubr.bf16.mxu0 %v3234
      %3579 = vmatmul.mubr.bf16.gmra.mrb[0].mxu0 %v3233
      %v3580 = vpop.f32.mrb[0].mxu0
      %v3581 = vadd.f32 %v3296, %v3580
      %v3582 = vpop.f32.mrb[0].mxu0
      %v3583 = vpop.f32.mrb[0].mxu0
      %v3584 = vadd.f32 %v3296, %v3583
      %v3585 = vpop.f32.mrb[0].mxu0
      %3586 = vmatprep.mubr.bf16.mxu0 %v3236
      %3587 = vmatmul.mubr.bf16.gmra.mrb[0].mxu0 %v3235
      %v3588 = vpop.f32.mrb[0].mxu0
      %v3589 = vadd.f32 %v3296, %v3588
      %v3590 = vpop.f32.mrb[0].mxu0
      %v3591 = vpop.f32.mrb[0].mxu0
      %v3592 = vadd.f32 %v3296, %v3591
      %v3593 = vpop.f32.mrb[0].mxu0
      %3594 = vmatprep.mubr.bf16.mxu0 %v3238
      %3595 = vmatmul.mubr.bf16.gmra.mrb[0].mxu0 %v3237
      %v3596 = vpop.f32.mrb[0].mxu0
      %v3597 = vadd.f32 %v3296, %v3596
      %v3598 = vpop.f32.mrb[0].mxu0
      %v3599 = vpop.f32.mrb[0].mxu0
      %v3600 = vadd.f32 %v3296, %v3599
      %v3601 = vpop.f32.mrb[0].mxu0
      %3602 = vmatprep.mubr.bf16.mxu0 %v3240
      %3603 = vmatmul.mubr.bf16.gmra.mrb[0].mxu0 %v3239
      %v3604 = vpop.f32.mrb[0].mxu0
      %v3605 = vadd.f32 %v3296, %v3604
      %v3606 = vpop.f32.mrb[0].mxu0
      %v3607 = vpop.f32.mrb[0].mxu0
      %v3608 = vadd.f32 %v3296, %v3607
      %v3609 = vpop.f32.mrb[0].mxu0
      %3610 = vmatprep.mubr.bf16.mxu0 %v3242
      %3611 = vmatmul.mubr.bf16.gmra.mrb[0].mxu0 %v3241
      %v3612 = vpop.f32.mrb[0].mxu0
      %v3613 = vadd.f32 %v3296, %v3612
      %v3614 = vpop.f32.mrb[0].mxu0
      %v3615 = vpop.f32.mrb[0].mxu0
      %v3616 = vadd.f32 %v3296, %v3615
      %v3617 = vpop.f32.mrb[0].mxu0
      %3618 = vmatprep.mubr.bf16.mxu0 %v3244
      %3619 = vmatmul.mubr.bf16.gmra.mrb[0].mxu0 %v3243
      %v3620 = vpop.f32.mrb[0].mxu0
      %v3621 = vadd.f32 %v3296, %v3620
      %v3622 = vpop.f32.mrb[0].mxu0
      %v3623 = vpop.f32.mrb[0].mxu0
      %v3624 = vadd.f32 %v3296, %v3623
      %v3625 = vpop.f32.mrb[0].mxu0
      %3626 = vmatprep.mubr.bf16.mxu0 %v3246
      %3627 = vmatmul.mubr.bf16.gmra.mrb[0].mxu0 %v3245
      %v3628 = vpop.f32.mrb[0].mxu0
      %v3629 = vadd.f32 %v3296, %v3628
      %v3630 = vpop.f32.mrb[0].mxu0
      %v3631 = vpop.f32.mrb[0].mxu0
      %v3632 = vadd.f32 %v3296, %v3631
      %v3633 = vpop.f32.mrb[0].mxu0
      %3634 = vmatprep.mubr.bf16.mxu0 %v3248
      %3635 = vmatmul.mubr.bf16.gmra.mrb[0].mxu0 %v3247
      %v3636 = vpop.f32.mrb[0].mxu0
      %v3637 = vadd.f32 %v3296, %v3636
      %v3638 = vpop.f32.mrb[0].mxu0
      %v3639 = vpop.f32.mrb[0].mxu0
      %v3640 = vadd.f32 %v3296, %v3639
      %v3641 = vpop.f32.mrb[0].mxu0
      %3642 = vmatprep.mubr.bf16.mxu0 %v3250
      %3643 = vmatmul.mubr.bf16.gmra.mrb[0].mxu0 %v3249
      %v3644 = vpop.f32.mrb[0].mxu0
      %v3645 = vadd.f32 %v3296, %v3644
      %v3646 = vpop.f32.mrb[0].mxu0
      %v3647 = vpop.f32.mrb[0].mxu0
      %v3648 = vadd.f32 %v3296, %v3647
      %v3649 = vpop.f32.mrb[0].mxu0
      %3650 = vmatprep.mubr.bf16.mxu0 %v3252
      %3651 = vmatmul.mubr.bf16.gmra.mrb[0].mxu0 %v3251
      %v3652 = vpop.f32.mrb[0].mxu0
      %v3653 = vadd.f32 %v3296, %v3652
      %v3654 = vpop.f32.mrb[0].mxu0
      %v3655 = vpop.f32.mrb[0].mxu0
      %v3656 = vadd.f32 %v3296, %v3655
      %v3657 = vpop.f32.mrb[0].mxu0
      %3658 = vmatprep.mubr.bf16.mxu0 %v3254
      %3659 = vmatmul.mubr.bf16.gmra.mrb[0].mxu0 %v3253
      %v3660 = vpop.f32.mrb[0].mxu0
      %v3661 = vadd.f32 %v3296, %v3660
      %v3662 = vpop.f32.mrb[0].mxu0
      %v3663 = vpop.f32.mrb[0].mxu0
      %v3664 = vadd.f32 %v3296, %v3663
      %v3665 = vpop.f32.mrb[0].mxu0
      %3666 = vmatprep.mubr.bf16.mxu0 %v3256
      %3667 = vmatmul.mubr.bf16.gmra.mrb[0].mxu0 %v3255
      %v3668 = vpop.f32.mrb[0].mxu0
      %v3669 = vadd.f32 %v3296, %v3668
      %v3670 = vpop.f32.mrb[0].mxu0
      %v3671 = vpop.f32.mrb[0].mxu0
      %v3672 = vadd.f32 %v3296, %v3671
      %v3673 = vpop.f32.mrb[0].mxu0
      %3674 = vmatprep.mubr.bf16.mxu0 %v3258
      %3675 = vmatmul.mubr.bf16.gmra.mrb[0].mxu0 %v3257
      %v3676 = vpop.f32.mrb[0].mxu0
      %v3677 = vadd.f32 %v3296, %v3676
      %v3678 = vpop.f32.mrb[0].mxu0
      %v3679 = vpop.f32.mrb[0].mxu0
      %v3680 = vadd.f32 %v3296, %v3679
      %v3681 = vpop.f32.mrb[0].mxu0
      %3682 = vdwg.mxu0
      %v3683 = vmax.f32 %v3429, 0.0
      %v3684 = vmax.f32 %v3432, 0.0
      %v3685 = vmax.f32 %v3437, 0.0
      %v3686 = vmax.f32 %v3440, 0.0
      %v3687 = vmax.f32 %v3445, 0.0
      %v3688 = vmax.f32 %v3448, 0.0
      %v3689 = vmax.f32 %v3453, 0.0
      %v3690 = vmax.f32 %v3456, 0.0
      %v3691 = vmax.f32 %v3461, 0.0
      %v3692 = vmax.f32 %v3464, 0.0
      %v3693 = vmax.f32 %v3469, 0.0
      %v3694 = vmax.f32 %v3472, 0.0
      %v3695 = vmax.f32 %v3477, 0.0
      %v3696 = vmax.f32 %v3480, 0.0
      %v3697 = vmax.f32 %v3485, 0.0
      %v3698 = vmax.f32 %v3488, 0.0
      %v3699 = vmax.f32 %v3493, 0.0
      %v3700 = vmax.f32 %v3496, 0.0
      %v3701 = vmax.f32 %v3501, 0.0
      %v3702 = vmax.f32 %v3504, 0.0
      %v3703 = vmax.f32 %v3509, 0.0
      %v3704 = vmax.f32 %v3512, 0.0
      %v3705 = vmax.f32 %v3517, 0.0
      %v3706 = vmax.f32 %v3520, 0.0
      %v3707 = vmax.f32 %v3525, 0.0
      %v3708 = vmax.f32 %v3528, 0.0
      %v3709 = vmax.f32 %v3533, 0.0
      %v3710 = vmax.f32 %v3536, 0.0
      %v3711 = vmax.f32 %v3541, 0.0
      %v3712 = vmax.f32 %v3544, 0.0
      %v3713 = vmax.f32 %v3549, 0.0
      %v3714 = vmax.f32 %v3552, 0.0
      %v3715 = vmax.f32 %v3557, 0.0
      %v3716 = vmax.f32 %v3560, 0.0
      %v3717 = vmax.f32 %v3565, 0.0
      %v3718 = vmax.f32 %v3568, 0.0
      %v3719 = vmax.f32 %v3573, 0.0
      %v3720 = vmax.f32 %v3576, 0.0
      %v3721 = vmax.f32 %v3581, 0.0
      %v3722 = vmax.f32 %v3584, 0.0
      %v3723 = vmax.f32 %v3589, 0.0
      %v3724 = vmax.f32 %v3592, 0.0
      %v3725 = vmax.f32 %v3597, 0.0
      %v3726 = vmax.f32 %v3600, 0.0
      %v3727 = vmax.f32 %v3605, 0.0
      %v3728 = vmax.f32 %v3608, 0.0
      %v3729 = vmax.f32 %v3613, 0.0
      %v3730 = vmax.f32 %v3616, 0.0
      %v3731 = vmax.f32 %v3621, 0.0
      %v3732 = vmax.f32 %v3624, 0.0
      %v3733 = vmax.f32 %v3629, 0.0
      %v3734 = vmax.f32 %v3632, 0.0
      %v3735 = vmax.f32 %v3637, 0.0
      %v3736 = vmax.f32 %v3640, 0.0
      %v3737 = vmax.f32 %v3645, 0.0
      %v3738 = vmax.f32 %v3648, 0.0
      %v3739 = vmax.f32 %v3653, 0.0
      %v3740 = vmax.f32 %v3656, 0.0
      %v3741 = vmax.f32 %v3661, 0.0
      %v3742 = vmax.f32 %v3664, 0.0
      %v3743 = vmax.f32 %v3669, 0.0
      %v3744 = vmax.f32 %v3672, 0.0
      %v3745 = vmax.f32 %v3677, 0.0
      %v3746 = vmax.f32 %v3680, 0.0
      %v3747 = vpack.c.bf16 %v3684, %v3683
      %v3748 = vpack.c.bf16 %v3686, %v3685
      %v3749 = vpack.c.bf16 %v3688, %v3687
      %v3750 = vpack.c.bf16 %v3690, %v3689
      %v3751 = vpack.c.bf16 %v3692, %v3691
      %v3752 = vpack.c.bf16 %v3694, %v3693
      %v3753 = vpack.c.bf16 %v3696, %v3695
      %v3754 = vpack.c.bf16 %v3698, %v3697
      %v3755 = vpack.c.bf16 %v3700, %v3699
      %v3756 = vpack.c.bf16 %v3702, %v3701
      %v3757 = vpack.c.bf16 %v3704, %v3703
      %v3758 = vpack.c.bf16 %v3706, %v3705
      %v3759 = vpack.c.bf16 %v3708, %v3707
      %v3760 = vpack.c.bf16 %v3710, %v3709
      %v3761 = vpack.c.bf16 %v3712, %v3711
      %v3762 = vpack.c.bf16 %v3714, %v3713
      %v3763 = vpack.c.bf16 %v3716, %v3715
      %v3764 = vpack.c.bf16 %v3718, %v3717
      %v3765 = vpack.c.bf16 %v3720, %v3719
      %v3766 = vpack.c.bf16 %v3722, %v3721
      %v3767 = vpack.c.bf16 %v3724, %v3723
      %v3768 = vpack.c.bf16 %v3726, %v3725
      %v3769 = vpack.c.bf16 %v3728, %v3727
      %v3770 = vpack.c.bf16 %v3730, %v3729
      %v3771 = vpack.c.bf16 %v3732, %v3731
      %v3772 = vpack.c.bf16 %v3734, %v3733
      %v3773 = vpack.c.bf16 %v3736, %v3735
      %v3774 = vpack.c.bf16 %v3738, %v3737
      %v3775 = vpack.c.bf16 %v3740, %v3739
      %v3776 = vpack.c.bf16 %v3742, %v3741
      %v3777 = vpack.c.bf16 %v3744, %v3743
      %v3778 = vpack.c.bf16 %v3746, %v3745
      %v3779 = vld [vmem:[%s5] sm:$0xf]
      %v3780 = vld [vmem:[%s5 + $0x4] sm:$0xf]
      %v3781 = vld [vmem:[%s5 + $0x8] sm:$0xf]
      %v3782 = vld [vmem:[%s5 + $0xc] sm:$0xf]
      %v3783 = vld [vmem:[%s5 + $0x10] sm:$0xf]
      %v3784 = vld [vmem:[%s5 + $0x14] sm:$0xf]
      %v3785 = vld [vmem:[%s5 + $0x18] sm:$0xf]
      %v3786 = vld [vmem:[%s5 + $0x1c] sm:$0xf]
      %v3787 = vld [vmem:[%s5 + $0x20] sm:$0xf]
      %v3788 = vld [vmem:[%s5 + $0x24] sm:$0xf]
      %v3789 = vld [vmem:[%s5 + $0x28] sm:$0xf]
      %v3790 = vld [vmem:[%s5 + $0x2c] sm:$0xf]
      %v3791 = vld [vmem:[%s5 + $0x30] sm:$0xf]
      %v3792 = vld [vmem:[%s5 + $0x34] sm:$0xf]
      %v3793 = vld [vmem:[%s5 + $0x38] sm:$0xf]
      %v3794 = vld [vmem:[%s5 + $0x3c] sm:$0xf]
      %v3795 = vld [vmem:[%s6] sm:$0x1]
      %v3797 = vlaneseq
      %v3798 = vshrl.u32 %v3797, 7
      %v3799 = vsub.s32 0, %v3798
      %v3800 = vrot.slane %v3795, %v3799
      %v3818 = vunpack.c.l.b16 %v3779
      %v3819 = vunpack.c.l.b16 %v3780
      %v3820 = vunpack.c.l.b16 %v3781
      %v3821 = vunpack.c.l.b16 %v3782
      %v3822 = vunpack.c.l.b16 %v3783
      %v3823 = vunpack.c.l.b16 %v3784
      %v3824 = vunpack.c.l.b16 %v3785
      %v3825 = vunpack.c.l.b16 %v3786
      %v3826 = vunpack.c.l.b16 %v3787
      %v3827 = vunpack.c.l.b16 %v3788
      %v3828 = vunpack.c.l.b16 %v3789
      %v3829 = vunpack.c.l.b16 %v3790
      %v3830 = vunpack.c.l.b16 %v3791
      %v3831 = vunpack.c.l.b16 %v3792
      %v3832 = vunpack.c.l.b16 %v3793
      %v3833 = vunpack.c.l.b16 %v3794
      %v3834 = vpack.c.b16 %v3819, %v3818
      %v3835 = vpack.c.b16 %v3821, %v3820
      %v3836 = vpack.c.b16 %v3823, %v3822
      %v3837 = vpack.c.b16 %v3825, %v3824
      %v3838 = vpack.c.b16 %v3827, %v3826
      %v3839 = vpack.c.b16 %v3829, %v3828
      %v3840 = vpack.c.b16 %v3831, %v3830
      %v3841 = vpack.c.b16 %v3833, %v3832
      %3850 = vmatprep.subr.bf16.mxu0 0
      %3851 = vmatpush1.bf16.msra.mxu0 %v3834
      %3852 = vmatprep.subr.bf16.mxu0 0
      %3853 = vmatpush1.bf16.msra.mxu0 %v3835
      %3854 = vmatprep.subr.bf16.mxu0 0
      %3855 = vmatpush1.bf16.msra.mxu0 %v3836
      %3856 = vmatprep.subr.bf16.mxu0 0
      %3857 = vmatpush1.bf16.msra.mxu0 %v3837
      %3858 = vmatprep.subr.bf16.mxu0 0
      %3859 = vmatpush1.bf16.msra.mxu0 %v3838
      %3860 = vmatprep.subr.bf16.mxu0 0
      %3861 = vmatpush1.bf16.msra.mxu0 %v3839
      %3862 = vmatprep.subr.bf16.mxu0 0
      %3863 = vmatpush1.bf16.msra.mxu0 %v3840
      %3864 = vmatprep.subr.bf16.mxu0 0
      %3865 = vmatpush1.bf16.msra.mxu0 %v3841
      %3866 = vmatprep.subr.bf16.mxu0 0
      %3867 = vmatpush1.bf16.msra.mxu0 0
      %3868 = vmatprep.subr.bf16.mxu0 0
      %3869 = vmatpush1.bf16.msra.mxu0 0
      %3870 = vmatprep.subr.bf16.mxu0 0
      %3871 = vmatpush1.bf16.msra.mxu0 0
      %3872 = vmatprep.subr.bf16.mxu0 0
      %3873 = vmatpush1.bf16.msra.mxu0 0
      %3874 = vmatprep.subr.bf16.mxu0 0
      %3875 = vmatpush1.bf16.msra.mxu0 0
      %3876 = vmatprep.subr.bf16.mxu0 0
      %3877 = vmatpush1.bf16.msra.mxu0 0
      %3878 = vmatprep.subr.bf16.mxu0 0
      %3879 = vmatpush1.bf16.msra.mxu0 0
      %3880 = vmatprep.subr.bf16.mxu0 0
      %3881 = vmatpush1.bf16.msra.mxu0 0
      %3882 = vmatprep.mubr.bf16.mxu0 0
      %3883 = vmatmul.mubr.bf16.gmra.mrb[0].mxu0 %v3747
      %v3884 = vpop.f32.mrb[0].mxu0
      %v3885 = vadd.f32 %v3800, %v3884
      %v3886 = vpop.f32.mrb[0].mxu0
      %v3887 = vpop.f32.mrb[0].mxu0
      %v3888 = vadd.f32 %v3800, %v3887
      %v3889 = vpop.f32.mrb[0].mxu0
      %3890 = vmatprep.mubr.bf16.mxu0 0
      %3891 = vmatmul.mubr.bf16.gmra.mrb[0].mxu0 %v3748
      %v3892 = vpop.f32.mrb[0].mxu0
      %v3893 = vadd.f32 %v3800, %v3892
      %v3894 = vpop.f32.mrb[0].mxu0
      %v3895 = vpop.f32.mrb[0].mxu0
      %v3896 = vadd.f32 %v3800, %v3895
      %v3897 = vpop.f32.mrb[0].mxu0
      %3898 = vmatprep.mubr.bf16.mxu0 0
      %3899 = vmatmul.mubr.bf16.gmra.mrb[0].mxu0 %v3749
      %v3900 = vpop.f32.mrb[0].mxu0
      %v3901 = vadd.f32 %v3800, %v3900
      %v3902 = vpop.f32.mrb[0].mxu0
      %v3903 = vpop.f32.mrb[0].mxu0
      %v3904 = vadd.f32 %v3800, %v3903
      %v3905 = vpop.f32.mrb[0].mxu0
      %3906 = vmatprep.mubr.bf16.mxu0 0
      %3907 = vmatmul.mubr.bf16.gmra.mrb[0].mxu0 %v3750
      %v3908 = vpop.f32.mrb[0].mxu0
      %v3909 = vadd.f32 %v3800, %v3908
      %v3910 = vpop.f32.mrb[0].mxu0
      %v3911 = vpop.f32.mrb[0].mxu0
      %v3912 = vadd.f32 %v3800, %v3911
      %v3913 = vpop.f32.mrb[0].mxu0
      %3914 = vmatprep.mubr.bf16.mxu0 0
      %3915 = vmatmul.mubr.bf16.gmra.mrb[0].mxu0 %v3751
      %v3916 = vpop.f32.mrb[0].mxu0
      %v3917 = vadd.f32 %v3800, %v3916
      %v3918 = vpop.f32.mrb[0].mxu0
      %v3919 = vpop.f32.mrb[0].mxu0
      %v3920 = vadd.f32 %v3800, %v3919
      %v3921 = vpop.f32.mrb[0].mxu0
      %3922 = vmatprep.mubr.bf16.mxu0 0
      %3923 = vmatmul.mubr.bf16.gmra.mrb[0].mxu0 %v3752
      %v3924 = vpop.f32.mrb[0].mxu0
      %v3925 = vadd.f32 %v3800, %v3924
      %v3926 = vpop.f32.mrb[0].mxu0
      %v3927 = vpop.f32.mrb[0].mxu0
      %v3928 = vadd.f32 %v3800, %v3927
      %v3929 = vpop.f32.mrb[0].mxu0
      %3930 = vmatprep.mubr.bf16.mxu0 0
      %3931 = vmatmul.mubr.bf16.gmra.mrb[0].mxu0 %v3753
      %v3932 = vpop.f32.mrb[0].mxu0
      %v3933 = vadd.f32 %v3800, %v3932
      %v3934 = vpop.f32.mrb[0].mxu0
      %v3935 = vpop.f32.mrb[0].mxu0
      %v3936 = vadd.f32 %v3800, %v3935
      %v3937 = vpop.f32.mrb[0].mxu0
      %3938 = vmatprep.mubr.bf16.mxu0 0
      %3939 = vmatmul.mubr.bf16.gmra.mrb[0].mxu0 %v3754
      %v3940 = vpop.f32.mrb[0].mxu0
      %v3941 = vadd.f32 %v3800, %v3940
      %v3942 = vpop.f32.mrb[0].mxu0
      %v3943 = vpop.f32.mrb[0].mxu0
      %v3944 = vadd.f32 %v3800, %v3943
      %v3945 = vpop.f32.mrb[0].mxu0
      %3946 = vmatprep.mubr.bf16.mxu0 0
      %3947 = vmatmul.mubr.bf16.gmra.mrb[0].mxu0 %v3755
      %v3948 = vpop.f32.mrb[0].mxu0
      %v3949 = vadd.f32 %v3800, %v3948
      %v3950 = vpop.f32.mrb[0].mxu0
      %v3951 = vpop.f32.mrb[0].mxu0
      %v3952 = vadd.f32 %v3800, %v3951
      %v3953 = vpop.f32.mrb[0].mxu0
      %3954 = vmatprep.mubr.bf16.mxu0 0
      %3955 = vmatmul.mubr.bf16.gmra.mrb[0].mxu0 %v3756
      %v3956 = vpop.f32.mrb[0].mxu0
      %v3957 = vadd.f32 %v3800, %v3956
      %v3958 = vpop.f32.mrb[0].mxu0
      %v3959 = vpop.f32.mrb[0].mxu0
      %v3960 = vadd.f32 %v3800, %v3959
      %v3961 = vpop.f32.mrb[0].mxu0
      %3962 = vmatprep.mubr.bf16.mxu0 0
      %3963 = vmatmul.mubr.bf16.gmra.mrb[0].mxu0 %v3757
      %v3964 = vpop.f32.mrb[0].mxu0
      %v3965 = vadd.f32 %v3800, %v3964
      %v3966 = vpop.f32.mrb[0].mxu0
      %v3967 = vpop.f32.mrb[0].mxu0
      %v3968 = vadd.f32 %v3800, %v3967
      %v3969 = vpop.f32.mrb[0].mxu0
      %3970 = vmatprep.mubr.bf16.mxu0 0
      %3971 = vmatmul.mubr.bf16.gmra.mrb[0].mxu0 %v3758
      %v3972 = vpop.f32.mrb[0].mxu0
      %v3973 = vadd.f32 %v3800, %v3972
      %v3974 = vpop.f32.mrb[0].mxu0
      %v3975 = vpop.f32.mrb[0].mxu0
      %v3976 = vadd.f32 %v3800, %v3975
      %v3977 = vpop.f32.mrb[0].mxu0
      %3978 = vmatprep.mubr.bf16.mxu0 0
      %3979 = vmatmul.mubr.bf16.gmra.mrb[0].mxu0 %v3759
      %v3980 = vpop.f32.mrb[0].mxu0
      %v3981 = vadd.f32 %v3800, %v3980
      %v3982 = vpop.f32.mrb[0].mxu0
      %v3983 = vpop.f32.mrb[0].mxu0
      %v3984 = vadd.f32 %v3800, %v3983
      %v3985 = vpop.f32.mrb[0].mxu0
      %3986 = vmatprep.mubr.bf16.mxu0 0
      %3987 = vmatmul.mubr.bf16.gmra.mrb[0].mxu0 %v3760
      %v3988 = vpop.f32.mrb[0].mxu0
      %v3989 = vadd.f32 %v3800, %v3988
      %v3990 = vpop.f32.mrb[0].mxu0
      %v3991 = vpop.f32.mrb[0].mxu0
      %v3992 = vadd.f32 %v3800, %v3991
      %v3993 = vpop.f32.mrb[0].mxu0
      %3994 = vmatprep.mubr.bf16.mxu0 0
      %3995 = vmatmul.mubr.bf16.gmra.mrb[0].mxu0 %v3761
      %v3996 = vpop.f32.mrb[0].mxu0
      %v3997 = vadd.f32 %v3800, %v3996
      %v3998 = vpop.f32.mrb[0].mxu0
      %v3999 = vpop.f32.mrb[0].mxu0
      %v4000 = vadd.f32 %v3800, %v3999
      %v4001 = vpop.f32.mrb[0].mxu0
      %4002 = vmatprep.mubr.bf16.mxu0 0
      %4003 = vmatmul.mubr.bf16.gmra.mrb[0].mxu0 %v3762
      %v4004 = vpop.f32.mrb[0].mxu0
      %v4005 = vadd.f32 %v3800, %v4004
      %v4006 = vpop.f32.mrb[0].mxu0
      %v4007 = vpop.f32.mrb[0].mxu0
      %v4008 = vadd.f32 %v3800, %v4007
      %v4009 = vpop.f32.mrb[0].mxu0
      %4010 = vmatprep.mubr.bf16.mxu0 0
      %4011 = vmatmul.mubr.bf16.gmra.mrb[0].mxu0 %v3763
      %v4012 = vpop.f32.mrb[0].mxu0
      %v4013 = vadd.f32 %v3800, %v4012
      %v4014 = vpop.f32.mrb[0].mxu0
      %v4015 = vpop.f32.mrb[0].mxu0
      %v4016 = vadd.f32 %v3800, %v4015
      %v4017 = vpop.f32.mrb[0].mxu0
      %4018 = vmatprep.mubr.bf16.mxu0 0
      %4019 = vmatmul.mubr.bf16.gmra.mrb[0].mxu0 %v3764
      %v4020 = vpop.f32.mrb[0].mxu0
      %v4021 = vadd.f32 %v3800, %v4020
      %v4022 = vpop.f32.mrb[0].mxu0
      %v4023 = vpop.f32.mrb[0].mxu0
      %v4024 = vadd.f32 %v3800, %v4023
      %v4025 = vpop.f32.mrb[0].mxu0
      %4026 = vmatprep.mubr.bf16.mxu0 0
      %4027 = vmatmul.mubr.bf16.gmra.mrb[0].mxu0 %v3765
      %v4028 = vpop.f32.mrb[0].mxu0
      %v4029 = vadd.f32 %v3800, %v4028
      %v4030 = vpop.f32.mrb[0].mxu0
      %v4031 = vpop.f32.mrb[0].mxu0
      %v4032 = vadd.f32 %v3800, %v4031
      %v4033 = vpop.f32.mrb[0].mxu0
      %4034 = vmatprep.mubr.bf16.mxu0 0
      %4035 = vmatmul.mubr.bf16.gmra.mrb[0].mxu0 %v3766
      %v4036 = vpop.f32.mrb[0].mxu0
      %v4037 = vadd.f32 %v3800, %v4036
      %v4038 = vpop.f32.mrb[0].mxu0
      %v4039 = vpop.f32.mrb[0].mxu0
      %v4040 = vadd.f32 %v3800, %v4039
      %v4041 = vpop.f32.mrb[0].mxu0
      %4042 = vmatprep.mubr.bf16.mxu0 0
      %4043 = vmatmul.mubr.bf16.gmra.mrb[0].mxu0 %v3767
      %v4044 = vpop.f32.mrb[0].mxu0
      %v4045 = vadd.f32 %v3800, %v4044
      %v4046 = vpop.f32.mrb[0].mxu0
      %v4047 = vpop.f32.mrb[0].mxu0
      %v4048 = vadd.f32 %v3800, %v4047
      %v4049 = vpop.f32.mrb[0].mxu0
      %4050 = vmatprep.mubr.bf16.mxu0 0
      %4051 = vmatmul.mubr.bf16.gmra.mrb[0].mxu0 %v3768
      %v4052 = vpop.f32.mrb[0].mxu0
      %v4053 = vadd.f32 %v3800, %v4052
      %v4054 = vpop.f32.mrb[0].mxu0
      %v4055 = vpop.f32.mrb[0].mxu0
      %v4056 = vadd.f32 %v3800, %v4055
      %v4057 = vpop.f32.mrb[0].mxu0
      %4058 = vmatprep.mubr.bf16.mxu0 0
      %4059 = vmatmul.mubr.bf16.gmra.mrb[0].mxu0 %v3769
      %v4060 = vpop.f32.mrb[0].mxu0
      %v4061 = vadd.f32 %v3800, %v4060
      %v4062 = vpop.f32.mrb[0].mxu0
      %v4063 = vpop.f32.mrb[0].mxu0
      %v4064 = vadd.f32 %v3800, %v4063
      %v4065 = vpop.f32.mrb[0].mxu0
      %4066 = vmatprep.mubr.bf16.mxu0 0
      %4067 = vmatmul.mubr.bf16.gmra.mrb[0].mxu0 %v3770
      %v4068 = vpop.f32.mrb[0].mxu0
      %v4069 = vadd.f32 %v3800, %v4068
      %v4070 = vpop.f32.mrb[0].mxu0
      %v4071 = vpop.f32.mrb[0].mxu0
      %v4072 = vadd.f32 %v3800, %v4071
      %v4073 = vpop.f32.mrb[0].mxu0
      %4074 = vmatprep.mubr.bf16.mxu0 0
      %4075 = vmatmul.mubr.bf16.gmra.mrb[0].mxu0 %v3771
      %v4076 = vpop.f32.mrb[0].mxu0
      %v4077 = vadd.f32 %v3800, %v4076
      %v4078 = vpop.f32.mrb[0].mxu0
      %v4079 = vpop.f32.mrb[0].mxu0
      %v4080 = vadd.f32 %v3800, %v4079
      %v4081 = vpop.f32.mrb[0].mxu0
      %4082 = vmatprep.mubr.bf16.mxu0 0
      %4083 = vmatmul.mubr.bf16.gmra.mrb[0].mxu0 %v3772
      %v4084 = vpop.f32.mrb[0].mxu0
      %v4085 = vadd.f32 %v3800, %v4084
      %v4086 = vpop.f32.mrb[0].mxu0
      %v4087 = vpop.f32.mrb[0].mxu0
      %v4088 = vadd.f32 %v3800, %v4087
      %v4089 = vpop.f32.mrb[0].mxu0
      %4090 = vmatprep.mubr.bf16.mxu0 0
      %4091 = vmatmul.mubr.bf16.gmra.mrb[0].mxu0 %v3773
      %v4092 = vpop.f32.mrb[0].mxu0
      %v4093 = vadd.f32 %v3800, %v4092
      %v4094 = vpop.f32.mrb[0].mxu0
      %v4095 = vpop.f32.mrb[0].mxu0
      %v4096 = vadd.f32 %v3800, %v4095
      %v4097 = vpop.f32.mrb[0].mxu0
      %4098 = vmatprep.mubr.bf16.mxu0 0
      %4099 = vmatmul.mubr.bf16.gmra.mrb[0].mxu0 %v3774
      %v4100 = vpop.f32.mrb[0].mxu0
      %v4101 = vadd.f32 %v3800, %v4100
      %v4102 = vpop.f32.mrb[0].mxu0
      %v4103 = vpop.f32.mrb[0].mxu0
      %v4104 = vadd.f32 %v3800, %v4103
      %v4105 = vpop.f32.mrb[0].mxu0
      %4106 = vmatprep.mubr.bf16.mxu0 0
      %4107 = vmatmul.mubr.bf16.gmra.mrb[0].mxu0 %v3775
      %v4108 = vpop.f32.mrb[0].mxu0
      %v4109 = vadd.f32 %v3800, %v4108
      %v4110 = vpop.f32.mrb[0].mxu0
      %v4111 = vpop.f32.mrb[0].mxu0
      %v4112 = vadd.f32 %v3800, %v4111
      %v4113 = vpop.f32.mrb[0].mxu0
      %4114 = vmatprep.mubr.bf16.mxu0 0
      %4115 = vmatmul.mubr.bf16.gmra.mrb[0].mxu0 %v3776
      %v4116 = vpop.f32.mrb[0].mxu0
      %v4117 = vadd.f32 %v3800, %v4116
      %v4118 = vpop.f32.mrb[0].mxu0
      %v4119 = vpop.f32.mrb[0].mxu0
      %v4120 = vadd.f32 %v3800, %v4119
      %v4121 = vpop.f32.mrb[0].mxu0
      %4122 = vmatprep.mubr.bf16.mxu0 0
      %4123 = vmatmul.mubr.bf16.gmra.mrb[0].mxu0 %v3777
      %v4124 = vpop.f32.mrb[0].mxu0
      %v4125 = vadd.f32 %v3800, %v4124
      %v4126 = vpop.f32.mrb[0].mxu0
      %v4127 = vpop.f32.mrb[0].mxu0
      %v4128 = vadd.f32 %v3800, %v4127
      %v4129 = vpop.f32.mrb[0].mxu0
      %4130 = vmatprep.mubr.bf16.mxu0 0
      %4131 = vmatmul.mubr.bf16.gmra.mrb[0].mxu0 %v3778
      %v4132 = vpop.f32.mrb[0].mxu0
      %v4133 = vadd.f32 %v3800, %v4132
      %v4134 = vpop.f32.mrb[0].mxu0
      %v4135 = vpop.f32.mrb[0].mxu0
      %v4136 = vadd.f32 %v3800, %v4135
      %v4137 = vpop.f32.mrb[0].mxu0
      %4138 = vdwg.mxu0
      %4139 = vst [vmem:[%s283] sm:$0xff] %v3885
      %4140 = vst [vmem:[%s283 + $0x8] sm:$0xff] %v3888
      %4141 = vst [vmem:[%s283 + $0x10] sm:$0xff] %v3893
      %4142 = vst [vmem:[%s283 + $0x18] sm:$0xff] %v3896
      %4143 = vst [vmem:[%s283 + $0x20] sm:$0xff] %v3901
      %4144 = vst [vmem:[%s283 + $0x28] sm:$0xff] %v3904
      %4145 = vst [vmem:[%s283 + $0x30] sm:$0xff] %v3909
      %4146 = vst [vmem:[%s283 + $0x38] sm:$0xff] %v3912
      %4147 = vst [vmem:[%s283 + $0x40] sm:$0xff] %v3917
      %4148 = vst [vmem:[%s283 + $0x48] sm:$0xff] %v3920
      %4149 = vst [vmem:[%s283 + $0x50] sm:$0xff] %v3925
      %4150 = vst [vmem:[%s283 + $0x58] sm:$0xff] %v3928
      %4151 = vst [vmem:[%s283 + $0x60] sm:$0xff] %v3933
      %4152 = vst [vmem:[%s283 + $0x68] sm:$0xff] %v3936
      %4153 = vst [vmem:[%s283 + $0x70] sm:$0xff] %v3941
      %4154 = vst [vmem:[%s283 + $0x78] sm:$0xff] %v3944
      %4155 = vst [vmem:[%s283 + $0x80] sm:$0xff] %v3949
      %4156 = vst [vmem:[%s283 + $0x88] sm:$0xff] %v3952
      %4157 = vst [vmem:[%s283 + $0x90] sm:$0xff] %v3957
      %4158 = vst [vmem:[%s283 + $0x98] sm:$0xff] %v3960
      %4159 = vst [vmem:[%s283 + $0xa0] sm:$0xff] %v3965
      %4160 = vst [vmem:[%s283 + $0xa8] sm:$0xff] %v3968
      %4161 = vst [vmem:[%s283 + $0xb0] sm:$0xff] %v3973
      %4162 = vst [vmem:[%s283 + $0xb8] sm:$0xff] %v3976
      %4163 = vst [vmem:[%s283 + $0xc0] sm:$0xff] %v3981
      %4164 = vst [vmem:[%s283 + $0xc8] sm:$0xff] %v3984
      %4165 = vst [vmem:[%s283 + $0xd0] sm:$0xff] %v3989
      %4166 = vst [vmem:[%s283 + $0xd8] sm:$0xff] %v3992
      %4167 = vst [vmem:[%s283 + $0xe0] sm:$0xff] %v3997
      %4168 = vst [vmem:[%s283 + $0xe8] sm:$0xff] %v4000
      %4169 = vst [vmem:[%s283 + $0xf0] sm:$0xff] %v4005
      %4170 = vst [vmem:[%s283 + $0xf8] sm:$0xff] %v4008
      %4171 = vst [vmem:[%s283 + $0x100] sm:$0xff] %v4013
      %4172 = vst [vmem:[%s283 + $0x108] sm:$0xff] %v4016
      %4173 = vst [vmem:[%s283 + $0x110] sm:$0xff] %v4021
      %4174 = vst [vmem:[%s283 + $0x118] sm:$0xff] %v4024
      %4175 = vst [vmem:[%s283 + $0x120] sm:$0xff] %v4029
      %4176 = vst [vmem:[%s283 + $0x128] sm:$0xff] %v4032
      %4177 = vst [vmem:[%s283 + $0x130] sm:$0xff] %v4037
      %4178 = vst [vmem:[%s283 + $0x138] sm:$0xff] %v4040
      %4179 = vst [vmem:[%s283 + $0x140] sm:$0xff] %v4045
      %4180 = vst [vmem:[%s283 + $0x148] sm:$0xff] %v4048
      %4181 = vst [vmem:[%s283 + $0x150] sm:$0xff] %v4053
      %4182 = vst [vmem:[%s283 + $0x158] sm:$0xff] %v4056
      %4183 = vst [vmem:[%s283 + $0x160] sm:$0xff] %v4061
      %4184 = vst [vmem:[%s283 + $0x168] sm:$0xff] %v4064
      %4185 = vst [vmem:[%s283 + $0x170] sm:$0xff] %v4069
      %4186 = vst [vmem:[%s283 + $0x178] sm:$0xff] %v4072
      %4187 = vst [vmem:[%s283 + $0x180] sm:$0xff] %v4077
      %4188 = vst [vmem:[%s283 + $0x188] sm:$0xff] %v4080
      %4189 = vst [vmem:[%s283 + $0x190] sm:$0xff] %v4085
      %4190 = vst [vmem:[%s283 + $0x198] sm:$0xff] %v4088
      %4191 = vst [vmem:[%s283 + $0x1a0] sm:$0xff] %v4093
      %4192 = vst [vmem:[%s283 + $0x1a8] sm:$0xff] %v4096
      %4193 = vst [vmem:[%s283 + $0x1b0] sm:$0xff] %v4101
      %4194 = vst [vmem:[%s283 + $0x1b8] sm:$0xff] %v4104
      %4195 = vst [vmem:[%s283 + $0x1c0] sm:$0xff] %v4109
      %4196 = vst [vmem:[%s283 + $0x1c8] sm:$0xff] %v4112
      %4197 = vst [vmem:[%s283 + $0x1d0] sm:$0xff] %v4117
      %4198 = vst [vmem:[%s283 + $0x1d8] sm:$0xff] %v4120
      %4199 = vst [vmem:[%s283 + $0x1e0] sm:$0xff] %v4125
      %4200 = vst [vmem:[%s283 + $0x1e8] sm:$0xff] %v4128
      %4201 = vst [vmem:[%s283 + $0x1f0] sm:$0xff] %v4133
      %4202 = vst [vmem:[%s283 + $0x1f8] sm:$0xff] %v4136
      %s4203 = smul.u32 64, %s18
      %p4204 = scmp.lt.s32.totalorder %s4203, 127
      %s4205 = scalar_select %p4204, %s4203, 127
      %s4206 = smul.addr %s4205, 8
      %s4207 = scalar_lea.vmem %s7, %s4206
      // Predicated region
      $region49: #{mlp_forward.1} parent=47 // pred_check
        %p4208 = pneg %p188
      $region50: #{mlp_forward.1} parent=47 // pred_check_branch
        %4210 = sbr.rel (%p4208) target = $region52
      $region51: #{mlp_forward.1} parent=47 // pred_region
        %s4211 = smul.u32 64, %s18
      $region52: #{mlp_forward.1} parent=47 // pred_fallthru
        _
    $region48: #{mlp_forward.1} parent=5 // pred_fallthru
      _
    %p4212 = scmp.le.s32.totalorder 2, %s13
    // Predicated region
    $region53: #{mlp_forward.1} parent=5 // pred_check
      %p4213 = pneg %p4212
    $region54: #{mlp_forward.1} parent=5 // pred_check_branch
      %4215 = sbr.rel (%p4213) target = $region56
    $region55: #{mlp_forward.1} parent=5 // pred_region
      %s4216 = ssub.s32 %s13, 2
      // Predicated region
      $region57: #{mlp_forward.1} parent=55 // pred_check
        %p4217 = pneg %p194
      $region58: #{mlp_forward.1} parent=55 // pred_check_branch
        %4219 = sbr.rel (%p4217) target = $region60
      $region59: #{mlp_forward.1} parent=55 // pred_region
        %s4220 = smul.u32 64, %s19
        %p4221 = scmp.lt.s32.totalorder %s4220, 127
        %s4222 = scalar_select %p4221, %s4220, 127
        %s4223 = smul.addr %s4222, 8
        %s4224 = scalar_lea.vmem %s7, %s4223
      $region60: #{mlp_forward.1} parent=55 // pred_fallthru
        _
    $region56: #{mlp_forward.1} parent=5 // pred_fallthru
      _
  $region6: #{mlp_forward.1} parent=0 // loop_footer
    %s17 = sadd.s32 1, %s13
  $region7: #{mlp_forward.1} parent=0 // loop_footer_branch
    %12 = sbr.rel target = $region3
  $region8: #{mlp_forward.1} parent=0 // loop_exit
    _

</llo_original>
